<compile_context>
chip_gen: v7x
topology: tpu7x:2x2x1
jax: 0.10.0
libtpu: 0.0.40
codegen_flags: <defaults>
</compile_context>

<pallas_src>
import functools

import jax
import jax.numpy as jnp
from jax.experimental import pallas as pl
from jax.experimental.pallas import tpu as pltpu


# ---------------------------------------------------------------------------
# Kernel 1: conv (valid, stride 1) + bias + ReLU + 2x2/2 max-pool.
# One image per grid step; im2col done in-kernel from 4 parity planes.
# ---------------------------------------------------------------------------
def _conv_pool_relu_kernel(x00_ref, x01_ref, x10_ref, x11_ref, w_ref, b_ref,
                           o_ref, *, k, cin, cout, hp, wp):
    # Parity planes of this image, indexed [row_parity][col_parity];
    # plane[i, j*cin + c] = x_nhwc[2i + rp, 2j + cp, c].
    xp = ((x00_ref[0], x01_ref[0]), (x10_ref[0], x11_ref[0]))
    wcin = wp * cin
    pooled = None
    for sr in (0, 1):            # output-row parity (the 2x2 pool window rows)
        for sc in (0, 1):        # output-col parity (the 2x2 pool window cols)
            slabs = []
            for di in range(k):
                for dj in range(k):
                    ar, ac = sr + di, sc + dj
                    src = xp[ar % 2][ac % 2]
                    r0 = ar // 2
                    c0 = (ac // 2) * cin
                    # (hp, wp*cin) window: rows are output rows (this parity),
                    # lanes enumerate (output col, input channel).
                    slabs.append(src[r0:r0 + hp, c0:c0 + wcin])
            patches = jnp.concatenate(slabs, axis=1)            # (hp, k*k*wp*cin)
            conv = jnp.dot(patches, w_ref[...],
                           preferred_element_type=jnp.float32)  # (hp, wp*cout)
            # 2x2 max-pool fused as an epilogue: max over the 4 parities.
            pooled = conv if pooled is None else jnp.maximum(pooled, conv)
    pooled = jnp.maximum(pooled + b_ref[...], 0.0)               # bias + ReLU
    o_ref[0] = pooled.astype(o_ref.dtype)


def conv_pool_block(x_nhwc, w, b):
    """x_nhwc: (B, H, W, Cin); w: (Cout, Cin, k, k) PyTorch layout; b: (Cout,).
    Returns relu(conv(x) + b) max-pooled 2x2, as NHWC (B, Hp, Wp, Cout)."""
    B, H, W, Cin = x_nhwc.shape
    Cout, Cin2, kh, kw = w.shape
    assert Cin == Cin2 and kh == kw
    k = kh
    Ho, Wo = H - k + 1, W - k + 1
    Hp, Wp = Ho // 2, Wo // 2
    Hh, Wh = H // 2, W // 2

    # 4 parity planes of the raw input (no im2col matrix materialized in HBM).
    xps = [x_nhwc[:, sr::2, sc::2, :].reshape(B, Hh, Wh * Cin)
           for sr in (0, 1) for sc in (0, 1)]

    # Block-diagonal GEMM weights: for each (di, dj) shift, kron(I_Wp, W[:,:,di,dj].T),
    # stacked along rows.  Row order matches the in-kernel lane concat
    # ((di, dj) outer, (out-col q, in-chan c) inner); column order is (q, cout).
    wsub = jnp.transpose(w, (2, 3, 1, 0)).reshape(k * k, Cin, Cout)
    eye = jnp.eye(Wp, dtype=w.dtype)
    wbd = jnp.einsum("qr,scd->sqcrd", eye, wsub).reshape(k * k * Wp * Cin,
                                                         Wp * Cout)
    brow = jnp.tile(b, (Wp,)).reshape(1, Wp * Cout)

    kern = functools.partial(_conv_pool_relu_kernel,
                             k=k, cin=Cin, cout=Cout, hp=Hp, wp=Wp)
    out = pl.pallas_call(
        kern,
        out_shape=jax.ShapeDtypeStruct((B, Hp, Wp * Cout), x_nhwc.dtype),
        grid=(B,),
        in_specs=[pl.BlockSpec((1, Hh, Wh * Cin), lambda bi: (bi, 0, 0))
                  for _ in range(4)]
                 + [pl.BlockSpec((k * k * Wp * Cin, Wp * Cout),
                                 lambda bi: (0, 0)),
                    pl.BlockSpec((1, Wp * Cout), lambda bi: (0, 0))],
        out_specs=pl.BlockSpec((1, Hp, Wp * Cout), lambda bi: (bi, 0, 0)),
        compiler_params=pltpu.CompilerParams(
            dimension_semantics=("parallel",)),
    )(*xps, wbd, brow)
    return out.reshape(B, Hp, Wp, Cout)


# ---------------------------------------------------------------------------
# Kernel 2: fused FC tail  (fc1 + ReLU + fc2 + ReLU + fc3).
# ---------------------------------------------------------------------------
def _fc_tail_kernel(x_ref, w1_ref, b1_ref, w2_ref, b2_ref, w3_ref, b3_ref,
                    o_ref):
    h = jnp.dot(x_ref[...], w1_ref[...], preferred_element_type=jnp.float32)
    h = jnp.maximum(h + b1_ref[...], 0.0)
    h = jnp.dot(h, w2_ref[...], preferred_element_type=jnp.float32)
    h = jnp.maximum(h + b2_ref[...], 0.0)
    h = jnp.dot(h, w3_ref[...], preferred_element_type=jnp.float32) + b3_ref[...]
    o_ref[...] = h.astype(o_ref.dtype)


def fc_tail(x, w1, b1, w2, b2, w3, b3):
    B, K = x.shape
    N1, N2, N3 = w1.shape[1], w2.shape[1], w3.shape[1]
    full = lambda shape: pl.BlockSpec(shape, lambda i: (0,) * len(shape))
    return pl.pallas_call(
        _fc_tail_kernel,
        out_shape=jax.ShapeDtypeStruct((B, N3), x.dtype),
        grid=(1,),
        in_specs=[full((B, K)),
                  full((K, N1)), full((1, N1)),
                  full((N1, N2)), full((1, N2)),
                  full((N2, N3)), full((1, N3))],
        out_specs=full((B, N3)),
    )(x, w1, b1.reshape(1, N1), w2, b2.reshape(1, N2), w3, b3.reshape(1, N3))


# ---------------------------------------------------------------------------
# Parameters & forward
# ---------------------------------------------------------------------------
def init_lenet_params(key, num_classes=10, inputs=3):
    ks = jax.random.split(key, 10)

    def u(k, shape, fan_in):
        bound = 1.0 / jnp.sqrt(jnp.float32(fan_in))
        return jax.random.uniform(k, shape, jnp.float32, -bound, bound)

    return {
        "conv1_w": u(ks[0], (6, inputs, 5, 5), inputs * 25),
        "conv1_b": u(ks[1], (6,), inputs * 25),
        "conv2_w": u(ks[2], (16, 6, 5, 5), 6 * 25),
        "conv2_b": u(ks[3], (16,), 6 * 25),
        "fc1_w": u(ks[4], (120, 16 * 5 * 5), 16 * 5 * 5),
        "fc1_b": u(ks[5], (120,), 16 * 5 * 5),
        "fc2_w": u(ks[6], (84, 120), 120),
        "fc2_b": u(ks[7], (84,), 120),
        "fc3_w": u(ks[8], (num_classes, 84), 84),
        "fc3_b": u(ks[9], (num_classes,), 84),
    }


def lenet_forward(params, x):
    """x: (B, 3, 32, 32) NCHW float32 -> (B, num_classes)."""
    x = jnp.transpose(x, (0, 2, 3, 1))  # single NCHW->NHWC transpose; NHWC after
    out = conv_pool_block(x, params["conv1_w"], params["conv1_b"])    # (B,14,14,6)
    out = conv_pool_block(out, params["conv2_w"], params["conv2_b"])  # (B,5,5,16)
    B, Hf, Wf, Cf = out.shape
    out = out.reshape(B, Hf * Wf * Cf)  # NHWC flatten: (h, w, c) order
    # fc1 weight expects PyTorch's NCHW flatten (c, h, w); permute once to (h, w, c).
    fc1_w = params["fc1_w"]
    w1 = (fc1_w.reshape(-1, Cf, Hf, Wf).transpose(0, 2, 3, 1)
          .reshape(fc1_w.shape[0], -1).T)
    w2 = params["fc2_w"].T
    w3 = params["fc3_w"].T
    return fc_tail(out, w1, params["fc1_b"], w2, params["fc2_b"],
                   w3, params["fc3_b"])


if __name__ == "__main__":
    num_classes = 10
    key = jax.random.PRNGKey(0)
    kp, kx = jax.random.split(key)
    params = init_lenet_params(kp, num_classes=num_classes, inputs=3)
    # LeNet's 16*5*5 flatten implies 32x32 spatial input (CIFAR-style).
    x = jax.random.normal(kx, (2, 3, 32, 32), jnp.float32)

    out = jax.jit(lenet_forward)(params, x)
    out = jax.block_until_ready(out)
    assert out.shape == (2, num_classes), out.shape
    assert bool(jnp.all(jnp.isfinite(out)))
    print("KERNEL_OK")
</pallas_src>

<mosaic_0001>
module attributes {stable_mosaic.version = 11 : i64} {
  func.func @_conv_pool_relu_kernel(%arg0: i32, %arg1: memref<1x16x48xf32, #tpu.memory_space<vmem>>, %arg2: memref<1x16x48xf32, #tpu.memory_space<vmem>>, %arg3: memref<1x16x48xf32, #tpu.memory_space<vmem>>, %arg4: memref<1x16x48xf32, #tpu.memory_space<vmem>>, %arg5: memref<1050x84xf32, #tpu.memory_space<vmem>>, %arg6: memref<1x84xf32, #tpu.memory_space<vmem>>, %arg7: memref<1x14x84xf32, #tpu.memory_space<vmem>>) attributes {dimension_semantics = [#tpu.dimension_semantics<parallel>], iteration_bounds = array<i64: 2>, scalar_prefetch = 0 : i64, scratch_operands = 0 : i64, tpu.core_type = #tpu.core_type<tc>, window_params = [{transform_indices = @transform_0, window_bounds = array<i64: 1, 16, 48>}, {transform_indices = @transform_1, window_bounds = array<i64: 1, 16, 48>}, {transform_indices = @transform_2, window_bounds = array<i64: 1, 16, 48>}, {transform_indices = @transform_3, window_bounds = array<i64: 1, 16, 48>}, {pipeline_mode = #tpu.pipeline_mode<synchronous>, transform_indices = @transform_4, window_bounds = array<i64: 1050, 84>}, {pipeline_mode = #tpu.pipeline_mode<synchronous>, transform_indices = @transform_5, window_bounds = array<i64: 1, 84>}, {transform_indices = @transform_6, window_bounds = array<i64: 1, 14, 84>}]} {
    %c0 = arith.constant 0 : index
    %c0_0 = arith.constant 0 : index
    %c0_1 = arith.constant 0 : index
    %0 = vector.load %arg1[%c0, %c0_0, %c0_1] : memref<1x16x48xf32, #tpu.memory_space<vmem>>, vector<1x16x48xf32>
    %1 = vector.shape_cast %0 : vector<1x16x48xf32> to vector<16x48xf32>
    %c0_2 = arith.constant 0 : index
    %c0_3 = arith.constant 0 : index
    %c0_4 = arith.constant 0 : index
    %2 = vector.load %arg2[%c0_2, %c0_3, %c0_4] : memref<1x16x48xf32, #tpu.memory_space<vmem>>, vector<1x16x48xf32>
    %3 = vector.shape_cast %2 : vector<1x16x48xf32> to vector<16x48xf32>
    %c0_5 = arith.constant 0 : index
    %c0_6 = arith.constant 0 : index
    %c0_7 = arith.constant 0 : index
    %4 = vector.load %arg3[%c0_5, %c0_6, %c0_7] : memref<1x16x48xf32, #tpu.memory_space<vmem>>, vector<1x16x48xf32>
    %5 = vector.shape_cast %4 : vector<1x16x48xf32> to vector<16x48xf32>
    %c0_8 = arith.constant 0 : index
    %c0_9 = arith.constant 0 : index
    %c0_10 = arith.constant 0 : index
    %6 = vector.load %arg4[%c0_8, %c0_9, %c0_10] : memref<1x16x48xf32, #tpu.memory_space<vmem>>, vector<1x16x48xf32>
    %7 = vector.shape_cast %6 : vector<1x16x48xf32> to vector<16x48xf32>
    %8 = vector.extract_strided_slice %1 {offsets = [0, 0], sizes = [14, 42], strides = [1, 1]} : vector<16x48xf32> to vector<14x42xf32>
    %9 = vector.extract_strided_slice %3 {offsets = [0, 0], sizes = [14, 42], strides = [1, 1]} : vector<16x48xf32> to vector<14x42xf32>
    %10 = vector.extract_strided_slice %1 {offsets = [0, 3], sizes = [14, 42], strides = [1, 1]} : vector<16x48xf32> to vector<14x42xf32>
    %11 = vector.extract_strided_slice %3 {offsets = [0, 3], sizes = [14, 42], strides = [1, 1]} : vector<16x48xf32> to vector<14x42xf32>
    %12 = vector.extract_strided_slice %1 {offsets = [0, 6], sizes = [14, 42], strides = [1, 1]} : vector<16x48xf32> to vector<14x42xf32>
    %13 = vector.extract_strided_slice %5 {offsets = [0, 0], sizes = [14, 42], strides = [1, 1]} : vector<16x48xf32> to vector<14x42xf32>
    %14 = vector.extract_strided_slice %7 {offsets = [0, 0], sizes = [14, 42], strides = [1, 1]} : vector<16x48xf32> to vector<14x42xf32>
    %15 = vector.extract_strided_slice %5 {offsets = [0, 3], sizes = [14, 42], strides = [1, 1]} : vector<16x48xf32> to vector<14x42xf32>
    %16 = vector.extract_strided_slice %7 {offsets = [0, 3], sizes = [14, 42], strides = [1, 1]} : vector<16x48xf32> to vector<14x42xf32>
    %17 = vector.extract_strided_slice %5 {offsets = [0, 6], sizes = [14, 42], strides = [1, 1]} : vector<16x48xf32> to vector<14x42xf32>
    %18 = vector.extract_strided_slice %1 {offsets = [1, 0], sizes = [14, 42], strides = [1, 1]} : vector<16x48xf32> to vector<14x42xf32>
    %19 = vector.extract_strided_slice %3 {offsets = [1, 0], sizes = [14, 42], strides = [1, 1]} : vector<16x48xf32> to vector<14x42xf32>
    %20 = vector.extract_strided_slice %1 {offsets = [1, 3], sizes = [14, 42], strides = [1, 1]} : vector<16x48xf32> to vector<14x42xf32>
    %21 = vector.extract_strided_slice %3 {offsets = [1, 3], sizes = [14, 42], strides = [1, 1]} : vector<16x48xf32> to vector<14x42xf32>
    %22 = vector.extract_strided_slice %1 {offsets = [1, 6], sizes = [14, 42], strides = [1, 1]} : vector<16x48xf32> to vector<14x42xf32>
    %23 = vector.extract_strided_slice %5 {offsets = [1, 0], sizes = [14, 42], strides = [1, 1]} : vector<16x48xf32> to vector<14x42xf32>
    %24 = vector.extract_strided_slice %7 {offsets = [1, 0], sizes = [14, 42], strides = [1, 1]} : vector<16x48xf32> to vector<14x42xf32>
    %25 = vector.extract_strided_slice %5 {offsets = [1, 3], sizes = [14, 42], strides = [1, 1]} : vector<16x48xf32> to vector<14x42xf32>
    %26 = vector.extract_strided_slice %7 {offsets = [1, 3], sizes = [14, 42], strides = [1, 1]} : vector<16x48xf32> to vector<14x42xf32>
    %27 = vector.extract_strided_slice %5 {offsets = [1, 6], sizes = [14, 42], strides = [1, 1]} : vector<16x48xf32> to vector<14x42xf32>
    %28 = vector.extract_strided_slice %1 {offsets = [2, 0], sizes = [14, 42], strides = [1, 1]} : vector<16x48xf32> to vector<14x42xf32>
    %29 = vector.extract_strided_slice %3 {offsets = [2, 0], sizes = [14, 42], strides = [1, 1]} : vector<16x48xf32> to vector<14x42xf32>
    %30 = vector.extract_strided_slice %1 {offsets = [2, 3], sizes = [14, 42], strides = [1, 1]} : vector<16x48xf32> to vector<14x42xf32>
    %31 = vector.extract_strided_slice %3 {offsets = [2, 3], sizes = [14, 42], strides = [1, 1]} : vector<16x48xf32> to vector<14x42xf32>
    %32 = vector.extract_strided_slice %1 {offsets = [2, 6], sizes = [14, 42], strides = [1, 1]} : vector<16x48xf32> to vector<14x42xf32>
    %33 = tpu.concatenate %8, %9, %10, %11, %12, %13, %14, %15, %16, %17, %18, %19, %20, %21, %22, %23 in 1 : vector<14x42xf32>, vector<14x42xf32>, vector<14x42xf32>, vector<14x42xf32>, vector<14x42xf32>, vector<14x42xf32>, vector<14x42xf32>, vector<14x42xf32>, vector<14x42xf32>, vector<14x42xf32>, vector<14x42xf32>, vector<14x42xf32>, vector<14x42xf32>, vector<14x42xf32>, vector<14x42xf32>, vector<14x42xf32> -> vector<14x672xf32>
    %34 = tpu.concatenate %24, %25, %26, %27, %28, %29, %30, %31, %32 in 1 : vector<14x42xf32>, vector<14x42xf32>, vector<14x42xf32>, vector<14x42xf32>, vector<14x42xf32>, vector<14x42xf32>, vector<14x42xf32>, vector<14x42xf32>, vector<14x42xf32> -> vector<14x378xf32>
    %35 = tpu.concatenate %33, %34 in 1 : vector<14x672xf32>, vector<14x378xf32> -> vector<14x1050xf32>
    %c0_11 = arith.constant 0 : index
    %c0_12 = arith.constant 0 : index
    %36 = vector.load %arg5[%c0_11, %c0_12] : memref<1050x84xf32, #tpu.memory_space<vmem>>, vector<1050x84xf32>
    %cst = arith.constant dense<0.000000e+00> : vector<14x84xf32>
    %37 = tpu.matmul %35, %36, %cst {dimension_numbers = #tpu.dot_dimension_numbers<[1], [0], [0], [1], [0, 0, 1, 1], [], []>} : vector<14x1050xf32>, vector<1050x84xf32>, vector<14x84xf32> -> vector<14x84xf32>
    %38 = vector.extract_strided_slice %3 {offsets = [0, 0], sizes = [14, 42], strides = [1, 1]} : vector<16x48xf32> to vector<14x42xf32>
    %39 = vector.extract_strided_slice %1 {offsets = [0, 3], sizes = [14, 42], strides = [1, 1]} : vector<16x48xf32> to vector<14x42xf32>
    %40 = vector.extract_strided_slice %3 {offsets = [0, 3], sizes = [14, 42], strides = [1, 1]} : vector<16x48xf32> to vector<14x42xf32>
    %41 = vector.extract_strided_slice %1 {offsets = [0, 6], sizes = [14, 42], strides = [1, 1]} : vector<16x48xf32> to vector<14x42xf32>
    %42 = vector.extract_strided_slice %3 {offsets = [0, 6], sizes = [14, 42], strides = [1, 1]} : vector<16x48xf32> to vector<14x42xf32>
    %43 = vector.extract_strided_slice %7 {offsets = [0, 0], sizes = [14, 42], strides = [1, 1]} : vector<16x48xf32> to vector<14x42xf32>
    %44 = vector.extract_strided_slice %5 {offsets = [0, 3], sizes = [14, 42], strides = [1, 1]} : vector<16x48xf32> to vector<14x42xf32>
    %45 = vector.extract_strided_slice %7 {offsets = [0, 3], sizes = [14, 42], strides = [1, 1]} : vector<16x48xf32> to vector<14x42xf32>
    %46 = vector.extract_strided_slice %5 {offsets = [0, 6], sizes = [14, 42], strides = [1, 1]} : vector<16x48xf32> to vector<14x42xf32>
    %47 = vector.extract_strided_slice %7 {offsets = [0, 6], sizes = [14, 42], strides = [1, 1]} : vector<16x48xf32> to vector<14x42xf32>
    %48 = vector.extract_strided_slice %3 {offsets = [1, 0], sizes = [14, 42], strides = [1, 1]} : vector<16x48xf32> to vector<14x42xf32>
    %49 = vector.extract_strided_slice %1 {offsets = [1, 3], sizes = [14, 42], strides = [1, 1]} : vector<16x48xf32> to vector<14x42xf32>
    %50 = vector.extract_strided_slice %3 {offsets = [1, 3], sizes = [14, 42], strides = [1, 1]} : vector<16x48xf32> to vector<14x42xf32>
    %51 = vector.extract_strided_slice %1 {offsets = [1, 6], sizes = [14, 42], strides = [1, 1]} : vector<16x48xf32> to vector<14x42xf32>
    %52 = vector.extract_strided_slice %3 {offsets = [1, 6], sizes = [14, 42], strides = [1, 1]} : vector<16x48xf32> to vector<14x42xf32>
    %53 = vector.extract_strided_slice %7 {offsets = [1, 0], sizes = [14, 42], strides = [1, 1]} : vector<16x48xf32> to vector<14x42xf32>
    %54 = vector.extract_strided_slice %5 {offsets = [1, 3], sizes = [14, 42], strides = [1, 1]} : vector<16x48xf32> to vector<14x42xf32>
    %55 = vector.extract_strided_slice %7 {offsets = [1, 3], sizes = [14, 42], strides = [1, 1]} : vector<16x48xf32> to vector<14x42xf32>
    %56 = vector.extract_strided_slice %5 {offsets = [1, 6], sizes = [14, 42], strides = [1, 1]} : vector<16x48xf32> to vector<14x42xf32>
    %57 = vector.extract_strided_slice %7 {offsets = [1, 6], sizes = [14, 42], strides = [1, 1]} : vector<16x48xf32> to vector<14x42xf32>
    %58 = vector.extract_strided_slice %3 {offsets = [2, 0], sizes = [14, 42], strides = [1, 1]} : vector<16x48xf32> to vector<14x42xf32>
    %59 = vector.extract_strided_slice %1 {offsets = [2, 3], sizes = [14, 42], strides = [1, 1]} : vector<16x48xf32> to vector<14x42xf32>
    %60 = vector.extract_strided_slice %3 {offsets = [2, 3], sizes = [14, 42], strides = [1, 1]} : vector<16x48xf32> to vector<14x42xf32>
    %61 = vector.extract_strided_slice %1 {offsets = [2, 6], sizes = [14, 42], strides = [1, 1]} : vector<16x48xf32> to vector<14x42xf32>
    %62 = vector.extract_strided_slice %3 {offsets = [2, 6], sizes = [14, 42], strides = [1, 1]} : vector<16x48xf32> to vector<14x42xf32>
    %63 = tpu.concatenate %38, %39, %40, %41, %42, %43, %44, %45, %46, %47, %48, %49, %50, %51, %52, %53 in 1 : vector<14x42xf32>, vector<14x42xf32>, vector<14x42xf32>, vector<14x42xf32>, vector<14x42xf32>, vector<14x42xf32>, vector<14x42xf32>, vector<14x42xf32>, vector<14x42xf32>, vector<14x42xf32>, vector<14x42xf32>, vector<14x42xf32>, vector<14x42xf32>, vector<14x42xf32>, vector<14x42xf32>, vector<14x42xf32> -> vector<14x672xf32>
    %64 = tpu.concatenate %54, %55, %56, %57, %58, %59, %60, %61, %62 in 1 : vector<14x42xf32>, vector<14x42xf32>, vector<14x42xf32>, vector<14x42xf32>, vector<14x42xf32>, vector<14x42xf32>, vector<14x42xf32>, vector<14x42xf32>, vector<14x42xf32> -> vector<14x378xf32>
    %65 = tpu.concatenate %63, %64 in 1 : vector<14x672xf32>, vector<14x378xf32> -> vector<14x1050xf32>
    %c0_13 = arith.constant 0 : index
    %c0_14 = arith.constant 0 : index
    %66 = vector.load %arg5[%c0_13, %c0_14] : memref<1050x84xf32, #tpu.memory_space<vmem>>, vector<1050x84xf32>
    %cst_15 = arith.constant dense<0.000000e+00> : vector<14x84xf32>
    %67 = tpu.matmul %65, %66, %cst_15 {dimension_numbers = #tpu.dot_dimension_numbers<[1], [0], [0], [1], [0, 0, 1, 1], [], []>} : vector<14x1050xf32>, vector<1050x84xf32>, vector<14x84xf32> -> vector<14x84xf32>
    %68 = arith.maximumf %37, %67 : vector<14x84xf32>
    %69 = vector.extract_strided_slice %5 {offsets = [0, 0], sizes = [14, 42], strides = [1, 1]} : vector<16x48xf32> to vector<14x42xf32>
    %70 = vector.extract_strided_slice %7 {offsets = [0, 0], sizes = [14, 42], strides = [1, 1]} : vector<16x48xf32> to vector<14x42xf32>
    %71 = vector.extract_strided_slice %5 {offsets = [0, 3], sizes = [14, 42], strides = [1, 1]} : vector<16x48xf32> to vector<14x42xf32>
    %72 = vector.extract_strided_slice %7 {offsets = [0, 3], sizes = [14, 42], strides = [1, 1]} : vector<16x48xf32> to vector<14x42xf32>
    %73 = vector.extract_strided_slice %5 {offsets = [0, 6], sizes = [14, 42], strides = [1, 1]} : vector<16x48xf32> to vector<14x42xf32>
    %74 = vector.extract_strided_slice %1 {offsets = [1, 0], sizes = [14, 42], strides = [1, 1]} : vector<16x48xf32> to vector<14x42xf32>
    %75 = vector.extract_strided_slice %3 {offsets = [1, 0], sizes = [14, 42], strides = [1, 1]} : vector<16x48xf32> to vector<14x42xf32>
    %76 = vector.extract_strided_slice %1 {offsets = [1, 3], sizes = [14, 42], strides = [1, 1]} : vector<16x48xf32> to vector<14x42xf32>
    %77 = vector.extract_strided_slice %3 {offsets = [1, 3], sizes = [14, 42], strides = [1, 1]} : vector<16x48xf32> to vector<14x42xf32>
    %78 = vector.extract_strided_slice %1 {offsets = [1, 6], sizes = [14, 42], strides = [1, 1]} : vector<16x48xf32> to vector<14x42xf32>
    %79 = vector.extract_strided_slice %5 {offsets = [1, 0], sizes = [14, 42], strides = [1, 1]} : vector<16x48xf32> to vector<14x42xf32>
    %80 = vector.extract_strided_slice %7 {offsets = [1, 0], sizes = [14, 42], strides = [1, 1]} : vector<16x48xf32> to vector<14x42xf32>
    %81 = vector.extract_strided_slice %5 {offsets = [1, 3], sizes = [14, 42], strides = [1, 1]} : vector<16x48xf32> to vector<14x42xf32>
    %82 = vector.extract_strided_slice %7 {offsets = [1, 3], sizes = [14, 42], strides = [1, 1]} : vector<16x48xf32> to vector<14x42xf32>
    %83 = vector.extract_strided_slice %5 {offsets = [1, 6], sizes = [14, 42], strides = [1, 1]} : vector<16x48xf32> to vector<14x42xf32>
    %84 = vector.extract_strided_slice %1 {offsets = [2, 0], sizes = [14, 42], strides = [1, 1]} : vector<16x48xf32> to vector<14x42xf32>
    %85 = vector.extract_strided_slice %3 {offsets = [2, 0], sizes = [14, 42], strides = [1, 1]} : vector<16x48xf32> to vector<14x42xf32>
    %86 = vector.extract_strided_slice %1 {offsets = [2, 3], sizes = [14, 42], strides = [1, 1]} : vector<16x48xf32> to vector<14x42xf32>
    %87 = vector.extract_strided_slice %3 {offsets = [2, 3], sizes = [14, 42], strides = [1, 1]} : vector<16x48xf32> to vector<14x42xf32>
    %88 = vector.extract_strided_slice %1 {offsets = [2, 6], sizes = [14, 42], strides = [1, 1]} : vector<16x48xf32> to vector<14x42xf32>
    %89 = vector.extract_strided_slice %5 {offsets = [2, 0], sizes = [14, 42], strides = [1, 1]} : vector<16x48xf32> to vector<14x42xf32>
    %90 = vector.extract_strided_slice %7 {offsets = [2, 0], sizes = [14, 42], strides = [1, 1]} : vector<16x48xf32> to vector<14x42xf32>
    %91 = vector.extract_strided_slice %5 {offsets = [2, 3], sizes = [14, 42], strides = [1, 1]} : vector<16x48xf32> to vector<14x42xf32>
    %92 = vector.extract_strided_slice %7 {offsets = [2, 3], sizes = [14, 42], strides = [1, 1]} : vector<16x48xf32> to vector<14x42xf32>
    %93 = vector.extract_strided_slice %5 {offsets = [2, 6], sizes = [14, 42], strides = [1, 1]} : vector<16x48xf32> to vector<14x42xf32>
    %94 = tpu.concatenate %69, %70, %71, %72, %73, %74, %75, %76, %77, %78, %79, %80, %81, %82, %83, %84 in 1 : vector<14x42xf32>, vector<14x42xf32>, vector<14x42xf32>, vector<14x42xf32>, vector<14x42xf32>, vector<14x42xf32>, vector<14x42xf32>, vector<14x42xf32>, vector<14x42xf32>, vector<14x42xf32>, vector<14x42xf32>, vector<14x42xf32>, vector<14x42xf32>, vector<14x42xf32>, vector<14x42xf32>, vector<14x42xf32> -> vector<14x672xf32>
    %95 = tpu.concatenate %85, %86, %87, %88, %89, %90, %91, %92, %93 in 1 : vector<14x42xf32>, vector<14x42xf32>, vector<14x42xf32>, vector<14x42xf32>, vector<14x42xf32>, vector<14x42xf32>, vector<14x42xf32>, vector<14x42xf32>, vector<14x42xf32> -> vector<14x378xf32>
    %96 = tpu.concatenate %94, %95 in 1 : vector<14x672xf32>, vector<14x378xf32> -> vector<14x1050xf32>
    %c0_16 = arith.constant 0 : index
    %c0_17 = arith.constant 0 : index
    %97 = vector.load %arg5[%c0_16, %c0_17] : memref<1050x84xf32, #tpu.memory_space<vmem>>, vector<1050x84xf32>
    %cst_18 = arith.constant dense<0.000000e+00> : vector<14x84xf32>
    %98 = tpu.matmul %96, %97, %cst_18 {dimension_numbers = #tpu.dot_dimension_numbers<[1], [0], [0], [1], [0, 0, 1, 1], [], []>} : vector<14x1050xf32>, vector<1050x84xf32>, vector<14x84xf32> -> vector<14x84xf32>
    %99 = arith.maximumf %68, %98 : vector<14x84xf32>
    %100 = vector.extract_strided_slice %7 {offsets = [0, 0], sizes = [14, 42], strides = [1, 1]} : vector<16x48xf32> to vector<14x42xf32>
    %101 = vector.extract_strided_slice %5 {offsets = [0, 3], sizes = [14, 42], strides = [1, 1]} : vector<16x48xf32> to vector<14x42xf32>
    %102 = vector.extract_strided_slice %7 {offsets = [0, 3], sizes = [14, 42], strides = [1, 1]} : vector<16x48xf32> to vector<14x42xf32>
    %103 = vector.extract_strided_slice %5 {offsets = [0, 6], sizes = [14, 42], strides = [1, 1]} : vector<16x48xf32> to vector<14x42xf32>
    %104 = vector.extract_strided_slice %7 {offsets = [0, 6], sizes = [14, 42], strides = [1, 1]} : vector<16x48xf32> to vector<14x42xf32>
    %105 = vector.extract_strided_slice %3 {offsets = [1, 0], sizes = [14, 42], strides = [1, 1]} : vector<16x48xf32> to vector<14x42xf32>
    %106 = vector.extract_strided_slice %1 {offsets = [1, 3], sizes = [14, 42], strides = [1, 1]} : vector<16x48xf32> to vector<14x42xf32>
    %107 = vector.extract_strided_slice %3 {offsets = [1, 3], sizes = [14, 42], strides = [1, 1]} : vector<16x48xf32> to vector<14x42xf32>
    %108 = vector.extract_strided_slice %1 {offsets = [1, 6], sizes = [14, 42], strides = [1, 1]} : vector<16x48xf32> to vector<14x42xf32>
    %109 = vector.extract_strided_slice %3 {offsets = [1, 6], sizes = [14, 42], strides = [1, 1]} : vector<16x48xf32> to vector<14x42xf32>
    %110 = vector.extract_strided_slice %7 {offsets = [1, 0], sizes = [14, 42], strides = [1, 1]} : vector<16x48xf32> to vector<14x42xf32>
    %111 = vector.extract_strided_slice %5 {offsets = [1, 3], sizes = [14, 42], strides = [1, 1]} : vector<16x48xf32> to vector<14x42xf32>
    %112 = vector.extract_strided_slice %7 {offsets = [1, 3], sizes = [14, 42], strides = [1, 1]} : vector<16x48xf32> to vector<14x42xf32>
    %113 = vector.extract_strided_slice %5 {offsets = [1, 6], sizes = [14, 42], strides = [1, 1]} : vector<16x48xf32> to vector<14x42xf32>
    %114 = vector.extract_strided_slice %7 {offsets = [1, 6], sizes = [14, 42], strides = [1, 1]} : vector<16x48xf32> to vector<14x42xf32>
    %115 = vector.extract_strided_slice %3 {offsets = [2, 0], sizes = [14, 42], strides = [1, 1]} : vector<16x48xf32> to vector<14x42xf32>
    %116 = vector.extract_strided_slice %1 {offsets = [2, 3], sizes = [14, 42], strides = [1, 1]} : vector<16x48xf32> to vector<14x42xf32>
    %117 = vector.extract_strided_slice %3 {offsets = [2, 3], sizes = [14, 42], strides = [1, 1]} : vector<16x48xf32> to vector<14x42xf32>
    %118 = vector.extract_strided_slice %1 {offsets = [2, 6], sizes = [14, 42], strides = [1, 1]} : vector<16x48xf32> to vector<14x42xf32>
    %119 = vector.extract_strided_slice %3 {offsets = [2, 6], sizes = [14, 42], strides = [1, 1]} : vector<16x48xf32> to vector<14x42xf32>
    %120 = vector.extract_strided_slice %7 {offsets = [2, 0], sizes = [14, 42], strides = [1, 1]} : vector<16x48xf32> to vector<14x42xf32>
    %121 = vector.extract_strided_slice %5 {offsets = [2, 3], sizes = [14, 42], strides = [1, 1]} : vector<16x48xf32> to vector<14x42xf32>
    %122 = vector.extract_strided_slice %7 {offsets = [2, 3], sizes = [14, 42], strides = [1, 1]} : vector<16x48xf32> to vector<14x42xf32>
    %123 = vector.extract_strided_slice %5 {offsets = [2, 6], sizes = [14, 42], strides = [1, 1]} : vector<16x48xf32> to vector<14x42xf32>
    %124 = vector.extract_strided_slice %7 {offsets = [2, 6], sizes = [14, 42], strides = [1, 1]} : vector<16x48xf32> to vector<14x42xf32>
    %125 = tpu.concatenate %100, %101, %102, %103, %104, %105, %106, %107, %108, %109, %110, %111, %112, %113, %114, %115 in 1 : vector<14x42xf32>, vector<14x42xf32>, vector<14x42xf32>, vector<14x42xf32>, vector<14x42xf32>, vector<14x42xf32>, vector<14x42xf32>, vector<14x42xf32>, vector<14x42xf32>, vector<14x42xf32>, vector<14x42xf32>, vector<14x42xf32>, vector<14x42xf32>, vector<14x42xf32>, vector<14x42xf32>, vector<14x42xf32> -> vector<14x672xf32>
    %126 = tpu.concatenate %116, %117, %118, %119, %120, %121, %122, %123, %124 in 1 : vector<14x42xf32>, vector<14x42xf32>, vector<14x42xf32>, vector<14x42xf32>, vector<14x42xf32>, vector<14x42xf32>, vector<14x42xf32>, vector<14x42xf32>, vector<14x42xf32> -> vector<14x378xf32>
    %127 = tpu.concatenate %125, %126 in 1 : vector<14x672xf32>, vector<14x378xf32> -> vector<14x1050xf32>
    %c0_19 = arith.constant 0 : index
    %c0_20 = arith.constant 0 : index
    %128 = vector.load %arg5[%c0_19, %c0_20] : memref<1050x84xf32, #tpu.memory_space<vmem>>, vector<1050x84xf32>
    %cst_21 = arith.constant dense<0.000000e+00> : vector<14x84xf32>
    %129 = tpu.matmul %127, %128, %cst_21 {dimension_numbers = #tpu.dot_dimension_numbers<[1], [0], [0], [1], [0, 0, 1, 1], [], []>} : vector<14x1050xf32>, vector<1050x84xf32>, vector<14x84xf32> -> vector<14x84xf32>
    %130 = arith.maximumf %99, %129 : vector<14x84xf32>
    %c0_22 = arith.constant 0 : index
    %c0_23 = arith.constant 0 : index
    %131 = vector.load %arg6[%c0_22, %c0_23] : memref<1x84xf32, #tpu.memory_space<vmem>>, vector<1x84xf32>
    %132 = vector.broadcast %131 : vector<1x84xf32> to vector<14x84xf32>
    %133 = arith.addf %130, %132 : vector<14x84xf32>
    %cst_24 = arith.constant 0.000000e+00 : f32
    %134 = vector.broadcast %cst_24 : f32 to vector<14x84xf32>
    %135 = arith.maximumf %133, %134 : vector<14x84xf32>
    %c0_25 = arith.constant 0 : index
    %c0_26 = arith.constant 0 : index
    %c0_27 = arith.constant 0 : index
    %136 = vector.load %arg7[%c0_25, %c0_26, %c0_27] : memref<1x14x84xf32, #tpu.memory_space<vmem>>, vector<1x14x84xf32>
    %137 = vector.shape_cast %136 : vector<1x14x84xf32> to vector<14x84xf32>
    %138 = vector.shape_cast %135 : vector<14x84xf32> to vector<1x14x84xf32>
    tpu.vector_store %arg7[%c0_25, %c0_26, %c0_27], %138 {strides = array<i32>} : memref<1x14x84xf32, #tpu.memory_space<vmem>>, vector<1x14x84xf32>,
    return
  }
  func.func @transform_0(%arg0: i32) -> (i32, i32, i32) {
    %c0_i32 = arith.constant 0 : i32
    %c0_i32_0 = arith.constant 0 : i32
    %c0_i32_1 = arith.constant 0 : i32
    return %arg0, %c0_i32, %c0_i32_0 : i32, i32, i32
  }
  func.func @transform_1(%arg0: i32) -> (i32, i32, i32) {
    %c0_i32 = arith.constant 0 : i32
    %c0_i32_0 = arith.constant 0 : i32
    %c0_i32_1 = arith.constant 0 : i32
    return %arg0, %c0_i32, %c0_i32_0 : i32, i32, i32
  }
  func.func @transform_2(%arg0: i32) -> (i32, i32, i32) {
    %c0_i32 = arith.constant 0 : i32
    %c0_i32_0 = arith.constant 0 : i32
    %c0_i32_1 = arith.constant 0 : i32
    return %arg0, %c0_i32, %c0_i32_0 : i32, i32, i32
  }
  func.func @transform_3(%arg0: i32) -> (i32, i32, i32) {
    %c0_i32 = arith.constant 0 : i32
    %c0_i32_0 = arith.constant 0 : i32
    %c0_i32_1 = arith.constant 0 : i32
    return %arg0, %c0_i32, %c0_i32_0 : i32, i32, i32
  }
  func.func @transform_4(%arg0: i32) -> (i32, i32) {
    %c0_i32 = arith.constant 0 : i32
    %c0_i32_0 = arith.constant 0 : i32
    %c0_i32_1 = arith.constant 0 : i32
    return %c0_i32, %c0_i32_0 : i32, i32
  }
  func.func @transform_5(%arg0: i32) -> (i32, i32) {
    %c0_i32 = arith.constant 0 : i32
    %c0_i32_0 = arith.constant 0 : i32
    %c0_i32_1 = arith.constant 0 : i32
    return %c0_i32, %c0_i32_0 : i32, i32
  }
  func.func @transform_6(%arg0: i32) -> (i32, i32, i32) {
    %c0_i32 = arith.constant 0 : i32
    %c0_i32_0 = arith.constant 0 : i32
    %c0_i32_1 = arith.constant 0 : i32
    return %arg0, %c0_i32, %c0_i32_0 : i32, i32, i32
  }
}

module attributes {stable_mosaic.version = 11 : i64} {
  func.func @_conv_pool_relu_kernel(%arg0: i32, %arg1: memref<1x7x42xf32, #tpu.memory_space<vmem>>, %arg2: memref<1x7x42xf32, #tpu.memory_space<vmem>>, %arg3: memref<1x7x42xf32, #tpu.memory_space<vmem>>, %arg4: memref<1x7x42xf32, #tpu.memory_space<vmem>>, %arg5: memref<750x80xf32, #tpu.memory_space<vmem>>, %arg6: memref<1x80xf32, #tpu.memory_space<vmem>>, %arg7: memref<1x5x80xf32, #tpu.memory_space<vmem>>) attributes {dimension_semantics = [#tpu.dimension_semantics<parallel>], iteration_bounds = array<i64: 2>, scalar_prefetch = 0 : i64, scratch_operands = 0 : i64, tpu.core_type = #tpu.core_type<tc>, window_params = [{transform_indices = @transform_0, window_bounds = array<i64: 1, 7, 42>}, {transform_indices = @transform_1, window_bounds = array<i64: 1, 7, 42>}, {transform_indices = @transform_2, window_bounds = array<i64: 1, 7, 42>}, {transform_indices = @transform_3, window_bounds = array<i64: 1, 7, 42>}, {pipeline_mode = #tpu.pipeline_mode<synchronous>, transform_indices = @transform_4, window_bounds = array<i64: 750, 80>}, {pipeline_mode = #tpu.pipeline_mode<synchronous>, transform_indices = @transform_5, window_bounds = array<i64: 1, 80>}, {transform_indices = @transform_6, window_bounds = array<i64: 1, 5, 80>}]} {
    %c0 = arith.constant 0 : index
    %c0_0 = arith.constant 0 : index
    %c0_1 = arith.constant 0 : index
    %0 = vector.load %arg1[%c0, %c0_0, %c0_1] : memref<1x7x42xf32, #tpu.memory_space<vmem>>, vector<1x7x42xf32>
    %1 = vector.shape_cast %0 : vector<1x7x42xf32> to vector<7x42xf32>
    %c0_2 = arith.constant 0 : index
    %c0_3 = arith.constant 0 : index
    %c0_4 = arith.constant 0 : index
    %2 = vector.load %arg2[%c0_2, %c0_3, %c0_4] : memref<1x7x42xf32, #tpu.memory_space<vmem>>, vector<1x7x42xf32>
    %3 = vector.shape_cast %2 : vector<1x7x42xf32> to vector<7x42xf32>
    %c0_5 = arith.constant 0 : index
    %c0_6 = arith.constant 0 : index
    %c0_7 = arith.constant 0 : index
    %4 = vector.load %arg3[%c0_5, %c0_6, %c0_7] : memref<1x7x42xf32, #tpu.memory_space<vmem>>, vector<1x7x42xf32>
    %5 = vector.shape_cast %4 : vector<1x7x42xf32> to vector<7x42xf32>
    %c0_8 = arith.constant 0 : index
    %c0_9 = arith.constant 0 : index
    %c0_10 = arith.constant 0 : index
    %6 = vector.load %arg4[%c0_8, %c0_9, %c0_10] : memref<1x7x42xf32, #tpu.memory_space<vmem>>, vector<1x7x42xf32>
    %7 = vector.shape_cast %6 : vector<1x7x42xf32> to vector<7x42xf32>
    %8 = vector.extract_strided_slice %1 {offsets = [0, 0], sizes = [5, 30], strides = [1, 1]} : vector<7x42xf32> to vector<5x30xf32>
    %9 = vector.extract_strided_slice %3 {offsets = [0, 0], sizes = [5, 30], strides = [1, 1]} : vector<7x42xf32> to vector<5x30xf32>
    %10 = vector.extract_strided_slice %1 {offsets = [0, 6], sizes = [5, 30], strides = [1, 1]} : vector<7x42xf32> to vector<5x30xf32>
    %11 = vector.extract_strided_slice %3 {offsets = [0, 6], sizes = [5, 30], strides = [1, 1]} : vector<7x42xf32> to vector<5x30xf32>
    %12 = vector.extract_strided_slice %1 {offsets = [0, 12], sizes = [5, 30], strides = [1, 1]} : vector<7x42xf32> to vector<5x30xf32>
    %13 = vector.extract_strided_slice %5 {offsets = [0, 0], sizes = [5, 30], strides = [1, 1]} : vector<7x42xf32> to vector<5x30xf32>
    %14 = vector.extract_strided_slice %7 {offsets = [0, 0], sizes = [5, 30], strides = [1, 1]} : vector<7x42xf32> to vector<5x30xf32>
    %15 = vector.extract_strided_slice %5 {offsets = [0, 6], sizes = [5, 30], strides = [1, 1]} : vector<7x42xf32> to vector<5x30xf32>
    %16 = vector.extract_strided_slice %7 {offsets = [0, 6], sizes = [5, 30], strides = [1, 1]} : vector<7x42xf32> to vector<5x30xf32>
    %17 = vector.extract_strided_slice %5 {offsets = [0, 12], sizes = [5, 30], strides = [1, 1]} : vector<7x42xf32> to vector<5x30xf32>
    %18 = vector.extract_strided_slice %1 {offsets = [1, 0], sizes = [5, 30], strides = [1, 1]} : vector<7x42xf32> to vector<5x30xf32>
    %19 = vector.extract_strided_slice %3 {offsets = [1, 0], sizes = [5, 30], strides = [1, 1]} : vector<7x42xf32> to vector<5x30xf32>
    %20 = vector.extract_strided_slice %1 {offsets = [1, 6], sizes = [5, 30], strides = [1, 1]} : vector<7x42xf32> to vector<5x30xf32>
    %21 = vector.extract_strided_slice %3 {offsets = [1, 6], sizes = [5, 30], strides = [1, 1]} : vector<7x42xf32> to vector<5x30xf32>
    %22 = vector.extract_strided_slice %1 {offsets = [1, 12], sizes = [5, 30], strides = [1, 1]} : vector<7x42xf32> to vector<5x30xf32>
    %23 = vector.extract_strided_slice %5 {offsets = [1, 0], sizes = [5, 30], strides = [1, 1]} : vector<7x42xf32> to vector<5x30xf32>
    %24 = vector.extract_strided_slice %7 {offsets = [1, 0], sizes = [5, 30], strides = [1, 1]} : vector<7x42xf32> to vector<5x30xf32>
    %25 = vector.extract_strided_slice %5 {offsets = [1, 6], sizes = [5, 30], strides = [1, 1]} : vector<7x42xf32> to vector<5x30xf32>
    %26 = vector.extract_strided_slice %7 {offsets = [1, 6], sizes = [5, 30], strides = [1, 1]} : vector<7x42xf32> to vector<5x30xf32>
    %27 = vector.extract_strided_slice %5 {offsets = [1, 12], sizes = [5, 30], strides = [1, 1]} : vector<7x42xf32> to vector<5x30xf32>
    %28 = vector.extract_strided_slice %1 {offsets = [2, 0], sizes = [5, 30], strides = [1, 1]} : vector<7x42xf32> to vector<5x30xf32>
    %29 = vector.extract_strided_slice %3 {offsets = [2, 0], sizes = [5, 30], strides = [1, 1]} : vector<7x42xf32> to vector<5x30xf32>
    %30 = vector.extract_strided_slice %1 {offsets = [2, 6], sizes = [5, 30], strides = [1, 1]} : vector<7x42xf32> to vector<5x30xf32>
    %31 = vector.extract_strided_slice %3 {offsets = [2, 6], sizes = [5, 30], strides = [1, 1]} : vector<7x42xf32> to vector<5x30xf32>
    %32 = vector.extract_strided_slice %1 {offsets = [2, 12], sizes = [5, 30], strides = [1, 1]} : vector<7x42xf32> to vector<5x30xf32>
    %33 = tpu.concatenate %8, %9, %10, %11, %12, %13, %14, %15, %16, %17, %18, %19, %20, %21, %22, %23 in 1 : vector<5x30xf32>, vector<5x30xf32>, vector<5x30xf32>, vector<5x30xf32>, vector<5x30xf32>, vector<5x30xf32>, vector<5x30xf32>, vector<5x30xf32>, vector<5x30xf32>, vector<5x30xf32>, vector<5x30xf32>, vector<5x30xf32>, vector<5x30xf32>, vector<5x30xf32>, vector<5x30xf32>, vector<5x30xf32> -> vector<5x480xf32>
    %34 = tpu.concatenate %24, %25, %26, %27, %28, %29, %30, %31, %32 in 1 : vector<5x30xf32>, vector<5x30xf32>, vector<5x30xf32>, vector<5x30xf32>, vector<5x30xf32>, vector<5x30xf32>, vector<5x30xf32>, vector<5x30xf32>, vector<5x30xf32> -> vector<5x270xf32>
    %35 = tpu.concatenate %33, %34 in 1 : vector<5x480xf32>, vector<5x270xf32> -> vector<5x750xf32>
    %c0_11 = arith.constant 0 : index
    %c0_12 = arith.constant 0 : index
    %36 = vector.load %arg5[%c0_11, %c0_12] : memref<750x80xf32, #tpu.memory_space<vmem>>, vector<750x80xf32>
    %cst = arith.constant dense<0.000000e+00> : vector<5x80xf32>
    %37 = tpu.matmul %35, %36, %cst {dimension_numbers = #tpu.dot_dimension_numbers<[1], [0], [0], [1], [0, 0, 1, 1], [], []>} : vector<5x750xf32>, vector<750x80xf32>, vector<5x80xf32> -> vector<5x80xf32>
    %38 = vector.extract_strided_slice %3 {offsets = [0, 0], sizes = [5, 30], strides = [1, 1]} : vector<7x42xf32> to vector<5x30xf32>
    %39 = vector.extract_strided_slice %1 {offsets = [0, 6], sizes = [5, 30], strides = [1, 1]} : vector<7x42xf32> to vector<5x30xf32>
    %40 = vector.extract_strided_slice %3 {offsets = [0, 6], sizes = [5, 30], strides = [1, 1]} : vector<7x42xf32> to vector<5x30xf32>
    %41 = vector.extract_strided_slice %1 {offsets = [0, 12], sizes = [5, 30], strides = [1, 1]} : vector<7x42xf32> to vector<5x30xf32>
    %42 = vector.extract_strided_slice %3 {offsets = [0, 12], sizes = [5, 30], strides = [1, 1]} : vector<7x42xf32> to vector<5x30xf32>
    %43 = vector.extract_strided_slice %7 {offsets = [0, 0], sizes = [5, 30], strides = [1, 1]} : vector<7x42xf32> to vector<5x30xf32>
    %44 = vector.extract_strided_slice %5 {offsets = [0, 6], sizes = [5, 30], strides = [1, 1]} : vector<7x42xf32> to vector<5x30xf32>
    %45 = vector.extract_strided_slice %7 {offsets = [0, 6], sizes = [5, 30], strides = [1, 1]} : vector<7x42xf32> to vector<5x30xf32>
    %46 = vector.extract_strided_slice %5 {offsets = [0, 12], sizes = [5, 30], strides = [1, 1]} : vector<7x42xf32> to vector<5x30xf32>
    %47 = vector.extract_strided_slice %7 {offsets = [0, 12], sizes = [5, 30], strides = [1, 1]} : vector<7x42xf32> to vector<5x30xf32>
    %48 = vector.extract_strided_slice %3 {offsets = [1, 0], sizes = [5, 30], strides = [1, 1]} : vector<7x42xf32> to vector<5x30xf32>
    %49 = vector.extract_strided_slice %1 {offsets = [1, 6], sizes = [5, 30], strides = [1, 1]} : vector<7x42xf32> to vector<5x30xf32>
    %50 = vector.extract_strided_slice %3 {offsets = [1, 6], sizes = [5, 30], strides = [1, 1]} : vector<7x42xf32> to vector<5x30xf32>
    %51 = vector.extract_strided_slice %1 {offsets = [1, 12], sizes = [5, 30], strides = [1, 1]} : vector<7x42xf32> to vector<5x30xf32>
    %52 = vector.extract_strided_slice %3 {offsets = [1, 12], sizes = [5, 30], strides = [1, 1]} : vector<7x42xf32> to vector<5x30xf32>
    %53 = vector.extract_strided_slice %7 {offsets = [1, 0], sizes = [5, 30], strides = [1, 1]} : vector<7x42xf32> to vector<5x30xf32>
    %54 = vector.extract_strided_slice %5 {offsets = [1, 6], sizes = [5, 30], strides = [1, 1]} : vector<7x42xf32> to vector<5x30xf32>
    %55 = vector.extract_strided_slice %7 {offsets = [1, 6], sizes = [5, 30], strides = [1, 1]} : vector<7x42xf32> to vector<5x30xf32>
    %56 = vector.extract_strided_slice %5 {offsets = [1, 12], sizes = [5, 30], strides = [1, 1]} : vector<7x42xf32> to vector<5x30xf32>
    %57 = vector.extract_strided_slice %7 {offsets = [1, 12], sizes = [5, 30], strides = [1, 1]} : vector<7x42xf32> to vector<5x30xf32>
    %58 = vector.extract_strided_slice %3 {offsets = [2, 0], sizes = [5, 30], strides = [1, 1]} : vector<7x42xf32> to vector<5x30xf32>
    %59 = vector.extract_strided_slice %1 {offsets = [2, 6], sizes = [5, 30], strides = [1, 1]} : vector<7x42xf32> to vector<5x30xf32>
    %60 = vector.extract_strided_slice %3 {offsets = [2, 6], sizes = [5, 30], strides = [1, 1]} : vector<7x42xf32> to vector<5x30xf32>
    %61 = vector.extract_strided_slice %1 {offsets = [2, 12], sizes = [5, 30], strides = [1, 1]} : vector<7x42xf32> to vector<5x30xf32>
    %62 = vector.extract_strided_slice %3 {offsets = [2, 12], sizes = [5, 30], strides = [1, 1]} : vector<7x42xf32> to vector<5x30xf32>
    %63 = tpu.concatenate %38, %39, %40, %41, %42, %43, %44, %45, %46, %47, %48, %49, %50, %51, %52, %53 in 1 : vector<5x30xf32>, vector<5x30xf32>, vector<5x30xf32>, vector<5x30xf32>, vector<5x30xf32>, vector<5x30xf32>, vector<5x30xf32>, vector<5x30xf32>, vector<5x30xf32>, vector<5x30xf32>, vector<5x30xf32>, vector<5x30xf32>, vector<5x30xf32>, vector<5x30xf32>, vector<5x30xf32>, vector<5x30xf32> -> vector<5x480xf32>
    %64 = tpu.concatenate %54, %55, %56, %57, %58, %59, %60, %61, %62 in 1 : vector<5x30xf32>, vector<5x30xf32>, vector<5x30xf32>, vector<5x30xf32>, vector<5x30xf32>, vector<5x30xf32>, vector<5x30xf32>, vector<5x30xf32>, vector<5x30xf32> -> vector<5x270xf32>
    %65 = tpu.concatenate %63, %64 in 1 : vector<5x480xf32>, vector<5x270xf32> -> vector<5x750xf32>
    %c0_13 = arith.constant 0 : index
    %c0_14 = arith.constant 0 : index
    %66 = vector.load %arg5[%c0_13, %c0_14] : memref<750x80xf32, #tpu.memory_space<vmem>>, vector<750x80xf32>
    %cst_15 = arith.constant dense<0.000000e+00> : vector<5x80xf32>
    %67 = tpu.matmul %65, %66, %cst_15 {dimension_numbers = #tpu.dot_dimension_numbers<[1], [0], [0], [1], [0, 0, 1, 1], [], []>} : vector<5x750xf32>, vector<750x80xf32>, vector<5x80xf32> -> vector<5x80xf32>
    %68 = arith.maximumf %37, %67 : vector<5x80xf32>
    %69 = vector.extract_strided_slice %5 {offsets = [0, 0], sizes = [5, 30], strides = [1, 1]} : vector<7x42xf32> to vector<5x30xf32>
    %70 = vector.extract_strided_slice %7 {offsets = [0, 0], sizes = [5, 30], strides = [1, 1]} : vector<7x42xf32> to vector<5x30xf32>
    %71 = vector.extract_strided_slice %5 {offsets = [0, 6], sizes = [5, 30], strides = [1, 1]} : vector<7x42xf32> to vector<5x30xf32>
    %72 = vector.extract_strided_slice %7 {offsets = [0, 6], sizes = [5, 30], strides = [1, 1]} : vector<7x42xf32> to vector<5x30xf32>
    %73 = vector.extract_strided_slice %5 {offsets = [0, 12], sizes = [5, 30], strides = [1, 1]} : vector<7x42xf32> to vector<5x30xf32>
    %74 = vector.extract_strided_slice %1 {offsets = [1, 0], sizes = [5, 30], strides = [1, 1]} : vector<7x42xf32> to vector<5x30xf32>
    %75 = vector.extract_strided_slice %3 {offsets = [1, 0], sizes = [5, 30], strides = [1, 1]} : vector<7x42xf32> to vector<5x30xf32>
    %76 = vector.extract_strided_slice %1 {offsets = [1, 6], sizes = [5, 30], strides = [1, 1]} : vector<7x42xf32> to vector<5x30xf32>
    %77 = vector.extract_strided_slice %3 {offsets = [1, 6], sizes = [5, 30], strides = [1, 1]} : vector<7x42xf32> to vector<5x30xf32>
    %78 = vector.extract_strided_slice %1 {offsets = [1, 12], sizes = [5, 30], strides = [1, 1]} : vector<7x42xf32> to vector<5x30xf32>
    %79 = vector.extract_strided_slice %5 {offsets = [1, 0], sizes = [5, 30], strides = [1, 1]} : vector<7x42xf32> to vector<5x30xf32>
    %80 = vector.extract_strided_slice %7 {offsets = [1, 0], sizes = [5, 30], strides = [1, 1]} : vector<7x42xf32> to vector<5x30xf32>
    %81 = vector.extract_strided_slice %5 {offsets = [1, 6], sizes = [5, 30], strides = [1, 1]} : vector<7x42xf32> to vector<5x30xf32>
    %82 = vector.extract_strided_slice %7 {offsets = [1, 6], sizes = [5, 30], strides = [1, 1]} : vector<7x42xf32> to vector<5x30xf32>
    %83 = vector.extract_strided_slice %5 {offsets = [1, 12], sizes = [5, 30], strides = [1, 1]} : vector<7x42xf32> to vector<5x30xf32>
    %84 = vector.extract_strided_slice %1 {offsets = [2, 0], sizes = [5, 30], strides = [1, 1]} : vector<7x42xf32> to vector<5x30xf32>
    %85 = vector.extract_strided_slice %3 {offsets = [2, 0], sizes = [5, 30], strides = [1, 1]} : vector<7x42xf32> to vector<5x30xf32>
    %86 = vector.extract_strided_slice %1 {offsets = [2, 6], sizes = [5, 30], strides = [1, 1]} : vector<7x42xf32> to vector<5x30xf32>
    %87 = vector.extract_strided_slice %3 {offsets = [2, 6], sizes = [5, 30], strides = [1, 1]} : vector<7x42xf32> to vector<5x30xf32>
    %88 = vector.extract_strided_slice %1 {offsets = [2, 12], sizes = [5, 30], strides = [1, 1]} : vector<7x42xf32> to vector<5x30xf32>
    %89 = vector.extract_strided_slice %5 {offsets = [2, 0], sizes = [5, 30], strides = [1, 1]} : vector<7x42xf32> to vector<5x30xf32>
    %90 = vector.extract_strided_slice %7 {offsets = [2, 0], sizes = [5, 30], strides = [1, 1]} : vector<7x42xf32> to vector<5x30xf32>
    %91 = vector.extract_strided_slice %5 {offsets = [2, 6], sizes = [5, 30], strides = [1, 1]} : vector<7x42xf32> to vector<5x30xf32>
    %92 = vector.extract_strided_slice %7 {offsets = [2, 6], sizes = [5, 30], strides = [1, 1]} : vector<7x42xf32> to vector<5x30xf32>
    %93 = vector.extract_strided_slice %5 {offsets = [2, 12], sizes = [5, 30], strides = [1, 1]} : vector<7x42xf32> to vector<5x30xf32>
    %94 = tpu.concatenate %69, %70, %71, %72, %73, %74, %75, %76, %77, %78, %79, %80, %81, %82, %83, %84 in 1 : vector<5x30xf32>, vector<5x30xf32>, vector<5x30xf32>, vector<5x30xf32>, vector<5x30xf32>, vector<5x30xf32>, vector<5x30xf32>, vector<5x30xf32>, vector<5x30xf32>, vector<5x30xf32>, vector<5x30xf32>, vector<5x30xf32>, vector<5x30xf32>, vector<5x30xf32>, vector<5x30xf32>, vector<5x30xf32> -> vector<5x480xf32>
    %95 = tpu.concatenate %85, %86, %87, %88, %89, %90, %91, %92, %93 in 1 : vector<5x30xf32>, vector<5x30xf32>, vector<5x30xf32>, vector<5x30xf32>, vector<5x30xf32>, vector<5x30xf32>, vector<5x30xf32>, vector<5x30xf32>, vector<5x30xf32> -> vector<5x270xf32>
    %96 = tpu.concatenate %94, %95 in 1 : vector<5x480xf32>, vector<5x270xf32> -> vector<5x750xf32>
    %c0_16 = arith.constant 0 : index
    %c0_17 = arith.constant 0 : index
    %97 = vector.load %arg5[%c0_16, %c0_17] : memref<750x80xf32, #tpu.memory_space<vmem>>, vector<750x80xf32>
    %cst_18 = arith.constant dense<0.000000e+00> : vector<5x80xf32>
    %98 = tpu.matmul %96, %97, %cst_18 {dimension_numbers = #tpu.dot_dimension_numbers<[1], [0], [0], [1], [0, 0, 1, 1], [], []>} : vector<5x750xf32>, vector<750x80xf32>, vector<5x80xf32> -> vector<5x80xf32>
    %99 = arith.maximumf %68, %98 : vector<5x80xf32>
    %100 = vector.extract_strided_slice %7 {offsets = [0, 0], sizes = [5, 30], strides = [1, 1]} : vector<7x42xf32> to vector<5x30xf32>
    %101 = vector.extract_strided_slice %5 {offsets = [0, 6], sizes = [5, 30], strides = [1, 1]} : vector<7x42xf32> to vector<5x30xf32>
    %102 = vector.extract_strided_slice %7 {offsets = [0, 6], sizes = [5, 30], strides = [1, 1]} : vector<7x42xf32> to vector<5x30xf32>
    %103 = vector.extract_strided_slice %5 {offsets = [0, 12], sizes = [5, 30], strides = [1, 1]} : vector<7x42xf32> to vector<5x30xf32>
    %104 = vector.extract_strided_slice %7 {offsets = [0, 12], sizes = [5, 30], strides = [1, 1]} : vector<7x42xf32> to vector<5x30xf32>
    %105 = vector.extract_strided_slice %3 {offsets = [1, 0], sizes = [5, 30], strides = [1, 1]} : vector<7x42xf32> to vector<5x30xf32>
    %106 = vector.extract_strided_slice %1 {offsets = [1, 6], sizes = [5, 30], strides = [1, 1]} : vector<7x42xf32> to vector<5x30xf32>
    %107 = vector.extract_strided_slice %3 {offsets = [1, 6], sizes = [5, 30], strides = [1, 1]} : vector<7x42xf32> to vector<5x30xf32>
    %108 = vector.extract_strided_slice %1 {offsets = [1, 12], sizes = [5, 30], strides = [1, 1]} : vector<7x42xf32> to vector<5x30xf32>
    %109 = vector.extract_strided_slice %3 {offsets = [1, 12], sizes = [5, 30], strides = [1, 1]} : vector<7x42xf32> to vector<5x30xf32>
    %110 = vector.extract_strided_slice %7 {offsets = [1, 0], sizes = [5, 30], strides = [1, 1]} : vector<7x42xf32> to vector<5x30xf32>
    %111 = vector.extract_strided_slice %5 {offsets = [1, 6], sizes = [5, 30], strides = [1, 1]} : vector<7x42xf32> to vector<5x30xf32>
    %112 = vector.extract_strided_slice %7 {offsets = [1, 6], sizes = [5, 30], strides = [1, 1]} : vector<7x42xf32> to vector<5x30xf32>
    %113 = vector.extract_strided_slice %5 {offsets = [1, 12], sizes = [5, 30], strides = [1, 1]} : vector<7x42xf32> to vector<5x30xf32>
    %114 = vector.extract_strided_slice %7 {offsets = [1, 12], sizes = [5, 30], strides = [1, 1]} : vector<7x42xf32> to vector<5x30xf32>
    %115 = vector.extract_strided_slice %3 {offsets = [2, 0], sizes = [5, 30], strides = [1, 1]} : vector<7x42xf32> to vector<5x30xf32>
    %116 = vector.extract_strided_slice %1 {offsets = [2, 6], sizes = [5, 30], strides = [1, 1]} : vector<7x42xf32> to vector<5x30xf32>
    %117 = vector.extract_strided_slice %3 {offsets = [2, 6], sizes = [5, 30], strides = [1, 1]} : vector<7x42xf32> to vector<5x30xf32>
    %118 = vector.extract_strided_slice %1 {offsets = [2, 12], sizes = [5, 30], strides = [1, 1]} : vector<7x42xf32> to vector<5x30xf32>
    %119 = vector.extract_strided_slice %3 {offsets = [2, 12], sizes = [5, 30], strides = [1, 1]} : vector<7x42xf32> to vector<5x30xf32>
    %120 = vector.extract_strided_slice %7 {offsets = [2, 0], sizes = [5, 30], strides = [1, 1]} : vector<7x42xf32> to vector<5x30xf32>
    %121 = vector.extract_strided_slice %5 {offsets = [2, 6], sizes = [5, 30], strides = [1, 1]} : vector<7x42xf32> to vector<5x30xf32>
    %122 = vector.extract_strided_slice %7 {offsets = [2, 6], sizes = [5, 30], strides = [1, 1]} : vector<7x42xf32> to vector<5x30xf32>
    %123 = vector.extract_strided_slice %5 {offsets = [2, 12], sizes = [5, 30], strides = [1, 1]} : vector<7x42xf32> to vector<5x30xf32>
    %124 = vector.extract_strided_slice %7 {offsets = [2, 12], sizes = [5, 30], strides = [1, 1]} : vector<7x42xf32> to vector<5x30xf32>
    %125 = tpu.concatenate %100, %101, %102, %103, %104, %105, %106, %107, %108, %109, %110, %111, %112, %113, %114, %115 in 1 : vector<5x30xf32>, vector<5x30xf32>, vector<5x30xf32>, vector<5x30xf32>, vector<5x30xf32>, vector<5x30xf32>, vector<5x30xf32>, vector<5x30xf32>, vector<5x30xf32>, vector<5x30xf32>, vector<5x30xf32>, vector<5x30xf32>, vector<5x30xf32>, vector<5x30xf32>, vector<5x30xf32>, vector<5x30xf32> -> vector<5x480xf32>
    %126 = tpu.concatenate %116, %117, %118, %119, %120, %121, %122, %123, %124 in 1 : vector<5x30xf32>, vector<5x30xf32>, vector<5x30xf32>, vector<5x30xf32>, vector<5x30xf32>, vector<5x30xf32>, vector<5x30xf32>, vector<5x30xf32>, vector<5x30xf32> -> vector<5x270xf32>
    %127 = tpu.concatenate %125, %126 in 1 : vector<5x480xf32>, vector<5x270xf32> -> vector<5x750xf32>
    %c0_19 = arith.constant 0 : index
    %c0_20 = arith.constant 0 : index
    %128 = vector.load %arg5[%c0_19, %c0_20] : memref<750x80xf32, #tpu.memory_space<vmem>>, vector<750x80xf32>
    %cst_21 = arith.constant dense<0.000000e+00> : vector<5x80xf32>
    %129 = tpu.matmul %127, %128, %cst_21 {dimension_numbers = #tpu.dot_dimension_numbers<[1], [0], [0], [1], [0, 0, 1, 1], [], []>} : vector<5x750xf32>, vector<750x80xf32>, vector<5x80xf32> -> vector<5x80xf32>
    %130 = arith.maximumf %99, %129 : vector<5x80xf32>
    %c0_22 = arith.constant 0 : index
    %c0_23 = arith.constant 0 : index
    %131 = vector.load %arg6[%c0_22, %c0_23] : memref<1x80xf32, #tpu.memory_space<vmem>>, vector<1x80xf32>
    %132 = vector.broadcast %131 : vector<1x80xf32> to vector<5x80xf32>
    %133 = arith.addf %130, %132 : vector<5x80xf32>
    %cst_24 = arith.constant 0.000000e+00 : f32
    %134 = vector.broadcast %cst_24 : f32 to vector<5x80xf32>
    %135 = arith.maximumf %133, %134 : vector<5x80xf32>
    %c0_25 = arith.constant 0 : index
    %c0_26 = arith.constant 0 : index
    %c0_27 = arith.constant 0 : index
    %136 = vector.load %arg7[%c0_25, %c0_26, %c0_27] : memref<1x5x80xf32, #tpu.memory_space<vmem>>, vector<1x5x80xf32>
    %137 = vector.shape_cast %136 : vector<1x5x80xf32> to vector<5x80xf32>
    %138 = vector.shape_cast %135 : vector<5x80xf32> to vector<1x5x80xf32>
    tpu.vector_store %arg7[%c0_25, %c0_26, %c0_27], %138 {strides = array<i32>} : memref<1x5x80xf32, #tpu.memory_space<vmem>>, vector<1x5x80xf32>,
    return
  }
  func.func @transform_0(%arg0: i32) -> (i32, i32, i32) {
    %c0_i32 = arith.constant 0 : i32
    %c0_i32_0 = arith.constant 0 : i32
    %c0_i32_1 = arith.constant 0 : i32
    return %arg0, %c0_i32, %c0_i32_0 : i32, i32, i32
  }
  func.func @transform_1(%arg0: i32) -> (i32, i32, i32) {
    %c0_i32 = arith.constant 0 : i32
    %c0_i32_0 = arith.constant 0 : i32
    %c0_i32_1 = arith.constant 0 : i32
    return %arg0, %c0_i32, %c0_i32_0 : i32, i32, i32
  }
  func.func @transform_2(%arg0: i32) -> (i32, i32, i32) {
    %c0_i32 = arith.constant 0 : i32
    %c0_i32_0 = arith.constant 0 : i32
    %c0_i32_1 = arith.constant 0 : i32
    return %arg0, %c0_i32, %c0_i32_0 : i32, i32, i32
  }
  func.func @transform_3(%arg0: i32) -> (i32, i32, i32) {
    %c0_i32 = arith.constant 0 : i32
    %c0_i32_0 = arith.constant 0 : i32
    %c0_i32_1 = arith.constant 0 : i32
    return %arg0, %c0_i32, %c0_i32_0 : i32, i32, i32
  }
  func.func @transform_4(%arg0: i32) -> (i32, i32) {
    %c0_i32 = arith.constant 0 : i32
    %c0_i32_0 = arith.constant 0 : i32
    %c0_i32_1 = arith.constant 0 : i32
    return %c0_i32, %c0_i32_0 : i32, i32
  }
  func.func @transform_5(%arg0: i32) -> (i32, i32) {
    %c0_i32 = arith.constant 0 : i32
    %c0_i32_0 = arith.constant 0 : i32
    %c0_i32_1 = arith.constant 0 : i32
    return %c0_i32, %c0_i32_0 : i32, i32
  }
  func.func @transform_6(%arg0: i32) -> (i32, i32, i32) {
    %c0_i32 = arith.constant 0 : i32
    %c0_i32_0 = arith.constant 0 : i32
    %c0_i32_1 = arith.constant 0 : i32
    return %arg0, %c0_i32, %c0_i32_0 : i32, i32, i32
  }
}

module attributes {stable_mosaic.version = 11 : i64} {
  func.func @_fc_tail_kernel(%arg0: i32, %arg1: memref<2x400xf32, #tpu.memory_space<vmem>>, %arg2: memref<400x120xf32, #tpu.memory_space<vmem>>, %arg3: memref<1x120xf32, #tpu.memory_space<vmem>>, %arg4: memref<120x84xf32, #tpu.memory_space<vmem>>, %arg5: memref<1x84xf32, #tpu.memory_space<vmem>>, %arg6: memref<84x10xf32, #tpu.memory_space<vmem>>, %arg7: memref<1x10xf32, #tpu.memory_space<vmem>>, %arg8: memref<2x10xf32, #tpu.memory_space<vmem>>) attributes {dimension_semantics = [#tpu.dimension_semantics<arbitrary>], iteration_bounds = array<i64: 1>, scalar_prefetch = 0 : i64, scratch_operands = 0 : i64, tpu.core_type = #tpu.core_type<tc>, window_params = [{pipeline_mode = #tpu.pipeline_mode<synchronous>, transform_indices = @transform_0, window_bounds = array<i64: 2, 400>}, {pipeline_mode = #tpu.pipeline_mode<synchronous>, transform_indices = @transform_1, window_bounds = array<i64: 400, 120>}, {pipeline_mode = #tpu.pipeline_mode<synchronous>, transform_indices = @transform_2, window_bounds = array<i64: 1, 120>}, {pipeline_mode = #tpu.pipeline_mode<synchronous>, transform_indices = @transform_3, window_bounds = array<i64: 120, 84>}, {pipeline_mode = #tpu.pipeline_mode<synchronous>, transform_indices = @transform_4, window_bounds = array<i64: 1, 84>}, {pipeline_mode = #tpu.pipeline_mode<synchronous>, transform_indices = @transform_5, window_bounds = array<i64: 84, 10>}, {pipeline_mode = #tpu.pipeline_mode<synchronous>, transform_indices = @transform_6, window_bounds = array<i64: 1, 10>}, {pipeline_mode = #tpu.pipeline_mode<synchronous>, transform_indices = @transform_7, window_bounds = array<i64: 2, 10>}]} {
    %c0 = arith.constant 0 : index
    %c0_0 = arith.constant 0 : index
    %0 = vector.load %arg1[%c0, %c0_0] : memref<2x400xf32, #tpu.memory_space<vmem>>, vector<2x400xf32>
    %c0_1 = arith.constant 0 : index
    %c0_2 = arith.constant 0 : index
    %1 = vector.load %arg2[%c0_1, %c0_2] : memref<400x120xf32, #tpu.memory_space<vmem>>, vector<400x120xf32>
    %cst = arith.constant dense<0.000000e+00> : vector<2x120xf32>
    %2 = tpu.matmul %0, %1, %cst {dimension_numbers = #tpu.dot_dimension_numbers<[1], [0], [0], [1], [0, 0, 1, 1], [], []>} : vector<2x400xf32>, vector<400x120xf32>, vector<2x120xf32> -> vector<2x120xf32>
    %c0_3 = arith.constant 0 : index
    %c0_4 = arith.constant 0 : index
    %3 = vector.load %arg3[%c0_3, %c0_4] : memref<1x120xf32, #tpu.memory_space<vmem>>, vector<1x120xf32>
    %4 = vector.broadcast %3 : vector<1x120xf32> to vector<2x120xf32>
    %5 = arith.addf %2, %4 : vector<2x120xf32>
    %cst_5 = arith.constant 0.000000e+00 : f32
    %6 = vector.broadcast %cst_5 : f32 to vector<2x120xf32>
    %7 = arith.maximumf %5, %6 : vector<2x120xf32>
    %c0_6 = arith.constant 0 : index
    %c0_7 = arith.constant 0 : index
    %8 = vector.load %arg4[%c0_6, %c0_7] : memref<120x84xf32, #tpu.memory_space<vmem>>, vector<120x84xf32>
    %cst_8 = arith.constant dense<0.000000e+00> : vector<2x84xf32>
    %9 = tpu.matmul %7, %8, %cst_8 {dimension_numbers = #tpu.dot_dimension_numbers<[1], [0], [0], [1], [0, 0, 1, 1], [], []>} : vector<2x120xf32>, vector<120x84xf32>, vector<2x84xf32> -> vector<2x84xf32>
    %c0_9 = arith.constant 0 : index
    %c0_10 = arith.constant 0 : index
    %10 = vector.load %arg5[%c0_9, %c0_10] : memref<1x84xf32, #tpu.memory_space<vmem>>, vector<1x84xf32>
    %11 = vector.broadcast %10 : vector<1x84xf32> to vector<2x84xf32>
    %12 = arith.addf %9, %11 : vector<2x84xf32>
    %cst_11 = arith.constant 0.000000e+00 : f32
    %13 = vector.broadcast %cst_11 : f32 to vector<2x84xf32>
    %14 = arith.maximumf %12, %13 : vector<2x84xf32>
    %c0_12 = arith.constant 0 : index
    %c0_13 = arith.constant 0 : index
    %15 = vector.load %arg6[%c0_12, %c0_13] : memref<84x10xf32, #tpu.memory_space<vmem>>, vector<84x10xf32>
    %cst_14 = arith.constant dense<0.000000e+00> : vector<2x10xf32>
    %16 = tpu.matmul %14, %15, %cst_14 {dimension_numbers = #tpu.dot_dimension_numbers<[1], [0], [0], [1], [0, 0, 1, 1], [], []>} : vector<2x84xf32>, vector<84x10xf32>, vector<2x10xf32> -> vector<2x10xf32>
    %c0_15 = arith.constant 0 : index
    %c0_16 = arith.constant 0 : index
    %17 = vector.load %arg7[%c0_15, %c0_16] : memref<1x10xf32, #tpu.memory_space<vmem>>, vector<1x10xf32>
    %18 = vector.broadcast %17 : vector<1x10xf32> to vector<2x10xf32>
    %19 = arith.addf %16, %18 : vector<2x10xf32>
    %c0_17 = arith.constant 0 : index
    %c0_18 = arith.constant 0 : index
    %20 = vector.load %arg8[%c0_17, %c0_18] : memref<2x10xf32, #tpu.memory_space<vmem>>, vector<2x10xf32>
    tpu.vector_store %arg8[%c0_17, %c0_18], %19 {strides = array<i32>} : memref<2x10xf32, #tpu.memory_space<vmem>>, vector<2x10xf32>,
    return
  }
  func.func @transform_0(%arg0: i32) -> (i32, i32) {
    %c0_i32 = arith.constant 0 : i32
    %c0_i32_0 = arith.constant 0 : i32
    %c0_i32_1 = arith.constant 0 : i32
    return %c0_i32, %c0_i32_0 : i32, i32
  }
  func.func @transform_1(%arg0: i32) -> (i32, i32) {
    %c0_i32 = arith.constant 0 : i32
    %c0_i32_0 = arith.constant 0 : i32
    %c0_i32_1 = arith.constant 0 : i32
    return %c0_i32, %c0_i32_0 : i32, i32
  }
  func.func @transform_2(%arg0: i32) -> (i32, i32) {
    %c0_i32 = arith.constant 0 : i32
    %c0_i32_0 = arith.constant 0 : i32
    %c0_i32_1 = arith.constant 0 : i32
    return %c0_i32, %c0_i32_0 : i32, i32
  }
  func.func @transform_3(%arg0: i32) -> (i32, i32) {
    %c0_i32 = arith.constant 0 : i32
    %c0_i32_0 = arith.constant 0 : i32
    %c0_i32_1 = arith.constant 0 : i32
    return %c0_i32, %c0_i32_0 : i32, i32
  }
  func.func @transform_4(%arg0: i32) -> (i32, i32) {
    %c0_i32 = arith.constant 0 : i32
    %c0_i32_0 = arith.constant 0 : i32
    %c0_i32_1 = arith.constant 0 : i32
    return %c0_i32, %c0_i32_0 : i32, i32
  }
  func.func @transform_5(%arg0: i32) -> (i32, i32) {
    %c0_i32 = arith.constant 0 : i32
    %c0_i32_0 = arith.constant 0 : i32
    %c0_i32_1 = arith.constant 0 : i32
    return %c0_i32, %c0_i32_0 : i32, i32
  }
  func.func @transform_6(%arg0: i32) -> (i32, i32) {
    %c0_i32 = arith.constant 0 : i32
    %c0_i32_0 = arith.constant 0 : i32
    %c0_i32_1 = arith.constant 0 : i32
    return %c0_i32, %c0_i32_0 : i32, i32
  }
  func.func @transform_7(%arg0: i32) -> (i32, i32) {
    %c0_i32 = arith.constant 0 : i32
    %c0_i32_0 = arith.constant 0 : i32
    %c0_i32_1 = arith.constant 0 : i32
    return %c0_i32, %c0_i32_0 : i32, i32
  }
}

</mosaic_0001>

<llo_original>
// kernel: tile.13
$region0: #{tile.13}
  #allocation0 [shape = 's32[1]{0}', space=sflag, size = 0x4, scoped, tag = 'scoped memory for tile.13']
  %s0 = inlined_call_operand.vmem [shape: f32[6], index: 0, kind: input, shape index: {}]
  %s1 = inlined_call_operand.vmem [shape: f32[14,6], index: 1, kind: output, shape index: {}]
  // Predicated region
  $region2: #{tile.13} parent=0 // pred_check
    _
  $region3: #{tile.13} parent=0 // pred_check_branch
    %3 = sbr.rel (0) target = $region5
  $region4: #{tile.13} parent=0 // pred_region
    _
  $region5: #{tile.13} parent=0 // pred_fallthru
    _
  %v4 = vld [vmem:[%s0] ss:$0 sm:$0xff]
  %5 = vst [vmem:[%s1] sm:$0xff] %v4
  %s6 = scalar_lea.vmem %s1, 8
  %7 = vst [vmem:[%s6] sm:$0xff] %v4

// kernel: tile.14
$region0: #{tile.14}
  %s0 = inlined_call_operand.vmem [shape: f32[14,6], index: 0, kind: input, shape index: {}]
  %s1 = inlined_call_operand.vmem [shape: f32[1,84], index: 1, kind: output, shape index: {}]
  $region1: #{tile.14} parent=0
    #allocation0 [shape = 'u8[4096]{0}', space=vmem, size = 0x1000, scoped, tag = 'scoped mem for output reshape']
    %v2 = vld [vmem:[%s0] sm:$0x1]
    %vm3 = vcmask 48128
    %4 = vst.msk [vmem:[#allocation0] sm:$0x1] %vm3, %v2
    %s5 = scalar_lea.vmem %s0, 13
    %v6 = vld [vmem:[%s5] sm:$0x1]
    %7 = vrot.lane.b32.xlu0 %v6, 78
    %v8 = vpop.permute.xlu0 %7
    %vm9 = vcmask 687728
    %10 = vst.msk [vmem:[#allocation0] sm:$0x1] %vm9, %v8
    %s11 = scalar_lea.vmem %s0, 12
    %v12 = vld [vmem:[%s11] sm:$0x1]
    %13 = vrot.lane.b32.xlu0 %v12, 72
    %v14 = vpop.permute.xlu0 %13
    %vm15 = vcmask 638528
    %16 = vst.msk [vmem:[#allocation0] sm:$0x1] %vm15, %v14
    %s17 = scalar_lea.vmem %s0, 11
    %v18 = vld [vmem:[%s17] sm:$0x1]
    %19 = vrot.lane.b32.xlu0 %v18, 66
    %v20 = vpop.permute.xlu0 %19
    %vm21 = vcmask 589328
    %22 = vst.msk [vmem:[#allocation0] sm:$0x1] %vm21, %v20
    %s23 = scalar_lea.vmem %s0, 10
    %v24 = vld [vmem:[%s23] sm:$0x1]
    %25 = vrot.lane.b32.xlu0 %v24, 60
    %v26 = vpop.permute.xlu0 %25
    %vm27 = vcmask 540128
    %28 = vst.msk [vmem:[#allocation0] sm:$0x1] %vm27, %v26
    %s29 = scalar_lea.vmem %s0, 9
    %v30 = vld [vmem:[%s29] sm:$0x1]
    %31 = vrot.lane.b32.xlu0 %v30, 54
    %v32 = vpop.permute.xlu0 %31
    %vm33 = vcmask 490928
    %34 = vst.msk [vmem:[#allocation0] sm:$0x1] %vm33, %v32
    %s35 = scalar_lea.vmem %s0, 8
    %v36 = vld [vmem:[%s35] sm:$0x1]
    %37 = vrot.lane.b32.xlu0 %v36, 48
    %v38 = vpop.permute.xlu0 %37
    %vm39 = vcmask 441728
    %40 = vst.msk [vmem:[#allocation0] sm:$0x1] %vm39, %v38
    %s41 = scalar_lea.vmem %s0, 7
    %v42 = vld [vmem:[%s41] sm:$0x1]
    %43 = vrot.lane.b32.xlu0 %v42, 42
    %v44 = vpop.permute.xlu0 %43
    %vm45 = vcmask 392528
    %46 = vst.msk [vmem:[#allocation0] sm:$0x1] %vm45, %v44
    %s47 = scalar_lea.vmem %s0, 6
    %v48 = vld [vmem:[%s47] sm:$0x1]
    %49 = vrot.lane.b32.xlu0 %v48, 36
    %v50 = vpop.permute.xlu0 %49
    %vm51 = vcmask 343328
    %52 = vst.msk [vmem:[#allocation0] sm:$0x1] %vm51, %v50
    %s53 = scalar_lea.vmem %s0, 5
    %v54 = vld [vmem:[%s53] sm:$0x1]
    %55 = vrot.lane.b32.xlu0 %v54, 30
    %v56 = vpop.permute.xlu0 %55
    %vm57 = vcmask 294128
    %58 = vst.msk [vmem:[#allocation0] sm:$0x1] %vm57, %v56
    %s59 = scalar_lea.vmem %s0, 4
    %v60 = vld [vmem:[%s59] sm:$0x1]
    %61 = vrot.lane.b32.xlu0 %v60, 24
    %v62 = vpop.permute.xlu0 %61
    %vm63 = vcmask 244928
    %64 = vst.msk [vmem:[#allocation0] sm:$0x1] %vm63, %v62
    %s65 = scalar_lea.vmem %s0, 3
    %v66 = vld [vmem:[%s65] sm:$0x1]
    %67 = vrot.lane.b32.xlu0 %v66, 18
    %v68 = vpop.permute.xlu0 %67
    %vm69 = vcmask 195728
    %70 = vst.msk [vmem:[#allocation0] sm:$0x1] %vm69, %v68
    %s71 = scalar_lea.vmem %s0, 2
    %v72 = vld [vmem:[%s71] sm:$0x1]
    %73 = vrot.lane.b32.xlu0 %v72, 12
    %v74 = vpop.permute.xlu0 %73
    %vm75 = vcmask 146528
    %76 = vst.msk [vmem:[#allocation0] sm:$0x1] %vm75, %v74
    %s77 = scalar_lea.vmem %s0, 1
    %v78 = vld [vmem:[%s77] sm:$0x1]
    %79 = vrot.lane.b32.xlu0 %v78, 6
    %v80 = vpop.permute.xlu0 %79
    %vm81 = vcmask 97328
    %82 = vst.msk [vmem:[#allocation0] sm:$0x1] %vm81, %v80
    %s84 = sshllo.u32 0, 1
    %v86 = vld [vmem:[#allocation0] sm:%s84]
    %s87 = sshllo.u32 0, 1
    %88 = vst [vmem:[%s1] sm:%s87] %v86

// kernel: lenet_forward.3
$region0: #{lenet_forward.3}
  #allocation0 [shape = 'u32[]', space=smem, size = 0x4, offset = 0x4, fixed_abs, tag = 'smem constant byte address 0x4 - core index']
  #allocation1 [shape = 'u32[144,128]{1,0:T(1,128)}', space=vmem, size = 0x12000, scoped, tag = 'internal scratch']
  %s0 = inlined_call_operand.vmem [shape: f32[2,16,48], index: 0, kind: input, shape index: {}]
  %s1 = inlined_call_operand.vmem [shape: f32[2,16,48], index: 1, kind: input, shape index: {}]
  %s2 = inlined_call_operand.vmem [shape: f32[2,16,48], index: 2, kind: input, shape index: {}]
  %s3 = inlined_call_operand.vmem [shape: f32[2,16,48], index: 3, kind: input, shape index: {}]
  %s4 = inlined_call_operand.vmem [shape: f32[1050,84], index: 4, kind: input, shape index: {}]
  %s5 = inlined_call_operand.vmem [shape: f32[1,84], index: 5, kind: input, shape index: {}]
  %s6 = inlined_call_operand.vmem [shape: f32[2,14,84], index: 6, kind: output, shape index: {}]
  %s7 = sld [smem:[#allocation0]]
  $region57: #{lenet_forward.3} parent=0
    _
  %s9 = ssub.s32 1, %s7
  %s10 = scalar_select 0, %s9, %s7
  loop: start=0, step=1, limit=4
  $region2: #{lenet_forward.3} parent=0 // loop_pre_header
    _
  $region3: #{lenet_forward.3} parent=0 // loop_header
    %s12 = sphi 0, %s16
    %p13 = scmp.ge.s32.totalorder %s12, 4
    %s22 = sphi 0, %s24
    %s25 = sphi 0, %s22
    %s26 = sphi 0, %s25
    %s42 = sphi 0, %s26
    %s48 = sphi 0, %s50
    %s51 = sphi 0, %s48
    %s52 = sphi 0, %s51
    %s68 = sphi 0, %s52
    %s74 = sphi 0, %s76
    %s77 = sphi 0, %s74
    %s78 = sphi 0, %s77
    %s94 = sphi 0, %s78
    %s100 = sphi 0, %s102
    %s103 = sphi 0, %s100
    %s104 = sphi 0, %s103
    %s120 = sphi 0, %s104
    %s124 = sphi 0, %s124
    %s126 = sphi 0, %s124
    %s127 = sphi 0, %s126
    %s141 = sphi 0, %s127
    %s145 = sphi 0, %s145
    %s147 = sphi 0, %s145
    %s148 = sphi 0, %s147
    %s162 = sphi 0, %s148
    %s168 = sphi 0, %s170
    %s171 = sphi 0, %s168
    %s172 = sphi 0, %s171
    %s188 = sphi 0, %s172
  $region4: #{lenet_forward.3} parent=0 // loop_header_branch
    %15 = sbr.rel (%p13) target = $region8
  $region5: #{lenet_forward.3} parent=0 // loop_body
    %s17 = ssub.s32 %s12, 1
    %s18 = ssub.s32 %s12, 2
    %s19 = sadd.s32 %s12, 1
    %s20 = ssub.s32 %s12, %s19
    %p21 = scmp.eq.s32.totalorder %s20, 0
    %s23 = sadd.s32 %s22, 1
    %s24 = scalar_select %p21, %s22, %s23
    %p27 = pneg %p21
    %p28 = scmp.eq.s32.totalorder %s12, 1
    %p29 = por %p27, %p28
    %p30 = scmp.ne.s32.totalorder %s22, %s25
    %p31 = scmp.eq.s32.totalorder %s12, 0
    %p32 = por %p30, %p31
    %p33 = scmp.ne.s32.totalorder %s22, %s25
    %p34 = scmp.eq.s32.totalorder %s17, 1
    %p35 = por %p33, %p34
    %p36 = scmp.ne.s32.totalorder %s25, %s26
    %p37 = scmp.eq.s32.totalorder %s17, 0
    %p38 = por %p36, %p37
    %p39 = scmp.ne.s32.totalorder %s25, %s26
    %p40 = scmp.eq.s32.totalorder %s18, 1
    %p41 = por %p39, %p40
    %p43 = scmp.ne.s32.totalorder %s26, %s42
    %p44 = scmp.eq.s32.totalorder %s18, 0
    %p45 = por %p43, %p44
    %s46 = ssub.s32 %s12, %s19
    %p47 = scmp.eq.s32.totalorder %s46, 0
    %s49 = sadd.s32 %s48, 1
    %s50 = scalar_select %p47, %s48, %s49
    %p53 = pneg %p47
    %p54 = scmp.eq.s32.totalorder %s12, 1
    %p55 = por %p53, %p54
    %p56 = scmp.ne.s32.totalorder %s48, %s51
    %p57 = scmp.eq.s32.totalorder %s12, 0
    %p58 = por %p56, %p57
    %p59 = scmp.ne.s32.totalorder %s48, %s51
    %p60 = scmp.eq.s32.totalorder %s17, 1
    %p61 = por %p59, %p60
    %p62 = scmp.ne.s32.totalorder %s51, %s52
    %p63 = scmp.eq.s32.totalorder %s17, 0
    %p64 = por %p62, %p63
    %p65 = scmp.ne.s32.totalorder %s51, %s52
    %p66 = scmp.eq.s32.totalorder %s18, 1
    %p67 = por %p65, %p66
    %p69 = scmp.ne.s32.totalorder %s52, %s68
    %p70 = scmp.eq.s32.totalorder %s18, 0
    %p71 = por %p69, %p70
    %s72 = ssub.s32 %s12, %s19
    %p73 = scmp.eq.s32.totalorder %s72, 0
    %s75 = sadd.s32 %s74, 1
    %s76 = scalar_select %p73, %s74, %s75
    %p79 = pneg %p73
    %p80 = scmp.eq.s32.totalorder %s12, 1
    %p81 = por %p79, %p80
    %p82 = scmp.ne.s32.totalorder %s74, %s77
    %p83 = scmp.eq.s32.totalorder %s12, 0
    %p84 = por %p82, %p83
    %p85 = scmp.ne.s32.totalorder %s74, %s77
    %p86 = scmp.eq.s32.totalorder %s17, 1
    %p87 = por %p85, %p86
    %p88 = scmp.ne.s32.totalorder %s77, %s78
    %p89 = scmp.eq.s32.totalorder %s17, 0
    %p90 = por %p88, %p89
    %p91 = scmp.ne.s32.totalorder %s77, %s78
    %p92 = scmp.eq.s32.totalorder %s18, 1
    %p93 = por %p91, %p92
    %p95 = scmp.ne.s32.totalorder %s78, %s94
    %p96 = scmp.eq.s32.totalorder %s18, 0
    %p97 = por %p95, %p96
    %s98 = ssub.s32 %s12, %s19
    %p99 = scmp.eq.s32.totalorder %s98, 0
    %s101 = sadd.s32 %s100, 1
    %s102 = scalar_select %p99, %s100, %s101
    %p105 = pneg %p99
    %p106 = scmp.eq.s32.totalorder %s12, 1
    %p107 = por %p105, %p106
    %p108 = scmp.ne.s32.totalorder %s100, %s103
    %p109 = scmp.eq.s32.totalorder %s12, 0
    %p110 = por %p108, %p109
    %p111 = scmp.ne.s32.totalorder %s100, %s103
    %p112 = scmp.eq.s32.totalorder %s17, 1
    %p113 = por %p111, %p112
    %p114 = scmp.ne.s32.totalorder %s103, %s104
    %p115 = scmp.eq.s32.totalorder %s17, 0
    %p116 = por %p114, %p115
    %p117 = scmp.ne.s32.totalorder %s103, %s104
    %p118 = scmp.eq.s32.totalorder %s18, 1
    %p119 = por %p117, %p118
    %p121 = scmp.ne.s32.totalorder %s104, %s120
    %p122 = scmp.eq.s32.totalorder %s18, 0
    %p123 = por %p121, %p122
    %s125 = sadd.s32 %s124, 1
    %p128 = scmp.eq.s32.totalorder %s12, 1
    %p129 = scmp.ne.s32.totalorder %s124, %s126
    %p130 = scmp.eq.s32.totalorder %s12, 0
    %p131 = por %p129, %p130
    %p132 = scmp.ne.s32.totalorder %s124, %s126
    %p133 = scmp.eq.s32.totalorder %s17, 1
    %p134 = por %p132, %p133
    %p135 = scmp.ne.s32.totalorder %s126, %s127
    %p136 = scmp.eq.s32.totalorder %s17, 0
    %p137 = por %p135, %p136
    %p138 = scmp.ne.s32.totalorder %s126, %s127
    %p139 = scmp.eq.s32.totalorder %s18, 1
    %p140 = por %p138, %p139
    %p142 = scmp.ne.s32.totalorder %s127, %s141
    %p143 = scmp.eq.s32.totalorder %s18, 0
    %p144 = por %p142, %p143
    %s146 = sadd.s32 %s145, 1
    %p149 = scmp.eq.s32.totalorder %s12, 1
    %p150 = scmp.ne.s32.totalorder %s145, %s147
    %p151 = scmp.eq.s32.totalorder %s12, 0
    %p152 = por %p150, %p151
    %p153 = scmp.ne.s32.totalorder %s145, %s147
    %p154 = scmp.eq.s32.totalorder %s17, 1
    %p155 = por %p153, %p154
    %p156 = scmp.ne.s32.totalorder %s147, %s148
    %p157 = scmp.eq.s32.totalorder %s17, 0
    %p158 = por %p156, %p157
    %p159 = scmp.ne.s32.totalorder %s147, %s148
    %p160 = scmp.eq.s32.totalorder %s18, 1
    %p161 = por %p159, %p160
    %p163 = scmp.ne.s32.totalorder %s148, %s162
    %p164 = scmp.eq.s32.totalorder %s18, 0
    %p165 = por %p163, %p164
    %s166 = ssub.s32 %s12, %s19
    %p167 = scmp.eq.s32.totalorder %s166, 0
    %s169 = sadd.s32 %s168, 1
    %s170 = scalar_select %p167, %s168, %s169
    %p173 = pneg %p167
    %p174 = scmp.eq.s32.totalorder %s12, 1
    %p175 = por %p173, %p174
    %p176 = scmp.ne.s32.totalorder %s168, %s171
    %p177 = scmp.eq.s32.totalorder %s12, 0
    %p178 = por %p176, %p177
    %p179 = scmp.ne.s32.totalorder %s168, %s171
    %p180 = scmp.eq.s32.totalorder %s17, 1
    %p181 = por %p179, %p180
    %p182 = scmp.ne.s32.totalorder %s171, %s172
    %p183 = scmp.eq.s32.totalorder %s17, 0
    %p184 = por %p182, %p183
    %p185 = scmp.ne.s32.totalorder %s171, %s172
    %p186 = scmp.eq.s32.totalorder %s18, 1
    %p187 = por %p185, %p186
    %p189 = scmp.ne.s32.totalorder %s172, %s188
    %p190 = scmp.eq.s32.totalorder %s18, 0
    %p191 = por %p189, %p190
    %p192 = scmp.le.s32.totalorder 1, %s12
    %p193 = scmp.lt.s32.totalorder %s12, 3
    %p194 = pnand %p192, %p193
    %p195 = pneg %p194
    // Predicated region
    $region9: #{lenet_forward.3} parent=5 // pred_check
      _
    $region10: #{lenet_forward.3} parent=5 // pred_check_branch
      %197 = sbr.rel (%p194) target = $region12
    $region11: #{lenet_forward.3} parent=5 // pred_region
      %s198 = ssub.s32 %s12, 1
      // Predicated region
      $region13: #{lenet_forward.3} parent=11 // pred_check
        %p199 = pneg %p137
      $region14: #{lenet_forward.3} parent=11 // pred_check_branch
        %201 = sbr.rel (%p199) target = $region16
      $region15: #{lenet_forward.3} parent=11 // pred_region
        _
      $region16: #{lenet_forward.3} parent=11 // pred_fallthru
        _
      // Predicated region
      $region17: #{lenet_forward.3} parent=11 // pred_check
        %p202 = pneg %p158
      $region18: #{lenet_forward.3} parent=11 // pred_check_branch
        %204 = sbr.rel (%p202) target = $region20
      $region19: #{lenet_forward.3} parent=11 // pred_region
        _
      $region20: #{lenet_forward.3} parent=11 // pred_fallthru
        _
    $region12: #{lenet_forward.3} parent=5 // pred_fallthru
      _
    %p205 = scmp.lt.s32.totalorder %s12, 2
    // Predicated region
    $region21: #{lenet_forward.3} parent=5 // pred_check
      %p206 = pneg %p205
    $region22: #{lenet_forward.3} parent=5 // pred_check_branch
      %208 = sbr.rel (%p206) target = $region24
    $region23: #{lenet_forward.3} parent=5 // pred_region
      // Predicated region
      $region25: #{lenet_forward.3} parent=23 // pred_check
        %p209 = pneg %p32
      $region26: #{lenet_forward.3} parent=23 // pred_check_branch
        %211 = sbr.rel (%p209) target = $region28
      $region27: #{lenet_forward.3} parent=23 // pred_region
        %p212 = scmp.lt.s32.totalorder %s12, 1
        %s213 = scalar_select %p212, %s12, 1
        %s214 = smul.addr %s213, 2
        %s215 = smul.addr %s214, 8
        %s216 = scalar_lea.vmem %s0, %s215
      $region28: #{lenet_forward.3} parent=23 // pred_fallthru
        _
      // Predicated region
      $region29: #{lenet_forward.3} parent=23 // pred_check
        %p217 = pneg %p58
      $region30: #{lenet_forward.3} parent=23 // pred_check_branch
        %219 = sbr.rel (%p217) target = $region32
      $region31: #{lenet_forward.3} parent=23 // pred_region
        %p220 = scmp.lt.s32.totalorder %s12, 1
        %s221 = scalar_select %p220, %s12, 1
        %s222 = smul.addr %s221, 2
        %s223 = smul.addr %s222, 8
        %s224 = scalar_lea.vmem %s1, %s223
      $region32: #{lenet_forward.3} parent=23 // pred_fallthru
        _
      // Predicated region
      $region33: #{lenet_forward.3} parent=23 // pred_check
        %p225 = pneg %p84
      $region34: #{lenet_forward.3} parent=23 // pred_check_branch
        %227 = sbr.rel (%p225) target = $region36
      $region35: #{lenet_forward.3} parent=23 // pred_region
        %p228 = scmp.lt.s32.totalorder %s12, 1
        %s229 = scalar_select %p228, %s12, 1
        %s230 = smul.addr %s229, 2
        %s231 = smul.addr %s230, 8
        %s232 = scalar_lea.vmem %s2, %s231
      $region36: #{lenet_forward.3} parent=23 // pred_fallthru
        _
      // Predicated region
      $region37: #{lenet_forward.3} parent=23 // pred_check
        %p233 = pneg %p110
      $region38: #{lenet_forward.3} parent=23 // pred_check_branch
        %235 = sbr.rel (%p233) target = $region40
      $region39: #{lenet_forward.3} parent=23 // pred_region
        %p236 = scmp.lt.s32.totalorder %s12, 1
        %s237 = scalar_select %p236, %s12, 1
        %s238 = smul.addr %s237, 2
        %s239 = smul.addr %s238, 8
        %s240 = scalar_lea.vmem %s3, %s239
      $region40: #{lenet_forward.3} parent=23 // pred_fallthru
        _
    $region24: #{lenet_forward.3} parent=5 // pred_fallthru
      _
    %p241 = scmp.le.s32.totalorder 1, %s12
    %p242 = scmp.lt.s32.totalorder %s12, 3
    %p243 = pnand %p241, %p242
    %p244 = pneg %p243
    // Predicated region
    $region41: #{lenet_forward.3} parent=5 // pred_check
      _
    $region42: #{lenet_forward.3} parent=5 // pred_check_branch
      %246 = sbr.rel (%p243) target = $region44
    $region43: #{lenet_forward.3} parent=5 // pred_region
      %s247 = ssub.s32 %s12, 1
      %p248 = scmp.lt.s32.totalorder %s17, 1
      %s249 = scalar_select %p248, %s17, 1
      %s250 = smul.addr %s249, 2
      %s251 = smul.addr %s250, 8
      %s252 = scalar_lea.vmem %s0, %s251
      %p253 = pneg %p38
      %p254 = pneg %p35
      %p255 = scmp.lt.s32.totalorder %s17, 1
      %s256 = scalar_select %p255, %s17, 1
      %s257 = smul.addr %s256, 2
      %s258 = smul.addr %s257, 8
      %s259 = scalar_lea.vmem %s1, %s258
      %p260 = pneg %p64
      %p261 = pneg %p61
      %p262 = scmp.lt.s32.totalorder %s17, 1
      %s263 = scalar_select %p262, %s17, 1
      %s264 = smul.addr %s263, 2
      %s265 = smul.addr %s264, 8
      %s266 = scalar_lea.vmem %s2, %s265
      %p267 = pneg %p90
      %p268 = pneg %p87
      %p269 = scmp.lt.s32.totalorder %s17, 1
      %s270 = scalar_select %p269, %s17, 1
      %s271 = smul.addr %s270, 2
      %s272 = smul.addr %s271, 8
      %s273 = scalar_lea.vmem %s3, %s272
      %p274 = pneg %p116
      %p275 = pneg %p113
      %p276 = pneg %p137
      %p277 = pneg %p134
      %p278 = pneg %p158
      %p279 = pneg %p155
      %p280 = pneg %p184
      %p281 = pneg %p181
      %p282 = scmp.lt.s32.totalorder %s17, 1
      %s283 = scalar_select %p282, %s17, 1
      %s284 = smul.addr %s283, 2
      %s285 = smul.addr %s284, 8
      %s286 = scalar_lea.vmem %s6, %s285
      %p287 = scmp.lt.s32.totalorder %s17, 1
      %s288 = scalar_select %p287, %s17, 1
      %s289 = smul.addr %s288, 2
      %s290 = smul.addr %s289, 8
      %s291 = scalar_lea.vmem %s0, %s290
      %p292 = scmp.lt.s32.totalorder %s17, 1
      %s293 = scalar_select %p292, %s17, 1
      %s294 = smul.addr %s293, 2
      %s295 = smul.addr %s294, 8
      %s296 = scalar_lea.vmem %s1, %s295
      %p297 = scmp.lt.s32.totalorder %s17, 1
      %s298 = scalar_select %p297, %s17, 1
      %s299 = smul.addr %s298, 2
      %s300 = smul.addr %s299, 8
      %s301 = scalar_lea.vmem %s2, %s300
      %p302 = scmp.lt.s32.totalorder %s17, 1
      %s303 = scalar_select %p302, %s17, 1
      %s304 = smul.addr %s303, 2
      %s305 = smul.addr %s304, 8
      %s306 = scalar_lea.vmem %s3, %s305
      %p307 = scmp.lt.s32.totalorder %s17, 1
      %s308 = scalar_select %p307, %s17, 1
      %s309 = smul.addr %s308, 2
      %s310 = smul.addr %s309, 8
      %s311 = scalar_lea.vmem %s6, %s310
      %v312 = vld [vmem:[%s291] sm:$0xff]
      %v313 = vld [vmem:[%s291 + $0x8] sm:$0xff]
      %v314 = vld [vmem:[%s296] sm:$0xff]
      %v315 = vld [vmem:[%s296 + $0x8] sm:$0xff]
      %v316 = vld [vmem:[%s301] sm:$0xff]
      %v317 = vld [vmem:[%s301 + $0x8] sm:$0xff]
      %v318 = vld [vmem:[%s306] sm:$0xff]
      %v319 = vld [vmem:[%s306 + $0x8] sm:$0xff]
      %322 = vrot.lane.b32.xlu0 %v314, 42
      %v323 = vpop.permute.xlu0 %322
      %324 = vrot.lane.b32.xlu0 %v315, 42
      %v325 = vpop.permute.xlu0 %324
      %330 = vrot.lane.b32.xlu0 %v312, 81
      %v331 = vpop.permute.xlu0 %330
      %332 = vrot.lane.b32.xlu0 %v313, 81
      %v333 = vpop.permute.xlu0 %332
      %336 = vrot.lane.b32.xlu0 %v314, 123
      %v337 = vpop.permute.xlu0 %336
      %338 = vrot.lane.b32.xlu0 %v315, 123
      %v339 = vpop.permute.xlu0 %338
      %342 = vrot.lane.b32.xlu0 %v312, 34
      %v343 = vpop.permute.xlu0 %342
      %344 = vrot.lane.b32.xlu0 %v313, 34
      %v345 = vpop.permute.xlu0 %344
      %350 = vrot.lane.b32.xlu0 %v316, 82
      %v351 = vpop.permute.xlu0 %350
      %352 = vrot.lane.b32.xlu0 %v317, 82
      %v353 = vpop.permute.xlu0 %352
      %358 = vrot.lane.b32.xlu0 %v318, 124
      %v359 = vpop.permute.xlu0 %358
      %360 = vrot.lane.b32.xlu0 %v319, 124
      %v361 = vpop.permute.xlu0 %360
      %364 = vrot.lane.b32.xlu0 %v316, 35
      %v365 = vpop.permute.xlu0 %364
      %366 = vrot.lane.b32.xlu0 %v317, 35
      %v367 = vpop.permute.xlu0 %366
      %370 = vrot.lane.b32.xlu0 %v318, 77
      %v371 = vpop.permute.xlu0 %370
      %372 = vrot.lane.b32.xlu0 %v319, 77
      %v373 = vpop.permute.xlu0 %372
      %376 = vrot.lane.b32.xlu0 %v316, 116
      %v377 = vpop.permute.xlu0 %376
      %378 = vrot.lane.b32.xlu0 %v317, 116
      %v379 = vpop.permute.xlu0 %378
      %vm382 = vcmask 1046528
      %v383 = vrot.slane %v312, 1
      %v384 = vrot.slane %v313, 1
      %v385 = vsel %vm382, %v383, %v384
      %386 = vrot.lane.b32.xlu0 %v385, 36
      %v387 = vpop.permute.xlu0 %386
      %388 = vrot.lane.b32.xlu0 %v384, 36
      %v389 = vpop.permute.xlu0 %388
      %v392 = vrot.slane %v314, 1
      %v393 = vrot.slane %v315, 1
      %v394 = vsel %vm382, %v392, %v393
      %395 = vrot.lane.b32.xlu0 %v394, 78
      %v396 = vpop.permute.xlu0 %395
      %397 = vrot.lane.b32.xlu0 %v393, 78
      %v398 = vpop.permute.xlu0 %397
      %401 = vrot.lane.b32.xlu0 %v385, 117
      %v402 = vpop.permute.xlu0 %401
      %403 = vrot.lane.b32.xlu0 %v384, 117
      %v404 = vpop.permute.xlu0 %403
      %407 = vrot.lane.b32.xlu0 %v394, 31
      %v408 = vpop.permute.xlu0 %407
      %409 = vrot.lane.b32.xlu0 %v393, 31
      %v410 = vpop.permute.xlu0 %409
      %413 = vrot.lane.b32.xlu0 %v385, 70
      %v414 = vpop.permute.xlu0 %413
      %415 = vrot.lane.b32.xlu0 %v384, 70
      %v416 = vpop.permute.xlu0 %415
      %v419 = vrot.slane %v316, 1
      %v420 = vrot.slane %v317, 1
      %v421 = vsel %vm382, %v419, %v420
      %422 = vrot.lane.b32.xlu0 %v421, 118
      %v423 = vpop.permute.xlu0 %422
      %424 = vrot.lane.b32.xlu0 %v420, 118
      %v425 = vpop.permute.xlu0 %424
      %vm428 = vcmask 343040
      %v429 = vsel %vm428, %v312, %v323
      %v430 = vsel %vm428, %v313, %v325
      %vm431 = vcmask 687104
      %v432 = vsel %vm431, %v429, %v331
      %v433 = vsel %vm431, %v430, %v333
      %vm434 = vcmask 1031168
      %v435 = vsel %vm434, %v432, %v337
      %v436 = vsel %vm434, %v433, %v339
      %vm437 = vcmask 326656
      %v438 = vsel %vm437, %v337, %v343
      %v439 = vsel %vm437, %v339, %v345
      %vm440 = vcmask 670720
      %v441 = vsel %vm440, %v438, %v351
      %v442 = vsel %vm440, %v439, %v353
      %vm443 = vcmask 1014784
      %v444 = vsel %vm443, %v441, %v359
      %v445 = vsel %vm443, %v442, %v361
      %vm446 = vcmask 310272
      %v447 = vsel %vm446, %v359, %v365
      %v448 = vsel %vm446, %v361, %v367
      %vm449 = vcmask 654336
      %v450 = vsel %vm449, %v447, %v371
      %v451 = vsel %vm449, %v448, %v373
      %vm452 = vcmask 998400
      %v453 = vsel %vm452, %v450, %v377
      %v454 = vsel %vm452, %v451, %v379
      %vm455 = vcmask 293888
      %v456 = vsel %vm455, %v377, %v387
      %v457 = vsel %vm455, %v379, %v389
      %vm458 = vcmask 637952
      %v459 = vsel %vm458, %v456, %v396
      %v460 = vsel %vm458, %v457, %v398
      %vm461 = vcmask 982016
      %v462 = vsel %vm461, %v459, %v402
      %v463 = vsel %vm461, %v460, %v404
      %vm464 = vcmask 277504
      %v465 = vsel %vm464, %v402, %v408
      %v466 = vsel %vm464, %v404, %v410
      %vm467 = vcmask 621568
      %v468 = vsel %vm467, %v465, %v414
      %v469 = vsel %vm467, %v466, %v416
      %vm470 = vcmask 965632
      %v471 = vsel %vm470, %v468, %v423
      %v472 = vsel %vm470, %v469, %v425
      %473 = vrot.lane.b32.xlu0 %v316, 39
      %v474 = vpop.permute.xlu0 %473
      %475 = vrot.lane.b32.xlu0 %v317, 39
      %v476 = vpop.permute.xlu0 %475
      %479 = vrot.lane.b32.xlu0 %v318, 81
      %v480 = vpop.permute.xlu0 %479
      %481 = vrot.lane.b32.xlu0 %v319, 81
      %v482 = vpop.permute.xlu0 %481
      %485 = vrot.lane.b32.xlu0 %v316, 120
      %v486 = vpop.permute.xlu0 %485
      %487 = vrot.lane.b32.xlu0 %v317, 120
      %v488 = vpop.permute.xlu0 %487
      %491 = vrot.lane.b32.xlu0 %v385, 40
      %v492 = vpop.permute.xlu0 %491
      %493 = vrot.lane.b32.xlu0 %v384, 40
      %v494 = vpop.permute.xlu0 %493
      %497 = vrot.lane.b32.xlu0 %v394, 82
      %v498 = vpop.permute.xlu0 %497
      %499 = vrot.lane.b32.xlu0 %v393, 82
      %v500 = vpop.permute.xlu0 %499
      %503 = vrot.lane.b32.xlu0 %v385, 121
      %v504 = vpop.permute.xlu0 %503
      %505 = vrot.lane.b32.xlu0 %v384, 121
      %v506 = vpop.permute.xlu0 %505
      %509 = vrot.lane.b32.xlu0 %v394, 35
      %v510 = vpop.permute.xlu0 %509
      %511 = vrot.lane.b32.xlu0 %v393, 35
      %v512 = vpop.permute.xlu0 %511
      %515 = vrot.lane.b32.xlu0 %v385, 74
      %v516 = vpop.permute.xlu0 %515
      %517 = vrot.lane.b32.xlu0 %v384, 74
      %v518 = vpop.permute.xlu0 %517
      %v521 = vsel %vm428, %v318, %v474
      %v522 = vsel %vm428, %v319, %v476
      %v523 = vsel %vm431, %v521, %v480
      %v524 = vsel %vm431, %v522, %v482
      %v525 = vsel %vm434, %v523, %v486
      %v526 = vsel %vm434, %v524, %v488
      %v527 = vsel %vm437, %v486, %v492
      %v528 = vsel %vm437, %v488, %v494
      %v529 = vsel %vm440, %v527, %v498
      %v530 = vsel %vm440, %v528, %v500
      %v531 = vsel %vm443, %v529, %v504
      %v532 = vsel %vm443, %v530, %v506
      %v533 = vsel %vm446, %v504, %v510
      %v534 = vsel %vm446, %v506, %v512
      %v535 = vsel %vm449, %v533, %v516
      %v536 = vsel %vm449, %v534, %v518
      %v543 = vrot.slane %v525, 1
      %v544 = vrot.slane %v526, 1
      %v545 = vsel %vm382, %v543, %v544
      %v546 = vrot.slane %v531, 1
      %v547 = vrot.slane %v532, 1
      %v548 = vsel %vm382, %v546, %v547
      %v549 = vrot.slane %v535, 1
      %v550 = vrot.slane %v536, 1
      %v551 = vsel %vm382, %v549, %v550
      %552 = vrot.lane.b32.xlu0 %v545, 32
      %v553 = vpop.permute.xlu0 %552
      %554 = vrot.lane.b32.xlu0 %v548, 32
      %v555 = vpop.permute.xlu0 %554
      %556 = vrot.lane.b32.xlu0 %v551, 32
      %v557 = vpop.permute.xlu0 %556
      %558 = vrot.lane.b32.xlu0 %v544, 32
      %v559 = vpop.permute.xlu0 %558
      %560 = vrot.lane.b32.xlu0 %v547, 32
      %v561 = vpop.permute.xlu0 %560
      %562 = vrot.lane.b32.xlu0 %v550, 32
      %v563 = vpop.permute.xlu0 %562
      %vm564 = vcmask 261120
      %v565 = vsel %vm564, %v553, %v555
      %v566 = vsel %vm564, %v555, %v557
      %v567 = vsel %vm564, %v559, %v561
      %v568 = vsel %vm564, %v561, %v563
      %v575 = vsel %vm564, %v423, %v553
      %v576 = vsel %vm564, %v425, %v559
      %v577 = vld [vmem:[%s4] sm:$0xff]
      %v578 = vld [vmem:[%s4 + $0x8] sm:$0xff]
      %v579 = vld [vmem:[%s4 + $0x10] sm:$0xff]
      %v580 = vld [vmem:[%s4 + $0x18] sm:$0xff]
      %v581 = vld [vmem:[%s4 + $0x20] sm:$0xff]
      %v582 = vld [vmem:[%s4 + $0x28] sm:$0xff]
      %v583 = vld [vmem:[%s4 + $0x30] sm:$0xff]
      %v584 = vld [vmem:[%s4 + $0x38] sm:$0xff]
      %v585 = vld [vmem:[%s4 + $0x40] sm:$0xff]
      %v586 = vld [vmem:[%s4 + $0x48] sm:$0xff]
      %v587 = vld [vmem:[%s4 + $0x50] sm:$0xff]
      %v588 = vld [vmem:[%s4 + $0x58] sm:$0xff]
      %v589 = vld [vmem:[%s4 + $0x60] sm:$0xff]
      %v590 = vld [vmem:[%s4 + $0x68] sm:$0xff]
      %v591 = vld [vmem:[%s4 + $0x70] sm:$0xff]
      %v592 = vld [vmem:[%s4 + $0x78] sm:$0xff]
      %v593 = vld [vmem:[%s4 + $0x80] sm:$0xff]
      %v594 = vld [vmem:[%s4 + $0x88] sm:$0xff]
      %v595 = vld [vmem:[%s4 + $0x90] sm:$0xff]
      %v596 = vld [vmem:[%s4 + $0x98] sm:$0xff]
      %v597 = vld [vmem:[%s4 + $0xa0] sm:$0xff]
      %v598 = vld [vmem:[%s4 + $0xa8] sm:$0xff]
      %v599 = vld [vmem:[%s4 + $0xb0] sm:$0xff]
      %v600 = vld [vmem:[%s4 + $0xb8] sm:$0xff]
      %v601 = vld [vmem:[%s4 + $0xc0] sm:$0xff]
      %v602 = vld [vmem:[%s4 + $0xc8] sm:$0xff]
      %v603 = vld [vmem:[%s4 + $0xd0] sm:$0xff]
      %v604 = vld [vmem:[%s4 + $0xd8] sm:$0xff]
      %v605 = vld [vmem:[%s4 + $0xe0] sm:$0xff]
      %v606 = vld [vmem:[%s4 + $0xe8] sm:$0xff]
      %v607 = vld [vmem:[%s4 + $0xf0] sm:$0xff]
      %v608 = vld [vmem:[%s4 + $0xf8] sm:$0xff]
      %v609 = vld [vmem:[%s4 + $0x100] sm:$0xff]
      %v610 = vld [vmem:[%s4 + $0x108] sm:$0xff]
      %v611 = vld [vmem:[%s4 + $0x110] sm:$0xff]
      %v612 = vld [vmem:[%s4 + $0x118] sm:$0xff]
      %v613 = vld [vmem:[%s4 + $0x120] sm:$0xff]
      %v614 = vld [vmem:[%s4 + $0x128] sm:$0xff]
      %v615 = vld [vmem:[%s4 + $0x130] sm:$0xff]
      %v616 = vld [vmem:[%s4 + $0x138] sm:$0xff]
      %v617 = vld [vmem:[%s4 + $0x140] sm:$0xff]
      %v618 = vld [vmem:[%s4 + $0x148] sm:$0xff]
      %v619 = vld [vmem:[%s4 + $0x150] sm:$0xff]
      %v620 = vld [vmem:[%s4 + $0x158] sm:$0xff]
      %v621 = vld [vmem:[%s4 + $0x160] sm:$0xff]
      %v622 = vld [vmem:[%s4 + $0x168] sm:$0xff]
      %v623 = vld [vmem:[%s4 + $0x170] sm:$0xff]
      %v624 = vld [vmem:[%s4 + $0x178] sm:$0xff]
      %v625 = vld [vmem:[%s4 + $0x180] sm:$0xff]
      %v626 = vld [vmem:[%s4 + $0x188] sm:$0xff]
      %v627 = vld [vmem:[%s4 + $0x190] sm:$0xff]
      %v628 = vld [vmem:[%s4 + $0x198] sm:$0xff]
      %v629 = vld [vmem:[%s4 + $0x1a0] sm:$0xff]
      %v630 = vld [vmem:[%s4 + $0x1a8] sm:$0xff]
      %v631 = vld [vmem:[%s4 + $0x1b0] sm:$0xff]
      %v632 = vld [vmem:[%s4 + $0x1b8] sm:$0xff]
      %v633 = vld [vmem:[%s4 + $0x1c0] sm:$0xff]
      %v634 = vld [vmem:[%s4 + $0x1c8] sm:$0xff]
      %v635 = vld [vmem:[%s4 + $0x1d0] sm:$0xff]
      %v636 = vld [vmem:[%s4 + $0x1d8] sm:$0xff]
      %v637 = vld [vmem:[%s4 + $0x1e0] sm:$0xff]
      %v638 = vld [vmem:[%s4 + $0x1e8] sm:$0xff]
      %v639 = vld [vmem:[%s4 + $0x1f0] sm:$0xff]
      %v640 = vld [vmem:[%s4 + $0x1f8] sm:$0xff]
      %v641 = vld [vmem:[%s4 + $0x200] sm:$0xff]
      %v642 = vld [vmem:[%s4 + $0x208] sm:$0xff]
      %v643 = vld [vmem:[%s4 + $0x210] sm:$0xff]
      %v644 = vld [vmem:[%s4 + $0x218] sm:$0xff]
      %v645 = vld [vmem:[%s4 + $0x220] sm:$0xff]
      %v646 = vld [vmem:[%s4 + $0x228] sm:$0xff]
      %v647 = vld [vmem:[%s4 + $0x230] sm:$0xff]
      %v648 = vld [vmem:[%s4 + $0x238] sm:$0xff]
      %v649 = vld [vmem:[%s4 + $0x240] sm:$0xff]
      %v650 = vld [vmem:[%s4 + $0x248] sm:$0xff]
      %v651 = vld [vmem:[%s4 + $0x250] sm:$0xff]
      %v652 = vld [vmem:[%s4 + $0x258] sm:$0xff]
      %v653 = vld [vmem:[%s4 + $0x260] sm:$0xff]
      %v654 = vld [vmem:[%s4 + $0x268] sm:$0xff]
      %v655 = vld [vmem:[%s4 + $0x270] sm:$0xff]
      %v656 = vld [vmem:[%s4 + $0x278] sm:$0xff]
      %v657 = vld [vmem:[%s4 + $0x280] sm:$0xff]
      %v658 = vld [vmem:[%s4 + $0x288] sm:$0xff]
      %v659 = vld [vmem:[%s4 + $0x290] sm:$0xff]
      %v660 = vld [vmem:[%s4 + $0x298] sm:$0xff]
      %v661 = vld [vmem:[%s4 + $0x2a0] sm:$0xff]
      %v662 = vld [vmem:[%s4 + $0x2a8] sm:$0xff]
      %v663 = vld [vmem:[%s4 + $0x2b0] sm:$0xff]
      %v664 = vld [vmem:[%s4 + $0x2b8] sm:$0xff]
      %v665 = vld [vmem:[%s4 + $0x2c0] sm:$0xff]
      %v666 = vld [vmem:[%s4 + $0x2c8] sm:$0xff]
      %v667 = vld [vmem:[%s4 + $0x2d0] sm:$0xff]
      %v668 = vld [vmem:[%s4 + $0x2d8] sm:$0xff]
      %v669 = vld [vmem:[%s4 + $0x2e0] sm:$0xff]
      %v670 = vld [vmem:[%s4 + $0x2e8] sm:$0xff]
      %v671 = vld [vmem:[%s4 + $0x2f0] sm:$0xff]
      %v672 = vld [vmem:[%s4 + $0x2f8] sm:$0xff]
      %v673 = vld [vmem:[%s4 + $0x300] sm:$0xff]
      %v674 = vld [vmem:[%s4 + $0x308] sm:$0xff]
      %v675 = vld [vmem:[%s4 + $0x310] sm:$0xff]
      %v676 = vld [vmem:[%s4 + $0x318] sm:$0xff]
      %v677 = vld [vmem:[%s4 + $0x320] sm:$0xff]
      %v678 = vld [vmem:[%s4 + $0x328] sm:$0xff]
      %v679 = vld [vmem:[%s4 + $0x330] sm:$0xff]
      %v680 = vld [vmem:[%s4 + $0x338] sm:$0xff]
      %v681 = vld [vmem:[%s4 + $0x340] sm:$0xff]
      %v682 = vld [vmem:[%s4 + $0x348] sm:$0xff]
      %v683 = vld [vmem:[%s4 + $0x350] sm:$0xff]
      %v684 = vld [vmem:[%s4 + $0x358] sm:$0xff]
      %v685 = vld [vmem:[%s4 + $0x360] sm:$0xff]
      %v686 = vld [vmem:[%s4 + $0x368] sm:$0xff]
      %v687 = vld [vmem:[%s4 + $0x370] sm:$0xff]
      %v688 = vld [vmem:[%s4 + $0x378] sm:$0xff]
      %v689 = vld [vmem:[%s4 + $0x380] sm:$0xff]
      %v690 = vld [vmem:[%s4 + $0x388] sm:$0xff]
      %v691 = vld [vmem:[%s4 + $0x390] sm:$0xff]
      %v692 = vld [vmem:[%s4 + $0x398] sm:$0xff]
      %v693 = vld [vmem:[%s4 + $0x3a0] sm:$0xff]
      %v694 = vld [vmem:[%s4 + $0x3a8] sm:$0xff]
      %v695 = vld [vmem:[%s4 + $0x3b0] sm:$0xff]
      %v696 = vld [vmem:[%s4 + $0x3b8] sm:$0xff]
      %v697 = vld [vmem:[%s4 + $0x3c0] sm:$0xff]
      %v698 = vld [vmem:[%s4 + $0x3c8] sm:$0xff]
      %v699 = vld [vmem:[%s4 + $0x3d0] sm:$0xff]
      %v700 = vld [vmem:[%s4 + $0x3d8] sm:$0xff]
      %v701 = vld [vmem:[%s4 + $0x3e0] sm:$0xff]
      %v702 = vld [vmem:[%s4 + $0x3e8] sm:$0xff]
      %v703 = vld [vmem:[%s4 + $0x3f0] sm:$0xff]
      %v704 = vld [vmem:[%s4 + $0x3f8] sm:$0xff]
      %v705 = vld [vmem:[%s4 + $0x400] sm:$0xff]
      %v706 = vld [vmem:[%s4 + $0x408] sm:$0xff]
      %v707 = vld [vmem:[%s4 + $0x410] sm:$0xff]
      %v708 = vld [vmem:[%s4 + $0x418] sm:$0x3]
      %vm709 = vcmask 211968
      %v710 = vsel %vm709, %v557, 0
      %v712 = vsel %vm709, %v563, 0
      %vm714 = vcmask 1041408
      %v716 = vsel %vm714, %v708, 0
      %718 = vmatprep.subr.mxu0 0.0
      %719 = vmatpush1.msra.mxu0 %v577
      %720 = vmatprep.subr.mxu0 0.0
      %721 = vmatpush1.msra.mxu0 %v578
      %722 = vmatprep.subr.mxu0 0.0
      %723 = vmatpush1.msra.mxu0 %v579
      %724 = vmatprep.subr.mxu0 0.0
      %725 = vmatpush1.msra.mxu0 %v580
      %726 = vmatprep.subr.mxu0 0.0
      %727 = vmatpush1.msra.mxu0 %v581
      %728 = vmatprep.subr.mxu0 0.0
      %729 = vmatpush1.msra.mxu0 %v582
      %730 = vmatprep.subr.mxu0 0.0
      %731 = vmatpush1.msra.mxu0 %v583
      %732 = vmatprep.subr.mxu0 0.0
      %733 = vmatpush1.msra.mxu0 %v584
      %734 = vmatprep.subr.mxu0 0.0
      %735 = vmatpush1.msra.mxu0 %v585
      %736 = vmatprep.subr.mxu0 0.0
      %737 = vmatpush1.msra.mxu0 %v586
      %738 = vmatprep.subr.mxu0 0.0
      %739 = vmatpush1.msra.mxu0 %v587
      %740 = vmatprep.subr.mxu0 0.0
      %741 = vmatpush1.msra.mxu0 %v588
      %742 = vmatprep.subr.mxu0 0.0
      %743 = vmatpush1.msra.mxu0 %v589
      %744 = vmatprep.subr.mxu0 0.0
      %745 = vmatpush1.msra.mxu0 %v590
      %746 = vmatprep.subr.mxu0 0.0
      %747 = vmatpush1.msra.mxu0 %v591
      %748 = vmatprep.subr.mxu0 0.0
      %749 = vmatpush1.msra.mxu0 %v592
      %750 = vmatprep.subr.mxu0 0.0
      %751 = vmatpush1.msra.mxu0 %v593
      %752 = vmatprep.subr.mxu0 0.0
      %753 = vmatpush1.msra.mxu0 %v594
      %754 = vmatprep.subr.mxu0 0.0
      %755 = vmatpush1.msra.mxu0 %v595
      %756 = vmatprep.subr.mxu0 0.0
      %757 = vmatpush1.msra.mxu0 %v596
      %758 = vmatprep.subr.mxu0 0.0
      %759 = vmatpush1.msra.mxu0 %v597
      %760 = vmatprep.subr.mxu0 0.0
      %761 = vmatpush1.msra.mxu0 %v598
      %762 = vmatprep.subr.mxu0 0.0
      %763 = vmatpush1.msra.mxu0 %v599
      %764 = vmatprep.subr.mxu0 0.0
      %765 = vmatpush1.msra.mxu0 %v600
      %766 = vmatprep.subr.mxu0 0.0
      %767 = vmatpush1.msra.mxu0 %v601
      %768 = vmatprep.subr.mxu0 0.0
      %769 = vmatpush1.msra.mxu0 %v602
      %770 = vmatprep.subr.mxu0 0.0
      %771 = vmatpush1.msra.mxu0 %v603
      %772 = vmatprep.subr.mxu0 0.0
      %773 = vmatpush1.msra.mxu0 %v604
      %774 = vmatprep.subr.mxu0 0.0
      %775 = vmatpush1.msra.mxu0 %v605
      %776 = vmatprep.subr.mxu0 0.0
      %777 = vmatpush1.msra.mxu0 %v606
      %778 = vmatprep.subr.mxu0 0.0
      %779 = vmatpush1.msra.mxu0 %v607
      %780 = vmatprep.subr.mxu0 0.0
      %781 = vmatpush1.msra.mxu0 %v608
      %782 = vmatprep.mubr.f32.mxu0 %v444
      %783 = vmatmul.mubr.f32.gmra.mrb[0].mxu0 %v435
      %v784 = vpop.f32.mrb[0].mxu0
      %v785 = vadd.f32 0.0, %v784
      %v786 = vpop.f32.mrb[0].mxu0
      %787 = vmatprep.mubr.f32.mxu0 %v445
      %788 = vmatmul.mubr.f32.gmra.mrb[0].mxu0 %v436
      %v789 = vpop.f32.mrb[0].mxu0
      %v790 = vadd.f32 0.0, %v789
      %v791 = vpop.f32.mrb[0].mxu0
      %792 = vdwg.mxu0
      %793 = vmatprep.subr.mxu0 0.0
      %794 = vmatpush1.msra.mxu0 %v609
      %795 = vmatprep.subr.mxu0 0.0
      %796 = vmatpush1.msra.mxu0 %v610
      %797 = vmatprep.subr.mxu0 0.0
      %798 = vmatpush1.msra.mxu0 %v611
      %799 = vmatprep.subr.mxu0 0.0
      %800 = vmatpush1.msra.mxu0 %v612
      %801 = vmatprep.subr.mxu0 0.0
      %802 = vmatpush1.msra.mxu0 %v613
      %803 = vmatprep.subr.mxu0 0.0
      %804 = vmatpush1.msra.mxu0 %v614
      %805 = vmatprep.subr.mxu0 0.0
      %806 = vmatpush1.msra.mxu0 %v615
      %807 = vmatprep.subr.mxu0 0.0
      %808 = vmatpush1.msra.mxu0 %v616
      %809 = vmatprep.subr.mxu0 0.0
      %810 = vmatpush1.msra.mxu0 %v617
      %811 = vmatprep.subr.mxu0 0.0
      %812 = vmatpush1.msra.mxu0 %v618
      %813 = vmatprep.subr.mxu0 0.0
      %814 = vmatpush1.msra.mxu0 %v619
      %815 = vmatprep.subr.mxu0 0.0
      %816 = vmatpush1.msra.mxu0 %v620
      %817 = vmatprep.subr.mxu0 0.0
      %818 = vmatpush1.msra.mxu0 %v621
      %819 = vmatprep.subr.mxu0 0.0
      %820 = vmatpush1.msra.mxu0 %v622
      %821 = vmatprep.subr.mxu0 0.0
      %822 = vmatpush1.msra.mxu0 %v623
      %823 = vmatprep.subr.mxu0 0.0
      %824 = vmatpush1.msra.mxu0 %v624
      %825 = vmatprep.subr.mxu0 0.0
      %826 = vmatpush1.msra.mxu0 %v625
      %827 = vmatprep.subr.mxu0 0.0
      %828 = vmatpush1.msra.mxu0 %v626
      %829 = vmatprep.subr.mxu0 0.0
      %830 = vmatpush1.msra.mxu0 %v627
      %831 = vmatprep.subr.mxu0 0.0
      %832 = vmatpush1.msra.mxu0 %v628
      %833 = vmatprep.subr.mxu0 0.0
      %834 = vmatpush1.msra.mxu0 %v629
      %835 = vmatprep.subr.mxu0 0.0
      %836 = vmatpush1.msra.mxu0 %v630
      %837 = vmatprep.subr.mxu0 0.0
      %838 = vmatpush1.msra.mxu0 %v631
      %839 = vmatprep.subr.mxu0 0.0
      %840 = vmatpush1.msra.mxu0 %v632
      %841 = vmatprep.subr.mxu0 0.0
      %842 = vmatpush1.msra.mxu0 %v633
      %843 = vmatprep.subr.mxu0 0.0
      %844 = vmatpush1.msra.mxu0 %v634
      %845 = vmatprep.subr.mxu0 0.0
      %846 = vmatpush1.msra.mxu0 %v635
      %847 = vmatprep.subr.mxu0 0.0
      %848 = vmatpush1.msra.mxu0 %v636
      %849 = vmatprep.subr.mxu0 0.0
      %850 = vmatpush1.msra.mxu0 %v637
      %851 = vmatprep.subr.mxu0 0.0
      %852 = vmatpush1.msra.mxu0 %v638
      %853 = vmatprep.subr.mxu0 0.0
      %854 = vmatpush1.msra.mxu0 %v639
      %855 = vmatprep.subr.mxu0 0.0
      %856 = vmatpush1.msra.mxu0 %v640
      %857 = vmatprep.mubr.f32.mxu0 %v462
      %858 = vmatmul.mubr.f32.gmra.mrb[0].mxu0 %v453
      %v859 = vpop.f32.mrb[0].mxu0
      %v860 = vadd.f32 %v785, %v859
      %v861 = vpop.f32.mrb[0].mxu0
      %862 = vmatprep.mubr.f32.mxu0 %v463
      %863 = vmatmul.mubr.f32.gmra.mrb[0].mxu0 %v454
      %v864 = vpop.f32.mrb[0].mxu0
      %v865 = vadd.f32 %v790, %v864
      %v866 = vpop.f32.mrb[0].mxu0
      %867 = vdwg.mxu0
      %868 = vmatprep.subr.mxu0 0.0
      %869 = vmatpush1.msra.mxu0 %v641
      %870 = vmatprep.subr.mxu0 0.0
      %871 = vmatpush1.msra.mxu0 %v642
      %872 = vmatprep.subr.mxu0 0.0
      %873 = vmatpush1.msra.mxu0 %v643
      %874 = vmatprep.subr.mxu0 0.0
      %875 = vmatpush1.msra.mxu0 %v644
      %876 = vmatprep.subr.mxu0 0.0
      %877 = vmatpush1.msra.mxu0 %v645
      %878 = vmatprep.subr.mxu0 0.0
      %879 = vmatpush1.msra.mxu0 %v646
      %880 = vmatprep.subr.mxu0 0.0
      %881 = vmatpush1.msra.mxu0 %v647
      %882 = vmatprep.subr.mxu0 0.0
      %883 = vmatpush1.msra.mxu0 %v648
      %884 = vmatprep.subr.mxu0 0.0
      %885 = vmatpush1.msra.mxu0 %v649
      %886 = vmatprep.subr.mxu0 0.0
      %887 = vmatpush1.msra.mxu0 %v650
      %888 = vmatprep.subr.mxu0 0.0
      %889 = vmatpush1.msra.mxu0 %v651
      %890 = vmatprep.subr.mxu0 0.0
      %891 = vmatpush1.msra.mxu0 %v652
      %892 = vmatprep.subr.mxu0 0.0
      %893 = vmatpush1.msra.mxu0 %v653
      %894 = vmatprep.subr.mxu0 0.0
      %895 = vmatpush1.msra.mxu0 %v654
      %896 = vmatprep.subr.mxu0 0.0
      %897 = vmatpush1.msra.mxu0 %v655
      %898 = vmatprep.subr.mxu0 0.0
      %899 = vmatpush1.msra.mxu0 %v656
      %900 = vmatprep.subr.mxu0 0.0
      %901 = vmatpush1.msra.mxu0 %v657
      %902 = vmatprep.subr.mxu0 0.0
      %903 = vmatpush1.msra.mxu0 %v658
      %904 = vmatprep.subr.mxu0 0.0
      %905 = vmatpush1.msra.mxu0 %v659
      %906 = vmatprep.subr.mxu0 0.0
      %907 = vmatpush1.msra.mxu0 %v660
      %908 = vmatprep.subr.mxu0 0.0
      %909 = vmatpush1.msra.mxu0 %v661
      %910 = vmatprep.subr.mxu0 0.0
      %911 = vmatpush1.msra.mxu0 %v662
      %912 = vmatprep.subr.mxu0 0.0
      %913 = vmatpush1.msra.mxu0 %v663
      %914 = vmatprep.subr.mxu0 0.0
      %915 = vmatpush1.msra.mxu0 %v664
      %916 = vmatprep.subr.mxu0 0.0
      %917 = vmatpush1.msra.mxu0 %v665
      %918 = vmatprep.subr.mxu0 0.0
      %919 = vmatpush1.msra.mxu0 %v666
      %920 = vmatprep.subr.mxu0 0.0
      %921 = vmatpush1.msra.mxu0 %v667
      %922 = vmatprep.subr.mxu0 0.0
      %923 = vmatpush1.msra.mxu0 %v668
      %924 = vmatprep.subr.mxu0 0.0
      %925 = vmatpush1.msra.mxu0 %v669
      %926 = vmatprep.subr.mxu0 0.0
      %927 = vmatpush1.msra.mxu0 %v670
      %928 = vmatprep.subr.mxu0 0.0
      %929 = vmatpush1.msra.mxu0 %v671
      %930 = vmatprep.subr.mxu0 0.0
      %931 = vmatpush1.msra.mxu0 %v672
      %932 = vmatprep.mubr.f32.mxu0 %v575
      %933 = vmatmul.mubr.f32.gmra.mrb[0].mxu0 %v471
      %v934 = vpop.f32.mrb[0].mxu0
      %v935 = vadd.f32 %v860, %v934
      %v936 = vpop.f32.mrb[0].mxu0
      %937 = vmatprep.mubr.f32.mxu0 %v576
      %938 = vmatmul.mubr.f32.gmra.mrb[0].mxu0 %v472
      %v939 = vpop.f32.mrb[0].mxu0
      %v940 = vadd.f32 %v865, %v939
      %v941 = vpop.f32.mrb[0].mxu0
      %942 = vdwg.mxu0
      %943 = vmatprep.subr.mxu0 0.0
      %944 = vmatpush1.msra.mxu0 %v673
      %945 = vmatprep.subr.mxu0 0.0
      %946 = vmatpush1.msra.mxu0 %v674
      %947 = vmatprep.subr.mxu0 0.0
      %948 = vmatpush1.msra.mxu0 %v675
      %949 = vmatprep.subr.mxu0 0.0
      %950 = vmatpush1.msra.mxu0 %v676
      %951 = vmatprep.subr.mxu0 0.0
      %952 = vmatpush1.msra.mxu0 %v677
      %953 = vmatprep.subr.mxu0 0.0
      %954 = vmatpush1.msra.mxu0 %v678
      %955 = vmatprep.subr.mxu0 0.0
      %956 = vmatpush1.msra.mxu0 %v679
      %957 = vmatprep.subr.mxu0 0.0
      %958 = vmatpush1.msra.mxu0 %v680
      %959 = vmatprep.subr.mxu0 0.0
      %960 = vmatpush1.msra.mxu0 %v681
      %961 = vmatprep.subr.mxu0 0.0
      %962 = vmatpush1.msra.mxu0 %v682
      %963 = vmatprep.subr.mxu0 0.0
      %964 = vmatpush1.msra.mxu0 %v683
      %965 = vmatprep.subr.mxu0 0.0
      %966 = vmatpush1.msra.mxu0 %v684
      %967 = vmatprep.subr.mxu0 0.0
      %968 = vmatpush1.msra.mxu0 %v685
      %969 = vmatprep.subr.mxu0 0.0
      %970 = vmatpush1.msra.mxu0 %v686
      %971 = vmatprep.subr.mxu0 0.0
      %972 = vmatpush1.msra.mxu0 %v687
      %973 = vmatprep.subr.mxu0 0.0
      %974 = vmatpush1.msra.mxu0 %v688
      %975 = vmatprep.subr.mxu0 0.0
      %976 = vmatpush1.msra.mxu0 %v689
      %977 = vmatprep.subr.mxu0 0.0
      %978 = vmatpush1.msra.mxu0 %v690
      %979 = vmatprep.subr.mxu0 0.0
      %980 = vmatpush1.msra.mxu0 %v691
      %981 = vmatprep.subr.mxu0 0.0
      %982 = vmatpush1.msra.mxu0 %v692
      %983 = vmatprep.subr.mxu0 0.0
      %984 = vmatpush1.msra.mxu0 %v693
      %985 = vmatprep.subr.mxu0 0.0
      %986 = vmatpush1.msra.mxu0 %v694
      %987 = vmatprep.subr.mxu0 0.0
      %988 = vmatpush1.msra.mxu0 %v695
      %989 = vmatprep.subr.mxu0 0.0
      %990 = vmatpush1.msra.mxu0 %v696
      %991 = vmatprep.subr.mxu0 0.0
      %992 = vmatpush1.msra.mxu0 %v697
      %993 = vmatprep.subr.mxu0 0.0
      %994 = vmatpush1.msra.mxu0 %v698
      %995 = vmatprep.subr.mxu0 0.0
      %996 = vmatpush1.msra.mxu0 %v699
      %997 = vmatprep.subr.mxu0 0.0
      %998 = vmatpush1.msra.mxu0 %v700
      %999 = vmatprep.subr.mxu0 0.0
      %1000 = vmatpush1.msra.mxu0 %v701
      %1001 = vmatprep.subr.mxu0 0.0
      %1002 = vmatpush1.msra.mxu0 %v702
      %1003 = vmatprep.subr.mxu0 0.0
      %1004 = vmatpush1.msra.mxu0 %v703
      %1005 = vmatprep.subr.mxu0 0.0
      %1006 = vmatpush1.msra.mxu0 %v704
      %1007 = vmatprep.mubr.f32.mxu0 %v566
      %1008 = vmatmul.mubr.f32.gmra.mrb[0].mxu0 %v565
      %v1009 = vpop.f32.mrb[0].mxu0
      %v1010 = vadd.f32 %v935, %v1009
      %v1011 = vpop.f32.mrb[0].mxu0
      %1012 = vmatprep.mubr.f32.mxu0 %v568
      %1013 = vmatmul.mubr.f32.gmra.mrb[0].mxu0 %v567
      %v1014 = vpop.f32.mrb[0].mxu0
      %v1015 = vadd.f32 %v940, %v1014
      %v1016 = vpop.f32.mrb[0].mxu0
      %1017 = vdwg.mxu0
      %1018 = vmatprep.subr.mxu0 0.0
      %1019 = vmatpush1.msra.mxu0 %v705
      %1020 = vmatprep.subr.mxu0 0.0
      %1021 = vmatpush1.msra.mxu0 %v706
      %1022 = vmatprep.subr.mxu0 0.0
      %1023 = vmatpush1.msra.mxu0 %v707
      %1024 = vmatprep.subr.mxu0 0.0
      %1025 = vmatpush1.msra.mxu0 %v716
      %1026 = vmatprep.subr.mxu0 0.0
      %1027 = vmatpush1.msra.mxu0 0.0
      %1028 = vmatprep.subr.mxu0 0.0
      %1029 = vmatpush1.msra.mxu0 0.0
      %1030 = vmatprep.subr.mxu0 0.0
      %1031 = vmatpush1.msra.mxu0 0.0
      %1032 = vmatprep.subr.mxu0 0.0
      %1033 = vmatpush1.msra.mxu0 0.0
      %1034 = vmatprep.subr.mxu0 0.0
      %1035 = vmatpush1.msra.mxu0 0.0
      %1036 = vmatprep.subr.mxu0 0.0
      %1037 = vmatpush1.msra.mxu0 0.0
      %1038 = vmatprep.subr.mxu0 0.0
      %1039 = vmatpush1.msra.mxu0 0.0
      %1040 = vmatprep.subr.mxu0 0.0
      %1041 = vmatpush1.msra.mxu0 0.0
      %1042 = vmatprep.subr.mxu0 0.0
      %1043 = vmatpush1.msra.mxu0 0.0
      %1044 = vmatprep.subr.mxu0 0.0
      %1045 = vmatpush1.msra.mxu0 0.0
      %1046 = vmatprep.subr.mxu0 0.0
      %1047 = vmatpush1.msra.mxu0 0.0
      %1048 = vmatprep.subr.mxu0 0.0
      %1049 = vmatpush1.msra.mxu0 0.0
      %1050 = vmatprep.subr.mxu0 0.0
      %1051 = vmatpush1.msra.mxu0 0.0
      %1052 = vmatprep.subr.mxu0 0.0
      %1053 = vmatpush1.msra.mxu0 0.0
      %1054 = vmatprep.subr.mxu0 0.0
      %1055 = vmatpush1.msra.mxu0 0.0
      %1056 = vmatprep.subr.mxu0 0.0
      %1057 = vmatpush1.msra.mxu0 0.0
      %1058 = vmatprep.subr.mxu0 0.0
      %1059 = vmatpush1.msra.mxu0 0.0
      %1060 = vmatprep.subr.mxu0 0.0
      %1061 = vmatpush1.msra.mxu0 0.0
      %1062 = vmatprep.subr.mxu0 0.0
      %1063 = vmatpush1.msra.mxu0 0.0
      %1064 = vmatprep.subr.mxu0 0.0
      %1065 = vmatpush1.msra.mxu0 0.0
      %1066 = vmatprep.subr.mxu0 0.0
      %1067 = vmatpush1.msra.mxu0 0.0
      %1068 = vmatprep.subr.mxu0 0.0
      %1069 = vmatpush1.msra.mxu0 0.0
      %1070 = vmatprep.subr.mxu0 0.0
      %1071 = vmatpush1.msra.mxu0 0.0
      %1072 = vmatprep.subr.mxu0 0.0
      %1073 = vmatpush1.msra.mxu0 0.0
      %1074 = vmatprep.subr.mxu0 0.0
      %1075 = vmatpush1.msra.mxu0 0.0
      %1076 = vmatprep.subr.mxu0 0.0
      %1077 = vmatpush1.msra.mxu0 0.0
      %1078 = vmatprep.subr.mxu0 0.0
      %1079 = vmatpush1.msra.mxu0 0.0
      %1080 = vmatprep.subr.mxu0 0.0
      %1081 = vmatpush1.msra.mxu0 0.0
      %1082 = vmatprep.mubr.f32.mxu0 0.0
      %1083 = vmatmul.mubr.f32.gmra.mrb[0].mxu0 %v710
      %v1084 = vpop.f32.mrb[0].mxu0
      %v1085 = vadd.f32 %v1010, %v1084
      %v1086 = vpop.f32.mrb[0].mxu0
      %1087 = vmatprep.mubr.f32.mxu0 0.0
      %1088 = vmatmul.mubr.f32.gmra.mrb[0].mxu0 %v712
      %v1089 = vpop.f32.mrb[0].mxu0
      %v1090 = vadd.f32 %v1015, %v1089
      %v1091 = vpop.f32.mrb[0].mxu0
      %1092 = vdwg.mxu0
      %1093 = vrot.lane.b32.xlu0 %v312, 39
      %v1094 = vpop.permute.xlu0 %1093
      %1095 = vrot.lane.b32.xlu0 %v313, 39
      %v1096 = vpop.permute.xlu0 %1095
      %1099 = vrot.lane.b32.xlu0 %v314, 81
      %v1100 = vpop.permute.xlu0 %1099
      %1101 = vrot.lane.b32.xlu0 %v315, 81
      %v1102 = vpop.permute.xlu0 %1101
      %1105 = vrot.lane.b32.xlu0 %v312, 120
      %v1106 = vpop.permute.xlu0 %1105
      %1107 = vrot.lane.b32.xlu0 %v313, 120
      %v1108 = vpop.permute.xlu0 %1107
      %1111 = vrot.lane.b32.xlu0 %v314, 34
      %v1112 = vpop.permute.xlu0 %1111
      %1113 = vrot.lane.b32.xlu0 %v315, 34
      %v1114 = vpop.permute.xlu0 %1113
      %1117 = vrot.lane.b32.xlu0 %v318, 82
      %v1118 = vpop.permute.xlu0 %1117
      %1119 = vrot.lane.b32.xlu0 %v319, 82
      %v1120 = vpop.permute.xlu0 %1119
      %1123 = vrot.lane.b32.xlu0 %v316, 121
      %v1124 = vpop.permute.xlu0 %1123
      %1125 = vrot.lane.b32.xlu0 %v317, 121
      %v1126 = vpop.permute.xlu0 %1125
      %1129 = vrot.lane.b32.xlu0 %v318, 35
      %v1130 = vpop.permute.xlu0 %1129
      %1131 = vrot.lane.b32.xlu0 %v319, 35
      %v1132 = vpop.permute.xlu0 %1131
      %1135 = vrot.lane.b32.xlu0 %v316, 74
      %v1136 = vpop.permute.xlu0 %1135
      %1137 = vrot.lane.b32.xlu0 %v317, 74
      %v1138 = vpop.permute.xlu0 %1137
      %1141 = vrot.lane.b32.xlu0 %v318, 116
      %v1142 = vpop.permute.xlu0 %1141
      %1143 = vrot.lane.b32.xlu0 %v319, 116
      %v1144 = vpop.permute.xlu0 %1143
      %1147 = vrot.lane.b32.xlu0 %v394, 36
      %v1148 = vpop.permute.xlu0 %1147
      %1149 = vrot.lane.b32.xlu0 %v393, 36
      %v1150 = vpop.permute.xlu0 %1149
      %1153 = vrot.lane.b32.xlu0 %v385, 75
      %v1154 = vpop.permute.xlu0 %1153
      %1155 = vrot.lane.b32.xlu0 %v384, 75
      %v1156 = vpop.permute.xlu0 %1155
      %1159 = vrot.lane.b32.xlu0 %v394, 117
      %v1160 = vpop.permute.xlu0 %1159
      %1161 = vrot.lane.b32.xlu0 %v393, 117
      %v1162 = vpop.permute.xlu0 %1161
      %1165 = vrot.lane.b32.xlu0 %v385, 28
      %v1166 = vpop.permute.xlu0 %1165
      %1167 = vrot.lane.b32.xlu0 %v384, 28
      %v1168 = vpop.permute.xlu0 %1167
      %1171 = vrot.lane.b32.xlu0 %v394, 70
      %v1172 = vpop.permute.xlu0 %1171
      %1173 = vrot.lane.b32.xlu0 %v393, 70
      %v1174 = vpop.permute.xlu0 %1173
      %v1177 = vrot.slane %v318, 1
      %v1178 = vrot.slane %v319, 1
      %v1179 = vsel %vm382, %v1177, %v1178
      %1180 = vrot.lane.b32.xlu0 %v1179, 118
      %v1181 = vpop.permute.xlu0 %1180
      %1182 = vrot.lane.b32.xlu0 %v1178, 118
      %v1183 = vpop.permute.xlu0 %1182
      %v1186 = vsel %vm428, %v314, %v1094
      %v1187 = vsel %vm428, %v315, %v1096
      %v1188 = vsel %vm431, %v1186, %v1100
      %v1189 = vsel %vm431, %v1187, %v1102
      %v1190 = vsel %vm434, %v1188, %v1106
      %v1191 = vsel %vm434, %v1189, %v1108
      %v1192 = vsel %vm437, %v1106, %v1112
      %v1193 = vsel %vm437, %v1108, %v1114
      %v1194 = vsel %vm440, %v1192, %v1118
      %v1195 = vsel %vm440, %v1193, %v1120
      %v1196 = vsel %vm443, %v1194, %v1124
      %v1197 = vsel %vm443, %v1195, %v1126
      %v1198 = vsel %vm446, %v1124, %v1130
      %v1199 = vsel %vm446, %v1126, %v1132
      %v1200 = vsel %vm449, %v1198, %v1136
      %v1201 = vsel %vm449, %v1199, %v1138
      %v1202 = vsel %vm452, %v1200, %v1142
      %v1203 = vsel %vm452, %v1201, %v1144
      %v1204 = vsel %vm455, %v1142, %v1148
      %v1205 = vsel %vm455, %v1144, %v1150
      %v1206 = vsel %vm458, %v1204, %v1154
      %v1207 = vsel %vm458, %v1205, %v1156
      %v1208 = vsel %vm461, %v1206, %v1160
      %v1209 = vsel %vm461, %v1207, %v1162
      %v1210 = vsel %vm464, %v1160, %v1166
      %v1211 = vsel %vm464, %v1162, %v1168
      %v1212 = vsel %vm467, %v1210, %v1172
      %v1213 = vsel %vm467, %v1211, %v1174
      %v1214 = vsel %vm470, %v1212, %v1181
      %v1215 = vsel %vm470, %v1213, %v1183
      %1216 = vrot.lane.b32.xlu0 %v316, 125
      %v1217 = vpop.permute.xlu0 %1216
      %1218 = vrot.lane.b32.xlu0 %v317, 125
      %v1219 = vpop.permute.xlu0 %1218
      %1222 = vrot.lane.b32.xlu0 %v318, 39
      %v1223 = vpop.permute.xlu0 %1222
      %1224 = vrot.lane.b32.xlu0 %v319, 39
      %v1225 = vpop.permute.xlu0 %1224
      %1228 = vrot.lane.b32.xlu0 %v316, 78
      %v1229 = vpop.permute.xlu0 %1228
      %1230 = vrot.lane.b32.xlu0 %v317, 78
      %v1231 = vpop.permute.xlu0 %1230
      %1234 = vrot.lane.b32.xlu0 %v318, 120
      %v1235 = vpop.permute.xlu0 %1234
      %1236 = vrot.lane.b32.xlu0 %v319, 120
      %v1237 = vpop.permute.xlu0 %1236
      %1240 = vrot.lane.b32.xlu0 %v394, 40
      %v1241 = vpop.permute.xlu0 %1240
      %1242 = vrot.lane.b32.xlu0 %v393, 40
      %v1243 = vpop.permute.xlu0 %1242
      %1246 = vrot.lane.b32.xlu0 %v385, 79
      %v1247 = vpop.permute.xlu0 %1246
      %1248 = vrot.lane.b32.xlu0 %v384, 79
      %v1249 = vpop.permute.xlu0 %1248
      %1252 = vrot.lane.b32.xlu0 %v394, 121
      %v1253 = vpop.permute.xlu0 %1252
      %1254 = vrot.lane.b32.xlu0 %v393, 121
      %v1255 = vpop.permute.xlu0 %1254
      %1258 = vrot.lane.b32.xlu0 %v385, 32
      %v1259 = vpop.permute.xlu0 %1258
      %1260 = vrot.lane.b32.xlu0 %v384, 32
      %v1261 = vpop.permute.xlu0 %1260
      %1264 = vrot.lane.b32.xlu0 %v394, 74
      %v1265 = vpop.permute.xlu0 %1264
      %1266 = vrot.lane.b32.xlu0 %v393, 74
      %v1267 = vpop.permute.xlu0 %1266
      %v1270 = vsel %vm428, %v1217, %v1223
      %v1271 = vsel %vm428, %v1219, %v1225
      %v1272 = vsel %vm431, %v1270, %v1229
      %v1273 = vsel %vm431, %v1271, %v1231
      %v1274 = vsel %vm434, %v1272, %v1235
      %v1275 = vsel %vm434, %v1273, %v1237
      %v1276 = vsel %vm437, %v1235, %v1241
      %v1277 = vsel %vm437, %v1237, %v1243
      %v1278 = vsel %vm440, %v1276, %v1247
      %v1279 = vsel %vm440, %v1277, %v1249
      %v1280 = vsel %vm443, %v1278, %v1253
      %v1281 = vsel %vm443, %v1279, %v1255
      %v1282 = vsel %vm446, %v1253, %v1259
      %v1283 = vsel %vm446, %v1255, %v1261
      %v1284 = vsel %vm449, %v1282, %v1265
      %v1285 = vsel %vm449, %v1283, %v1267
      %v1292 = vrot.slane %v1274, 1
      %v1293 = vrot.slane %v1275, 1
      %v1294 = vsel %vm382, %v1292, %v1293
      %v1295 = vrot.slane %v1280, 1
      %v1296 = vrot.slane %v1281, 1
      %v1297 = vsel %vm382, %v1295, %v1296
      %v1298 = vrot.slane %v1284, 1
      %v1299 = vrot.slane %v1285, 1
      %v1300 = vsel %vm382, %v1298, %v1299
      %1301 = vrot.lane.b32.xlu0 %v1294, 32
      %v1302 = vpop.permute.xlu0 %1301
      %1303 = vrot.lane.b32.xlu0 %v1297, 32
      %v1304 = vpop.permute.xlu0 %1303
      %1305 = vrot.lane.b32.xlu0 %v1300, 32
      %v1306 = vpop.permute.xlu0 %1305
      %1307 = vrot.lane.b32.xlu0 %v1293, 32
      %v1308 = vpop.permute.xlu0 %1307
      %1309 = vrot.lane.b32.xlu0 %v1296, 32
      %v1310 = vpop.permute.xlu0 %1309
      %1311 = vrot.lane.b32.xlu0 %v1299, 32
      %v1312 = vpop.permute.xlu0 %1311
      %v1313 = vsel %vm564, %v1302, %v1304
      %v1314 = vsel %vm564, %v1304, %v1306
      %v1315 = vsel %vm564, %v1308, %v1310
      %v1316 = vsel %vm564, %v1310, %v1312
      %v1323 = vsel %vm564, %v1181, %v1302
      %v1324 = vsel %vm564, %v1183, %v1308
      %v1325 = vsel %vm709, %v1306, 0
      %v1327 = vsel %vm709, %v1312, 0
      %1329 = vmatprep.subr.mxu0 0.0
      %1330 = vmatpush1.msra.mxu0 %v577
      %1331 = vmatprep.subr.mxu0 0.0
      %1332 = vmatpush1.msra.mxu0 %v578
      %1333 = vmatprep.subr.mxu0 0.0
      %1334 = vmatpush1.msra.mxu0 %v579
      %1335 = vmatprep.subr.mxu0 0.0
      %1336 = vmatpush1.msra.mxu0 %v580
      %1337 = vmatprep.subr.mxu0 0.0
      %1338 = vmatpush1.msra.mxu0 %v581
      %1339 = vmatprep.subr.mxu0 0.0
      %1340 = vmatpush1.msra.mxu0 %v582
      %1341 = vmatprep.subr.mxu0 0.0
      %1342 = vmatpush1.msra.mxu0 %v583
      %1343 = vmatprep.subr.mxu0 0.0
      %1344 = vmatpush1.msra.mxu0 %v584
      %1345 = vmatprep.subr.mxu0 0.0
      %1346 = vmatpush1.msra.mxu0 %v585
      %1347 = vmatprep.subr.mxu0 0.0
      %1348 = vmatpush1.msra.mxu0 %v586
      %1349 = vmatprep.subr.mxu0 0.0
      %1350 = vmatpush1.msra.mxu0 %v587
      %1351 = vmatprep.subr.mxu0 0.0
      %1352 = vmatpush1.msra.mxu0 %v588
      %1353 = vmatprep.subr.mxu0 0.0
      %1354 = vmatpush1.msra.mxu0 %v589
      %1355 = vmatprep.subr.mxu0 0.0
      %1356 = vmatpush1.msra.mxu0 %v590
      %1357 = vmatprep.subr.mxu0 0.0
      %1358 = vmatpush1.msra.mxu0 %v591
      %1359 = vmatprep.subr.mxu0 0.0
      %1360 = vmatpush1.msra.mxu0 %v592
      %1361 = vmatprep.subr.mxu0 0.0
      %1362 = vmatpush1.msra.mxu0 %v593
      %1363 = vmatprep.subr.mxu0 0.0
      %1364 = vmatpush1.msra.mxu0 %v594
      %1365 = vmatprep.subr.mxu0 0.0
      %1366 = vmatpush1.msra.mxu0 %v595
      %1367 = vmatprep.subr.mxu0 0.0
      %1368 = vmatpush1.msra.mxu0 %v596
      %1369 = vmatprep.subr.mxu0 0.0
      %1370 = vmatpush1.msra.mxu0 %v597
      %1371 = vmatprep.subr.mxu0 0.0
      %1372 = vmatpush1.msra.mxu0 %v598
      %1373 = vmatprep.subr.mxu0 0.0
      %1374 = vmatpush1.msra.mxu0 %v599
      %1375 = vmatprep.subr.mxu0 0.0
      %1376 = vmatpush1.msra.mxu0 %v600
      %1377 = vmatprep.subr.mxu0 0.0
      %1378 = vmatpush1.msra.mxu0 %v601
      %1379 = vmatprep.subr.mxu0 0.0
      %1380 = vmatpush1.msra.mxu0 %v602
      %1381 = vmatprep.subr.mxu0 0.0
      %1382 = vmatpush1.msra.mxu0 %v603
      %1383 = vmatprep.subr.mxu0 0.0
      %1384 = vmatpush1.msra.mxu0 %v604
      %1385 = vmatprep.subr.mxu0 0.0
      %1386 = vmatpush1.msra.mxu0 %v605
      %1387 = vmatprep.subr.mxu0 0.0
      %1388 = vmatpush1.msra.mxu0 %v606
      %1389 = vmatprep.subr.mxu0 0.0
      %1390 = vmatpush1.msra.mxu0 %v607
      %1391 = vmatprep.subr.mxu0 0.0
      %1392 = vmatpush1.msra.mxu0 %v608
      %1393 = vmatprep.mubr.f32.mxu0 %v1196
      %1394 = vmatmul.mubr.f32.gmra.mrb[0].mxu0 %v1190
      %v1395 = vpop.f32.mrb[0].mxu0
      %v1396 = vadd.f32 0.0, %v1395
      %v1397 = vpop.f32.mrb[0].mxu0
      %1398 = vmatprep.mubr.f32.mxu0 %v1197
      %1399 = vmatmul.mubr.f32.gmra.mrb[0].mxu0 %v1191
      %v1400 = vpop.f32.mrb[0].mxu0
      %v1401 = vadd.f32 0.0, %v1400
      %v1402 = vpop.f32.mrb[0].mxu0
      %1403 = vdwg.mxu0
      %1404 = vmatprep.subr.mxu0 0.0
      %1405 = vmatpush1.msra.mxu0 %v609
      %1406 = vmatprep.subr.mxu0 0.0
      %1407 = vmatpush1.msra.mxu0 %v610
      %1408 = vmatprep.subr.mxu0 0.0
      %1409 = vmatpush1.msra.mxu0 %v611
      %1410 = vmatprep.subr.mxu0 0.0
      %1411 = vmatpush1.msra.mxu0 %v612
      %1412 = vmatprep.subr.mxu0 0.0
      %1413 = vmatpush1.msra.mxu0 %v613
      %1414 = vmatprep.subr.mxu0 0.0
      %1415 = vmatpush1.msra.mxu0 %v614
      %1416 = vmatprep.subr.mxu0 0.0
      %1417 = vmatpush1.msra.mxu0 %v615
      %1418 = vmatprep.subr.mxu0 0.0
      %1419 = vmatpush1.msra.mxu0 %v616
      %1420 = vmatprep.subr.mxu0 0.0
      %1421 = vmatpush1.msra.mxu0 %v617
      %1422 = vmatprep.subr.mxu0 0.0
      %1423 = vmatpush1.msra.mxu0 %v618
      %1424 = vmatprep.subr.mxu0 0.0
      %1425 = vmatpush1.msra.mxu0 %v619
      %1426 = vmatprep.subr.mxu0 0.0
      %1427 = vmatpush1.msra.mxu0 %v620
      %1428 = vmatprep.subr.mxu0 0.0
      %1429 = vmatpush1.msra.mxu0 %v621
      %1430 = vmatprep.subr.mxu0 0.0
      %1431 = vmatpush1.msra.mxu0 %v622
      %1432 = vmatprep.subr.mxu0 0.0
      %1433 = vmatpush1.msra.mxu0 %v623
      %1434 = vmatprep.subr.mxu0 0.0
      %1435 = vmatpush1.msra.mxu0 %v624
      %1436 = vmatprep.subr.mxu0 0.0
      %1437 = vmatpush1.msra.mxu0 %v625
      %1438 = vmatprep.subr.mxu0 0.0
      %1439 = vmatpush1.msra.mxu0 %v626
      %1440 = vmatprep.subr.mxu0 0.0
      %1441 = vmatpush1.msra.mxu0 %v627
      %1442 = vmatprep.subr.mxu0 0.0
      %1443 = vmatpush1.msra.mxu0 %v628
      %1444 = vmatprep.subr.mxu0 0.0
      %1445 = vmatpush1.msra.mxu0 %v629
      %1446 = vmatprep.subr.mxu0 0.0
      %1447 = vmatpush1.msra.mxu0 %v630
      %1448 = vmatprep.subr.mxu0 0.0
      %1449 = vmatpush1.msra.mxu0 %v631
      %1450 = vmatprep.subr.mxu0 0.0
      %1451 = vmatpush1.msra.mxu0 %v632
      %1452 = vmatprep.subr.mxu0 0.0
      %1453 = vmatpush1.msra.mxu0 %v633
      %1454 = vmatprep.subr.mxu0 0.0
      %1455 = vmatpush1.msra.mxu0 %v634
      %1456 = vmatprep.subr.mxu0 0.0
      %1457 = vmatpush1.msra.mxu0 %v635
      %1458 = vmatprep.subr.mxu0 0.0
      %1459 = vmatpush1.msra.mxu0 %v636
      %1460 = vmatprep.subr.mxu0 0.0
      %1461 = vmatpush1.msra.mxu0 %v637
      %1462 = vmatprep.subr.mxu0 0.0
      %1463 = vmatpush1.msra.mxu0 %v638
      %1464 = vmatprep.subr.mxu0 0.0
      %1465 = vmatpush1.msra.mxu0 %v639
      %1466 = vmatprep.subr.mxu0 0.0
      %1467 = vmatpush1.msra.mxu0 %v640
      %1468 = vmatprep.mubr.f32.mxu0 %v1208
      %1469 = vmatmul.mubr.f32.gmra.mrb[0].mxu0 %v1202
      %v1470 = vpop.f32.mrb[0].mxu0
      %v1471 = vadd.f32 %v1396, %v1470
      %v1472 = vpop.f32.mrb[0].mxu0
      %1473 = vmatprep.mubr.f32.mxu0 %v1209
      %1474 = vmatmul.mubr.f32.gmra.mrb[0].mxu0 %v1203
      %v1475 = vpop.f32.mrb[0].mxu0
      %v1476 = vadd.f32 %v1401, %v1475
      %v1477 = vpop.f32.mrb[0].mxu0
      %1478 = vdwg.mxu0
      %1479 = vmatprep.subr.mxu0 0.0
      %1480 = vmatpush1.msra.mxu0 %v641
      %1481 = vmatprep.subr.mxu0 0.0
      %1482 = vmatpush1.msra.mxu0 %v642
      %1483 = vmatprep.subr.mxu0 0.0
      %1484 = vmatpush1.msra.mxu0 %v643
      %1485 = vmatprep.subr.mxu0 0.0
      %1486 = vmatpush1.msra.mxu0 %v644
      %1487 = vmatprep.subr.mxu0 0.0
      %1488 = vmatpush1.msra.mxu0 %v645
      %1489 = vmatprep.subr.mxu0 0.0
      %1490 = vmatpush1.msra.mxu0 %v646
      %1491 = vmatprep.subr.mxu0 0.0
      %1492 = vmatpush1.msra.mxu0 %v647
      %1493 = vmatprep.subr.mxu0 0.0
      %1494 = vmatpush1.msra.mxu0 %v648
      %1495 = vmatprep.subr.mxu0 0.0
      %1496 = vmatpush1.msra.mxu0 %v649
      %1497 = vmatprep.subr.mxu0 0.0
      %1498 = vmatpush1.msra.mxu0 %v650
      %1499 = vmatprep.subr.mxu0 0.0
      %1500 = vmatpush1.msra.mxu0 %v651
      %1501 = vmatprep.subr.mxu0 0.0
      %1502 = vmatpush1.msra.mxu0 %v652
      %1503 = vmatprep.subr.mxu0 0.0
      %1504 = vmatpush1.msra.mxu0 %v653
      %1505 = vmatprep.subr.mxu0 0.0
      %1506 = vmatpush1.msra.mxu0 %v654
      %1507 = vmatprep.subr.mxu0 0.0
      %1508 = vmatpush1.msra.mxu0 %v655
      %1509 = vmatprep.subr.mxu0 0.0
      %1510 = vmatpush1.msra.mxu0 %v656
      %1511 = vmatprep.subr.mxu0 0.0
      %1512 = vmatpush1.msra.mxu0 %v657
      %1513 = vmatprep.subr.mxu0 0.0
      %1514 = vmatpush1.msra.mxu0 %v658
      %1515 = vmatprep.subr.mxu0 0.0
      %1516 = vmatpush1.msra.mxu0 %v659
      %1517 = vmatprep.subr.mxu0 0.0
      %1518 = vmatpush1.msra.mxu0 %v660
      %1519 = vmatprep.subr.mxu0 0.0
      %1520 = vmatpush1.msra.mxu0 %v661
      %1521 = vmatprep.subr.mxu0 0.0
      %1522 = vmatpush1.msra.mxu0 %v662
      %1523 = vmatprep.subr.mxu0 0.0
      %1524 = vmatpush1.msra.mxu0 %v663
      %1525 = vmatprep.subr.mxu0 0.0
      %1526 = vmatpush1.msra.mxu0 %v664
      %1527 = vmatprep.subr.mxu0 0.0
      %1528 = vmatpush1.msra.mxu0 %v665
      %1529 = vmatprep.subr.mxu0 0.0
      %1530 = vmatpush1.msra.mxu0 %v666
      %1531 = vmatprep.subr.mxu0 0.0
      %1532 = vmatpush1.msra.mxu0 %v667
      %1533 = vmatprep.subr.mxu0 0.0
      %1534 = vmatpush1.msra.mxu0 %v668
      %1535 = vmatprep.subr.mxu0 0.0
      %1536 = vmatpush1.msra.mxu0 %v669
      %1537 = vmatprep.subr.mxu0 0.0
      %1538 = vmatpush1.msra.mxu0 %v670
      %1539 = vmatprep.subr.mxu0 0.0
      %1540 = vmatpush1.msra.mxu0 %v671
      %1541 = vmatprep.subr.mxu0 0.0
      %1542 = vmatpush1.msra.mxu0 %v672
      %1543 = vmatprep.mubr.f32.mxu0 %v1323
      %1544 = vmatmul.mubr.f32.gmra.mrb[0].mxu0 %v1214
      %v1545 = vpop.f32.mrb[0].mxu0
      %v1546 = vadd.f32 %v1471, %v1545
      %v1547 = vpop.f32.mrb[0].mxu0
      %1548 = vmatprep.mubr.f32.mxu0 %v1324
      %1549 = vmatmul.mubr.f32.gmra.mrb[0].mxu0 %v1215
      %v1550 = vpop.f32.mrb[0].mxu0
      %v1551 = vadd.f32 %v1476, %v1550
      %v1552 = vpop.f32.mrb[0].mxu0
      %1553 = vdwg.mxu0
      %1554 = vmatprep.subr.mxu0 0.0
      %1555 = vmatpush1.msra.mxu0 %v673
      %1556 = vmatprep.subr.mxu0 0.0
      %1557 = vmatpush1.msra.mxu0 %v674
      %1558 = vmatprep.subr.mxu0 0.0
      %1559 = vmatpush1.msra.mxu0 %v675
      %1560 = vmatprep.subr.mxu0 0.0
      %1561 = vmatpush1.msra.mxu0 %v676
      %1562 = vmatprep.subr.mxu0 0.0
      %1563 = vmatpush1.msra.mxu0 %v677
      %1564 = vmatprep.subr.mxu0 0.0
      %1565 = vmatpush1.msra.mxu0 %v678
      %1566 = vmatprep.subr.mxu0 0.0
      %1567 = vmatpush1.msra.mxu0 %v679
      %1568 = vmatprep.subr.mxu0 0.0
      %1569 = vmatpush1.msra.mxu0 %v680
      %1570 = vmatprep.subr.mxu0 0.0
      %1571 = vmatpush1.msra.mxu0 %v681
      %1572 = vmatprep.subr.mxu0 0.0
      %1573 = vmatpush1.msra.mxu0 %v682
      %1574 = vmatprep.subr.mxu0 0.0
      %1575 = vmatpush1.msra.mxu0 %v683
      %1576 = vmatprep.subr.mxu0 0.0
      %1577 = vmatpush1.msra.mxu0 %v684
      %1578 = vmatprep.subr.mxu0 0.0
      %1579 = vmatpush1.msra.mxu0 %v685
      %1580 = vmatprep.subr.mxu0 0.0
      %1581 = vmatpush1.msra.mxu0 %v686
      %1582 = vmatprep.subr.mxu0 0.0
      %1583 = vmatpush1.msra.mxu0 %v687
      %1584 = vmatprep.subr.mxu0 0.0
      %1585 = vmatpush1.msra.mxu0 %v688
      %1586 = vmatprep.subr.mxu0 0.0
      %1587 = vmatpush1.msra.mxu0 %v689
      %1588 = vmatprep.subr.mxu0 0.0
      %1589 = vmatpush1.msra.mxu0 %v690
      %1590 = vmatprep.subr.mxu0 0.0
      %1591 = vmatpush1.msra.mxu0 %v691
      %1592 = vmatprep.subr.mxu0 0.0
      %1593 = vmatpush1.msra.mxu0 %v692
      %1594 = vmatprep.subr.mxu0 0.0
      %1595 = vmatpush1.msra.mxu0 %v693
      %1596 = vmatprep.subr.mxu0 0.0
      %1597 = vmatpush1.msra.mxu0 %v694
      %1598 = vmatprep.subr.mxu0 0.0
      %1599 = vmatpush1.msra.mxu0 %v695
      %1600 = vmatprep.subr.mxu0 0.0
      %1601 = vmatpush1.msra.mxu0 %v696
      %1602 = vmatprep.subr.mxu0 0.0
      %1603 = vmatpush1.msra.mxu0 %v697
      %1604 = vmatprep.subr.mxu0 0.0
      %1605 = vmatpush1.msra.mxu0 %v698
      %1606 = vmatprep.subr.mxu0 0.0
      %1607 = vmatpush1.msra.mxu0 %v699
      %1608 = vmatprep.subr.mxu0 0.0
      %1609 = vmatpush1.msra.mxu0 %v700
      %1610 = vmatprep.subr.mxu0 0.0
      %1611 = vmatpush1.msra.mxu0 %v701
      %1612 = vmatprep.subr.mxu0 0.0
      %1613 = vmatpush1.msra.mxu0 %v702
      %1614 = vmatprep.subr.mxu0 0.0
      %1615 = vmatpush1.msra.mxu0 %v703
      %1616 = vmatprep.subr.mxu0 0.0
      %1617 = vmatpush1.msra.mxu0 %v704
      %1618 = vmatprep.mubr.f32.mxu0 %v1314
      %1619 = vmatmul.mubr.f32.gmra.mrb[0].mxu0 %v1313
      %v1620 = vpop.f32.mrb[0].mxu0
      %v1621 = vadd.f32 %v1546, %v1620
      %v1622 = vpop.f32.mrb[0].mxu0
      %1623 = vmatprep.mubr.f32.mxu0 %v1316
      %1624 = vmatmul.mubr.f32.gmra.mrb[0].mxu0 %v1315
      %v1625 = vpop.f32.mrb[0].mxu0
      %v1626 = vadd.f32 %v1551, %v1625
      %v1627 = vpop.f32.mrb[0].mxu0
      %1628 = vdwg.mxu0
      %1629 = vmatprep.subr.mxu0 0.0
      %1630 = vmatpush1.msra.mxu0 %v705
      %1631 = vmatprep.subr.mxu0 0.0
      %1632 = vmatpush1.msra.mxu0 %v706
      %1633 = vmatprep.subr.mxu0 0.0
      %1634 = vmatpush1.msra.mxu0 %v707
      %1635 = vmatprep.subr.mxu0 0.0
      %1636 = vmatpush1.msra.mxu0 %v716
      %1637 = vmatprep.subr.mxu0 0.0
      %1638 = vmatpush1.msra.mxu0 0.0
      %1639 = vmatprep.subr.mxu0 0.0
      %1640 = vmatpush1.msra.mxu0 0.0
      %1641 = vmatprep.subr.mxu0 0.0
      %1642 = vmatpush1.msra.mxu0 0.0
      %1643 = vmatprep.subr.mxu0 0.0
      %1644 = vmatpush1.msra.mxu0 0.0
      %1645 = vmatprep.subr.mxu0 0.0
      %1646 = vmatpush1.msra.mxu0 0.0
      %1647 = vmatprep.subr.mxu0 0.0
      %1648 = vmatpush1.msra.mxu0 0.0
      %1649 = vmatprep.subr.mxu0 0.0
      %1650 = vmatpush1.msra.mxu0 0.0
      %1651 = vmatprep.subr.mxu0 0.0
      %1652 = vmatpush1.msra.mxu0 0.0
      %1653 = vmatprep.subr.mxu0 0.0
      %1654 = vmatpush1.msra.mxu0 0.0
      %1655 = vmatprep.subr.mxu0 0.0
      %1656 = vmatpush1.msra.mxu0 0.0
      %1657 = vmatprep.subr.mxu0 0.0
      %1658 = vmatpush1.msra.mxu0 0.0
      %1659 = vmatprep.subr.mxu0 0.0
      %1660 = vmatpush1.msra.mxu0 0.0
      %1661 = vmatprep.subr.mxu0 0.0
      %1662 = vmatpush1.msra.mxu0 0.0
      %1663 = vmatprep.subr.mxu0 0.0
      %1664 = vmatpush1.msra.mxu0 0.0
      %1665 = vmatprep.subr.mxu0 0.0
      %1666 = vmatpush1.msra.mxu0 0.0
      %1667 = vmatprep.subr.mxu0 0.0
      %1668 = vmatpush1.msra.mxu0 0.0
      %1669 = vmatprep.subr.mxu0 0.0
      %1670 = vmatpush1.msra.mxu0 0.0
      %1671 = vmatprep.subr.mxu0 0.0
      %1672 = vmatpush1.msra.mxu0 0.0
      %1673 = vmatprep.subr.mxu0 0.0
      %1674 = vmatpush1.msra.mxu0 0.0
      %1675 = vmatprep.subr.mxu0 0.0
      %1676 = vmatpush1.msra.mxu0 0.0
      %1677 = vmatprep.subr.mxu0 0.0
      %1678 = vmatpush1.msra.mxu0 0.0
      %1679 = vmatprep.subr.mxu0 0.0
      %1680 = vmatpush1.msra.mxu0 0.0
      %1681 = vmatprep.subr.mxu0 0.0
      %1682 = vmatpush1.msra.mxu0 0.0
      %1683 = vmatprep.subr.mxu0 0.0
      %1684 = vmatpush1.msra.mxu0 0.0
      %1685 = vmatprep.subr.mxu0 0.0
      %1686 = vmatpush1.msra.mxu0 0.0
      %1687 = vmatprep.subr.mxu0 0.0
      %1688 = vmatpush1.msra.mxu0 0.0
      %1689 = vmatprep.subr.mxu0 0.0
      %1690 = vmatpush1.msra.mxu0 0.0
      %1691 = vmatprep.subr.mxu0 0.0
      %1692 = vmatpush1.msra.mxu0 0.0
      %1693 = vmatprep.mubr.f32.mxu0 0.0
      %1694 = vmatmul.mubr.f32.gmra.mrb[0].mxu0 %v1325
      %v1695 = vpop.f32.mrb[0].mxu0
      %v1696 = vadd.f32 %v1621, %v1695
      %v1697 = vpop.f32.mrb[0].mxu0
      %1698 = vmatprep.mubr.f32.mxu0 0.0
      %1699 = vmatmul.mubr.f32.gmra.mrb[0].mxu0 %v1327
      %v1700 = vpop.f32.mrb[0].mxu0
      %v1701 = vadd.f32 %v1626, %v1700
      %v1702 = vpop.f32.mrb[0].mxu0
      %1703 = vdwg.mxu0
      %v1704 = vmax.f32 %v1085, %v1696
      %v1705 = vmax.f32 %v1090, %v1701
      %1706 = vrot.lane.b32.xlu0 %v318, 42
      %v1707 = vpop.permute.xlu0 %1706
      %1708 = vrot.lane.b32.xlu0 %v319, 42
      %v1709 = vpop.permute.xlu0 %1708
      %1712 = vrot.lane.b32.xlu0 %v316, 81
      %v1713 = vpop.permute.xlu0 %1712
      %1714 = vrot.lane.b32.xlu0 %v317, 81
      %v1715 = vpop.permute.xlu0 %1714
      %1718 = vrot.lane.b32.xlu0 %v318, 123
      %v1719 = vpop.permute.xlu0 %1718
      %1720 = vrot.lane.b32.xlu0 %v319, 123
      %v1721 = vpop.permute.xlu0 %1720
      %1724 = vrot.lane.b32.xlu0 %v316, 34
      %v1725 = vpop.permute.xlu0 %1724
      %1726 = vrot.lane.b32.xlu0 %v317, 34
      %v1727 = vpop.permute.xlu0 %1726
      %1730 = vrot.lane.b32.xlu0 %v385, 82
      %v1731 = vpop.permute.xlu0 %1730
      %1732 = vrot.lane.b32.xlu0 %v384, 82
      %v1733 = vpop.permute.xlu0 %1732
      %1736 = vrot.lane.b32.xlu0 %v394, 124
      %v1737 = vpop.permute.xlu0 %1736
      %1738 = vrot.lane.b32.xlu0 %v393, 124
      %v1739 = vpop.permute.xlu0 %1738
      %1742 = vrot.lane.b32.xlu0 %v385, 35
      %v1743 = vpop.permute.xlu0 %1742
      %1744 = vrot.lane.b32.xlu0 %v384, 35
      %v1745 = vpop.permute.xlu0 %1744
      %1748 = vrot.lane.b32.xlu0 %v394, 77
      %v1749 = vpop.permute.xlu0 %1748
      %1750 = vrot.lane.b32.xlu0 %v393, 77
      %v1751 = vpop.permute.xlu0 %1750
      %1754 = vrot.lane.b32.xlu0 %v385, 116
      %v1755 = vpop.permute.xlu0 %1754
      %1756 = vrot.lane.b32.xlu0 %v384, 116
      %v1757 = vpop.permute.xlu0 %1756
      %1760 = vrot.lane.b32.xlu0 %v421, 36
      %v1761 = vpop.permute.xlu0 %1760
      %1762 = vrot.lane.b32.xlu0 %v420, 36
      %v1763 = vpop.permute.xlu0 %1762
      %1766 = vrot.lane.b32.xlu0 %v1179, 78
      %v1767 = vpop.permute.xlu0 %1766
      %1768 = vrot.lane.b32.xlu0 %v1178, 78
      %v1769 = vpop.permute.xlu0 %1768
      %1772 = vrot.lane.b32.xlu0 %v421, 117
      %v1773 = vpop.permute.xlu0 %1772
      %1774 = vrot.lane.b32.xlu0 %v420, 117
      %v1775 = vpop.permute.xlu0 %1774
      %1778 = vrot.lane.b32.xlu0 %v1179, 31
      %v1779 = vpop.permute.xlu0 %1778
      %1780 = vrot.lane.b32.xlu0 %v1178, 31
      %v1781 = vpop.permute.xlu0 %1780
      %1784 = vrot.lane.b32.xlu0 %v421, 70
      %v1785 = vpop.permute.xlu0 %1784
      %1786 = vrot.lane.b32.xlu0 %v420, 70
      %v1787 = vpop.permute.xlu0 %1786
      %vm1790 = vcmask 1045504
      %v1791 = vrot.slane %v312, 2
      %v1792 = vrot.slane %v313, 2
      %v1793 = vsel %vm1790, %v1791, %v1792
      %1794 = vrot.lane.b32.xlu0 %v1793, 118
      %v1795 = vpop.permute.xlu0 %1794
      %1796 = vrot.lane.b32.xlu0 %v1792, 118
      %v1797 = vpop.permute.xlu0 %1796
      %v1800 = vsel %vm428, %v316, %v1707
      %v1801 = vsel %vm428, %v317, %v1709
      %v1802 = vsel %vm431, %v1800, %v1713
      %v1803 = vsel %vm431, %v1801, %v1715
      %v1804 = vsel %vm434, %v1802, %v1719
      %v1805 = vsel %vm434, %v1803, %v1721
      %v1806 = vsel %vm437, %v1719, %v1725
      %v1807 = vsel %vm437, %v1721, %v1727
      %v1808 = vsel %vm440, %v1806, %v1731
      %v1809 = vsel %vm440, %v1807, %v1733
      %v1810 = vsel %vm443, %v1808, %v1737
      %v1811 = vsel %vm443, %v1809, %v1739
      %v1812 = vsel %vm446, %v1737, %v1743
      %v1813 = vsel %vm446, %v1739, %v1745
      %v1814 = vsel %vm449, %v1812, %v1749
      %v1815 = vsel %vm449, %v1813, %v1751
      %v1816 = vsel %vm452, %v1814, %v1755
      %v1817 = vsel %vm452, %v1815, %v1757
      %v1818 = vsel %vm455, %v1755, %v1761
      %v1819 = vsel %vm455, %v1757, %v1763
      %v1820 = vsel %vm458, %v1818, %v1767
      %v1821 = vsel %vm458, %v1819, %v1769
      %v1822 = vsel %vm461, %v1820, %v1773
      %v1823 = vsel %vm461, %v1821, %v1775
      %v1824 = vsel %vm464, %v1773, %v1779
      %v1825 = vsel %vm464, %v1775, %v1781
      %v1826 = vsel %vm467, %v1824, %v1785
      %v1827 = vsel %vm467, %v1825, %v1787
      %v1828 = vsel %vm470, %v1826, %v1795
      %v1829 = vsel %vm470, %v1827, %v1797
      %1830 = vrot.lane.b32.xlu0 %v316, 40
      %v1831 = vpop.permute.xlu0 %1830
      %1832 = vrot.lane.b32.xlu0 %v317, 40
      %v1833 = vpop.permute.xlu0 %1832
      %v1836 = vsel %vm437, %v1106, %v1831
      %v1837 = vsel %vm437, %v1108, %v1833
      %v1838 = vsel %vm440, %v1836, %v1118
      %v1839 = vsel %vm440, %v1837, %v1120
      %v1840 = vsel %vm443, %v1838, %v1124
      %v1841 = vsel %vm443, %v1839, %v1126
      %v1848 = vrot.slane %v1190, 2
      %v1849 = vrot.slane %v1191, 2
      %v1850 = vsel %vm1790, %v1848, %v1849
      %v1851 = vrot.slane %v1840, 2
      %v1852 = vrot.slane %v1841, 2
      %v1853 = vsel %vm1790, %v1851, %v1852
      %v1854 = vrot.slane %v1200, 2
      %v1855 = vrot.slane %v1201, 2
      %v1856 = vsel %vm1790, %v1854, %v1855
      %1857 = vrot.lane.b32.xlu0 %v1850, 32
      %v1858 = vpop.permute.xlu0 %1857
      %1859 = vrot.lane.b32.xlu0 %v1853, 32
      %v1860 = vpop.permute.xlu0 %1859
      %1861 = vrot.lane.b32.xlu0 %v1856, 32
      %v1862 = vpop.permute.xlu0 %1861
      %1863 = vrot.lane.b32.xlu0 %v1849, 32
      %v1864 = vpop.permute.xlu0 %1863
      %1865 = vrot.lane.b32.xlu0 %v1852, 32
      %v1866 = vpop.permute.xlu0 %1865
      %1867 = vrot.lane.b32.xlu0 %v1855, 32
      %v1868 = vpop.permute.xlu0 %1867
      %v1869 = vsel %vm564, %v1858, %v1860
      %v1870 = vsel %vm564, %v1860, %v1862
      %v1871 = vsel %vm564, %v1864, %v1866
      %v1872 = vsel %vm564, %v1866, %v1868
      %v1879 = vsel %vm564, %v1795, %v1858
      %v1880 = vsel %vm564, %v1797, %v1864
      %v1881 = vsel %vm709, %v1862, 0
      %v1883 = vsel %vm709, %v1868, 0
      %1885 = vmatprep.subr.mxu0 0.0
      %1886 = vmatpush1.msra.mxu0 %v577
      %1887 = vmatprep.subr.mxu0 0.0
      %1888 = vmatpush1.msra.mxu0 %v578
      %1889 = vmatprep.subr.mxu0 0.0
      %1890 = vmatpush1.msra.mxu0 %v579
      %1891 = vmatprep.subr.mxu0 0.0
      %1892 = vmatpush1.msra.mxu0 %v580
      %1893 = vmatprep.subr.mxu0 0.0
      %1894 = vmatpush1.msra.mxu0 %v581
      %1895 = vmatprep.subr.mxu0 0.0
      %1896 = vmatpush1.msra.mxu0 %v582
      %1897 = vmatprep.subr.mxu0 0.0
      %1898 = vmatpush1.msra.mxu0 %v583
      %1899 = vmatprep.subr.mxu0 0.0
      %1900 = vmatpush1.msra.mxu0 %v584
      %1901 = vmatprep.subr.mxu0 0.0
      %1902 = vmatpush1.msra.mxu0 %v585
      %1903 = vmatprep.subr.mxu0 0.0
      %1904 = vmatpush1.msra.mxu0 %v586
      %1905 = vmatprep.subr.mxu0 0.0
      %1906 = vmatpush1.msra.mxu0 %v587
      %1907 = vmatprep.subr.mxu0 0.0
      %1908 = vmatpush1.msra.mxu0 %v588
      %1909 = vmatprep.subr.mxu0 0.0
      %1910 = vmatpush1.msra.mxu0 %v589
      %1911 = vmatprep.subr.mxu0 0.0
      %1912 = vmatpush1.msra.mxu0 %v590
      %1913 = vmatprep.subr.mxu0 0.0
      %1914 = vmatpush1.msra.mxu0 %v591
      %1915 = vmatprep.subr.mxu0 0.0
      %1916 = vmatpush1.msra.mxu0 %v592
      %1917 = vmatprep.subr.mxu0 0.0
      %1918 = vmatpush1.msra.mxu0 %v593
      %1919 = vmatprep.subr.mxu0 0.0
      %1920 = vmatpush1.msra.mxu0 %v594
      %1921 = vmatprep.subr.mxu0 0.0
      %1922 = vmatpush1.msra.mxu0 %v595
      %1923 = vmatprep.subr.mxu0 0.0
      %1924 = vmatpush1.msra.mxu0 %v596
      %1925 = vmatprep.subr.mxu0 0.0
      %1926 = vmatpush1.msra.mxu0 %v597
      %1927 = vmatprep.subr.mxu0 0.0
      %1928 = vmatpush1.msra.mxu0 %v598
      %1929 = vmatprep.subr.mxu0 0.0
      %1930 = vmatpush1.msra.mxu0 %v599
      %1931 = vmatprep.subr.mxu0 0.0
      %1932 = vmatpush1.msra.mxu0 %v600
      %1933 = vmatprep.subr.mxu0 0.0
      %1934 = vmatpush1.msra.mxu0 %v601
      %1935 = vmatprep.subr.mxu0 0.0
      %1936 = vmatpush1.msra.mxu0 %v602
      %1937 = vmatprep.subr.mxu0 0.0
      %1938 = vmatpush1.msra.mxu0 %v603
      %1939 = vmatprep.subr.mxu0 0.0
      %1940 = vmatpush1.msra.mxu0 %v604
      %1941 = vmatprep.subr.mxu0 0.0
      %1942 = vmatpush1.msra.mxu0 %v605
      %1943 = vmatprep.subr.mxu0 0.0
      %1944 = vmatpush1.msra.mxu0 %v606
      %1945 = vmatprep.subr.mxu0 0.0
      %1946 = vmatpush1.msra.mxu0 %v607
      %1947 = vmatprep.subr.mxu0 0.0
      %1948 = vmatpush1.msra.mxu0 %v608
      %1949 = vmatprep.mubr.f32.mxu0 %v1810
      %1950 = vmatmul.mubr.f32.gmra.mrb[0].mxu0 %v1804
      %v1951 = vpop.f32.mrb[0].mxu0
      %v1952 = vadd.f32 0.0, %v1951
      %v1953 = vpop.f32.mrb[0].mxu0
      %1954 = vmatprep.mubr.f32.mxu0 %v1811
      %1955 = vmatmul.mubr.f32.gmra.mrb[0].mxu0 %v1805
      %v1956 = vpop.f32.mrb[0].mxu0
      %v1957 = vadd.f32 0.0, %v1956
      %v1958 = vpop.f32.mrb[0].mxu0
      %1959 = vdwg.mxu0
      %1960 = vmatprep.subr.mxu0 0.0
      %1961 = vmatpush1.msra.mxu0 %v609
      %1962 = vmatprep.subr.mxu0 0.0
      %1963 = vmatpush1.msra.mxu0 %v610
      %1964 = vmatprep.subr.mxu0 0.0
      %1965 = vmatpush1.msra.mxu0 %v611
      %1966 = vmatprep.subr.mxu0 0.0
      %1967 = vmatpush1.msra.mxu0 %v612
      %1968 = vmatprep.subr.mxu0 0.0
      %1969 = vmatpush1.msra.mxu0 %v613
      %1970 = vmatprep.subr.mxu0 0.0
      %1971 = vmatpush1.msra.mxu0 %v614
      %1972 = vmatprep.subr.mxu0 0.0
      %1973 = vmatpush1.msra.mxu0 %v615
      %1974 = vmatprep.subr.mxu0 0.0
      %1975 = vmatpush1.msra.mxu0 %v616
      %1976 = vmatprep.subr.mxu0 0.0
      %1977 = vmatpush1.msra.mxu0 %v617
      %1978 = vmatprep.subr.mxu0 0.0
      %1979 = vmatpush1.msra.mxu0 %v618
      %1980 = vmatprep.subr.mxu0 0.0
      %1981 = vmatpush1.msra.mxu0 %v619
      %1982 = vmatprep.subr.mxu0 0.0
      %1983 = vmatpush1.msra.mxu0 %v620
      %1984 = vmatprep.subr.mxu0 0.0
      %1985 = vmatpush1.msra.mxu0 %v621
      %1986 = vmatprep.subr.mxu0 0.0
      %1987 = vmatpush1.msra.mxu0 %v622
      %1988 = vmatprep.subr.mxu0 0.0
      %1989 = vmatpush1.msra.mxu0 %v623
      %1990 = vmatprep.subr.mxu0 0.0
      %1991 = vmatpush1.msra.mxu0 %v624
      %1992 = vmatprep.subr.mxu0 0.0
      %1993 = vmatpush1.msra.mxu0 %v625
      %1994 = vmatprep.subr.mxu0 0.0
      %1995 = vmatpush1.msra.mxu0 %v626
      %1996 = vmatprep.subr.mxu0 0.0
      %1997 = vmatpush1.msra.mxu0 %v627
      %1998 = vmatprep.subr.mxu0 0.0
      %1999 = vmatpush1.msra.mxu0 %v628
      %2000 = vmatprep.subr.mxu0 0.0
      %2001 = vmatpush1.msra.mxu0 %v629
      %2002 = vmatprep.subr.mxu0 0.0
      %2003 = vmatpush1.msra.mxu0 %v630
      %2004 = vmatprep.subr.mxu0 0.0
      %2005 = vmatpush1.msra.mxu0 %v631
      %2006 = vmatprep.subr.mxu0 0.0
      %2007 = vmatpush1.msra.mxu0 %v632
      %2008 = vmatprep.subr.mxu0 0.0
      %2009 = vmatpush1.msra.mxu0 %v633
      %2010 = vmatprep.subr.mxu0 0.0
      %2011 = vmatpush1.msra.mxu0 %v634
      %2012 = vmatprep.subr.mxu0 0.0
      %2013 = vmatpush1.msra.mxu0 %v635
      %2014 = vmatprep.subr.mxu0 0.0
      %2015 = vmatpush1.msra.mxu0 %v636
      %2016 = vmatprep.subr.mxu0 0.0
      %2017 = vmatpush1.msra.mxu0 %v637
      %2018 = vmatprep.subr.mxu0 0.0
      %2019 = vmatpush1.msra.mxu0 %v638
      %2020 = vmatprep.subr.mxu0 0.0
      %2021 = vmatpush1.msra.mxu0 %v639
      %2022 = vmatprep.subr.mxu0 0.0
      %2023 = vmatpush1.msra.mxu0 %v640
      %2024 = vmatprep.mubr.f32.mxu0 %v1822
      %2025 = vmatmul.mubr.f32.gmra.mrb[0].mxu0 %v1816
      %v2026 = vpop.f32.mrb[0].mxu0
      %v2027 = vadd.f32 %v1952, %v2026
      %v2028 = vpop.f32.mrb[0].mxu0
      %2029 = vmatprep.mubr.f32.mxu0 %v1823
      %2030 = vmatmul.mubr.f32.gmra.mrb[0].mxu0 %v1817
      %v2031 = vpop.f32.mrb[0].mxu0
      %v2032 = vadd.f32 %v1957, %v2031
      %v2033 = vpop.f32.mrb[0].mxu0
      %2034 = vdwg.mxu0
      %2035 = vmatprep.subr.mxu0 0.0
      %2036 = vmatpush1.msra.mxu0 %v641
      %2037 = vmatprep.subr.mxu0 0.0
      %2038 = vmatpush1.msra.mxu0 %v642
      %2039 = vmatprep.subr.mxu0 0.0
      %2040 = vmatpush1.msra.mxu0 %v643
      %2041 = vmatprep.subr.mxu0 0.0
      %2042 = vmatpush1.msra.mxu0 %v644
      %2043 = vmatprep.subr.mxu0 0.0
      %2044 = vmatpush1.msra.mxu0 %v645
      %2045 = vmatprep.subr.mxu0 0.0
      %2046 = vmatpush1.msra.mxu0 %v646
      %2047 = vmatprep.subr.mxu0 0.0
      %2048 = vmatpush1.msra.mxu0 %v647
      %2049 = vmatprep.subr.mxu0 0.0
      %2050 = vmatpush1.msra.mxu0 %v648
      %2051 = vmatprep.subr.mxu0 0.0
      %2052 = vmatpush1.msra.mxu0 %v649
      %2053 = vmatprep.subr.mxu0 0.0
      %2054 = vmatpush1.msra.mxu0 %v650
      %2055 = vmatprep.subr.mxu0 0.0
      %2056 = vmatpush1.msra.mxu0 %v651
      %2057 = vmatprep.subr.mxu0 0.0
      %2058 = vmatpush1.msra.mxu0 %v652
      %2059 = vmatprep.subr.mxu0 0.0
      %2060 = vmatpush1.msra.mxu0 %v653
      %2061 = vmatprep.subr.mxu0 0.0
      %2062 = vmatpush1.msra.mxu0 %v654
      %2063 = vmatprep.subr.mxu0 0.0
      %2064 = vmatpush1.msra.mxu0 %v655
      %2065 = vmatprep.subr.mxu0 0.0
      %2066 = vmatpush1.msra.mxu0 %v656
      %2067 = vmatprep.subr.mxu0 0.0
      %2068 = vmatpush1.msra.mxu0 %v657
      %2069 = vmatprep.subr.mxu0 0.0
      %2070 = vmatpush1.msra.mxu0 %v658
      %2071 = vmatprep.subr.mxu0 0.0
      %2072 = vmatpush1.msra.mxu0 %v659
      %2073 = vmatprep.subr.mxu0 0.0
      %2074 = vmatpush1.msra.mxu0 %v660
      %2075 = vmatprep.subr.mxu0 0.0
      %2076 = vmatpush1.msra.mxu0 %v661
      %2077 = vmatprep.subr.mxu0 0.0
      %2078 = vmatpush1.msra.mxu0 %v662
      %2079 = vmatprep.subr.mxu0 0.0
      %2080 = vmatpush1.msra.mxu0 %v663
      %2081 = vmatprep.subr.mxu0 0.0
      %2082 = vmatpush1.msra.mxu0 %v664
      %2083 = vmatprep.subr.mxu0 0.0
      %2084 = vmatpush1.msra.mxu0 %v665
      %2085 = vmatprep.subr.mxu0 0.0
      %2086 = vmatpush1.msra.mxu0 %v666
      %2087 = vmatprep.subr.mxu0 0.0
      %2088 = vmatpush1.msra.mxu0 %v667
      %2089 = vmatprep.subr.mxu0 0.0
      %2090 = vmatpush1.msra.mxu0 %v668
      %2091 = vmatprep.subr.mxu0 0.0
      %2092 = vmatpush1.msra.mxu0 %v669
      %2093 = vmatprep.subr.mxu0 0.0
      %2094 = vmatpush1.msra.mxu0 %v670
      %2095 = vmatprep.subr.mxu0 0.0
      %2096 = vmatpush1.msra.mxu0 %v671
      %2097 = vmatprep.subr.mxu0 0.0
      %2098 = vmatpush1.msra.mxu0 %v672
      %2099 = vmatprep.mubr.f32.mxu0 %v1879
      %2100 = vmatmul.mubr.f32.gmra.mrb[0].mxu0 %v1828
      %v2101 = vpop.f32.mrb[0].mxu0
      %v2102 = vadd.f32 %v2027, %v2101
      %v2103 = vpop.f32.mrb[0].mxu0
      %2104 = vmatprep.mubr.f32.mxu0 %v1880
      %2105 = vmatmul.mubr.f32.gmra.mrb[0].mxu0 %v1829
      %v2106 = vpop.f32.mrb[0].mxu0
      %v2107 = vadd.f32 %v2032, %v2106
      %v2108 = vpop.f32.mrb[0].mxu0
      %2109 = vdwg.mxu0
      %2110 = vmatprep.subr.mxu0 0.0
      %2111 = vmatpush1.msra.mxu0 %v673
      %2112 = vmatprep.subr.mxu0 0.0
      %2113 = vmatpush1.msra.mxu0 %v674
      %2114 = vmatprep.subr.mxu0 0.0
      %2115 = vmatpush1.msra.mxu0 %v675
      %2116 = vmatprep.subr.mxu0 0.0
      %2117 = vmatpush1.msra.mxu0 %v676
      %2118 = vmatprep.subr.mxu0 0.0
      %2119 = vmatpush1.msra.mxu0 %v677
      %2120 = vmatprep.subr.mxu0 0.0
      %2121 = vmatpush1.msra.mxu0 %v678
      %2122 = vmatprep.subr.mxu0 0.0
      %2123 = vmatpush1.msra.mxu0 %v679
      %2124 = vmatprep.subr.mxu0 0.0
      %2125 = vmatpush1.msra.mxu0 %v680
      %2126 = vmatprep.subr.mxu0 0.0
      %2127 = vmatpush1.msra.mxu0 %v681
      %2128 = vmatprep.subr.mxu0 0.0
      %2129 = vmatpush1.msra.mxu0 %v682
      %2130 = vmatprep.subr.mxu0 0.0
      %2131 = vmatpush1.msra.mxu0 %v683
      %2132 = vmatprep.subr.mxu0 0.0
      %2133 = vmatpush1.msra.mxu0 %v684
      %2134 = vmatprep.subr.mxu0 0.0
      %2135 = vmatpush1.msra.mxu0 %v685
      %2136 = vmatprep.subr.mxu0 0.0
      %2137 = vmatpush1.msra.mxu0 %v686
      %2138 = vmatprep.subr.mxu0 0.0
      %2139 = vmatpush1.msra.mxu0 %v687
      %2140 = vmatprep.subr.mxu0 0.0
      %2141 = vmatpush1.msra.mxu0 %v688
      %2142 = vmatprep.subr.mxu0 0.0
      %2143 = vmatpush1.msra.mxu0 %v689
      %2144 = vmatprep.subr.mxu0 0.0
      %2145 = vmatpush1.msra.mxu0 %v690
      %2146 = vmatprep.subr.mxu0 0.0
      %2147 = vmatpush1.msra.mxu0 %v691
      %2148 = vmatprep.subr.mxu0 0.0
      %2149 = vmatpush1.msra.mxu0 %v692
      %2150 = vmatprep.subr.mxu0 0.0
      %2151 = vmatpush1.msra.mxu0 %v693
      %2152 = vmatprep.subr.mxu0 0.0
      %2153 = vmatpush1.msra.mxu0 %v694
      %2154 = vmatprep.subr.mxu0 0.0
      %2155 = vmatpush1.msra.mxu0 %v695
      %2156 = vmatprep.subr.mxu0 0.0
      %2157 = vmatpush1.msra.mxu0 %v696
      %2158 = vmatprep.subr.mxu0 0.0
      %2159 = vmatpush1.msra.mxu0 %v697
      %2160 = vmatprep.subr.mxu0 0.0
      %2161 = vmatpush1.msra.mxu0 %v698
      %2162 = vmatprep.subr.mxu0 0.0
      %2163 = vmatpush1.msra.mxu0 %v699
      %2164 = vmatprep.subr.mxu0 0.0
      %2165 = vmatpush1.msra.mxu0 %v700
      %2166 = vmatprep.subr.mxu0 0.0
      %2167 = vmatpush1.msra.mxu0 %v701
      %2168 = vmatprep.subr.mxu0 0.0
      %2169 = vmatpush1.msra.mxu0 %v702
      %2170 = vmatprep.subr.mxu0 0.0
      %2171 = vmatpush1.msra.mxu0 %v703
      %2172 = vmatprep.subr.mxu0 0.0
      %2173 = vmatpush1.msra.mxu0 %v704
      %2174 = vmatprep.mubr.f32.mxu0 %v1870
      %2175 = vmatmul.mubr.f32.gmra.mrb[0].mxu0 %v1869
      %v2176 = vpop.f32.mrb[0].mxu0
      %v2177 = vadd.f32 %v2102, %v2176
      %v2178 = vpop.f32.mrb[0].mxu0
      %2179 = vmatprep.mubr.f32.mxu0 %v1872
      %2180 = vmatmul.mubr.f32.gmra.mrb[0].mxu0 %v1871
      %v2181 = vpop.f32.mrb[0].mxu0
      %v2182 = vadd.f32 %v2107, %v2181
      %v2183 = vpop.f32.mrb[0].mxu0
      %2184 = vdwg.mxu0
      %2185 = vmatprep.subr.mxu0 0.0
      %2186 = vmatpush1.msra.mxu0 %v705
      %2187 = vmatprep.subr.mxu0 0.0
      %2188 = vmatpush1.msra.mxu0 %v706
      %2189 = vmatprep.subr.mxu0 0.0
      %2190 = vmatpush1.msra.mxu0 %v707
      %2191 = vmatprep.subr.mxu0 0.0
      %2192 = vmatpush1.msra.mxu0 %v716
      %2193 = vmatprep.subr.mxu0 0.0
      %2194 = vmatpush1.msra.mxu0 0.0
      %2195 = vmatprep.subr.mxu0 0.0
      %2196 = vmatpush1.msra.mxu0 0.0
      %2197 = vmatprep.subr.mxu0 0.0
      %2198 = vmatpush1.msra.mxu0 0.0
      %2199 = vmatprep.subr.mxu0 0.0
      %2200 = vmatpush1.msra.mxu0 0.0
      %2201 = vmatprep.subr.mxu0 0.0
      %2202 = vmatpush1.msra.mxu0 0.0
      %2203 = vmatprep.subr.mxu0 0.0
      %2204 = vmatpush1.msra.mxu0 0.0
      %2205 = vmatprep.subr.mxu0 0.0
      %2206 = vmatpush1.msra.mxu0 0.0
      %2207 = vmatprep.subr.mxu0 0.0
      %2208 = vmatpush1.msra.mxu0 0.0
      %2209 = vmatprep.subr.mxu0 0.0
      %2210 = vmatpush1.msra.mxu0 0.0
      %2211 = vmatprep.subr.mxu0 0.0
      %2212 = vmatpush1.msra.mxu0 0.0
      %2213 = vmatprep.subr.mxu0 0.0
      %2214 = vmatpush1.msra.mxu0 0.0
      %2215 = vmatprep.subr.mxu0 0.0
      %2216 = vmatpush1.msra.mxu0 0.0
      %2217 = vmatprep.subr.mxu0 0.0
      %2218 = vmatpush1.msra.mxu0 0.0
      %2219 = vmatprep.subr.mxu0 0.0
      %2220 = vmatpush1.msra.mxu0 0.0
      %2221 = vmatprep.subr.mxu0 0.0
      %2222 = vmatpush1.msra.mxu0 0.0
      %2223 = vmatprep.subr.mxu0 0.0
      %2224 = vmatpush1.msra.mxu0 0.0
      %2225 = vmatprep.subr.mxu0 0.0
      %2226 = vmatpush1.msra.mxu0 0.0
      %2227 = vmatprep.subr.mxu0 0.0
      %2228 = vmatpush1.msra.mxu0 0.0
      %2229 = vmatprep.subr.mxu0 0.0
      %2230 = vmatpush1.msra.mxu0 0.0
      %2231 = vmatprep.subr.mxu0 0.0
      %2232 = vmatpush1.msra.mxu0 0.0
      %2233 = vmatprep.subr.mxu0 0.0
      %2234 = vmatpush1.msra.mxu0 0.0
      %2235 = vmatprep.subr.mxu0 0.0
      %2236 = vmatpush1.msra.mxu0 0.0
      %2237 = vmatprep.subr.mxu0 0.0
      %2238 = vmatpush1.msra.mxu0 0.0
      %2239 = vmatprep.subr.mxu0 0.0
      %2240 = vmatpush1.msra.mxu0 0.0
      %2241 = vmatprep.subr.mxu0 0.0
      %2242 = vmatpush1.msra.mxu0 0.0
      %2243 = vmatprep.subr.mxu0 0.0
      %2244 = vmatpush1.msra.mxu0 0.0
      %2245 = vmatprep.subr.mxu0 0.0
      %2246 = vmatpush1.msra.mxu0 0.0
      %2247 = vmatprep.subr.mxu0 0.0
      %2248 = vmatpush1.msra.mxu0 0.0
      %2249 = vmatprep.mubr.f32.mxu0 0.0
      %2250 = vmatmul.mubr.f32.gmra.mrb[0].mxu0 %v1881
      %v2251 = vpop.f32.mrb[0].mxu0
      %v2252 = vadd.f32 %v2177, %v2251
      %v2253 = vpop.f32.mrb[0].mxu0
      %2254 = vmatprep.mubr.f32.mxu0 0.0
      %2255 = vmatmul.mubr.f32.gmra.mrb[0].mxu0 %v1883
      %v2256 = vpop.f32.mrb[0].mxu0
      %v2257 = vadd.f32 %v2182, %v2256
      %v2258 = vpop.f32.mrb[0].mxu0
      %2259 = vdwg.mxu0
      %v2260 = vmax.f32 %v1704, %v2252
      %v2261 = vmax.f32 %v1705, %v2257
      %2262 = vrot.lane.b32.xlu0 %v318, 34
      %v2263 = vpop.permute.xlu0 %2262
      %2264 = vrot.lane.b32.xlu0 %v319, 34
      %v2265 = vpop.permute.xlu0 %2264
      %2268 = vrot.lane.b32.xlu0 %v394, 116
      %v2269 = vpop.permute.xlu0 %2268
      %2270 = vrot.lane.b32.xlu0 %v393, 116
      %v2271 = vpop.permute.xlu0 %2270
      %2274 = vrot.lane.b32.xlu0 %v1179, 36
      %v2275 = vpop.permute.xlu0 %2274
      %2276 = vrot.lane.b32.xlu0 %v1178, 36
      %v2277 = vpop.permute.xlu0 %2276
      %2280 = vrot.lane.b32.xlu0 %v421, 75
      %v2281 = vpop.permute.xlu0 %2280
      %2282 = vrot.lane.b32.xlu0 %v420, 75
      %v2283 = vpop.permute.xlu0 %2282
      %2286 = vrot.lane.b32.xlu0 %v1179, 117
      %v2287 = vpop.permute.xlu0 %2286
      %2288 = vrot.lane.b32.xlu0 %v1178, 117
      %v2289 = vpop.permute.xlu0 %2288
      %2292 = vrot.lane.b32.xlu0 %v421, 28
      %v2293 = vpop.permute.xlu0 %2292
      %2294 = vrot.lane.b32.xlu0 %v420, 28
      %v2295 = vpop.permute.xlu0 %2294
      %2298 = vrot.lane.b32.xlu0 %v1179, 70
      %v2299 = vpop.permute.xlu0 %2298
      %2300 = vrot.lane.b32.xlu0 %v1178, 70
      %v2301 = vpop.permute.xlu0 %2300
      %v2304 = vrot.slane %v314, 2
      %v2305 = vrot.slane %v315, 2
      %v2306 = vsel %vm1790, %v2304, %v2305
      %2307 = vrot.lane.b32.xlu0 %v2306, 118
      %v2308 = vpop.permute.xlu0 %2307
      %2309 = vrot.lane.b32.xlu0 %v2305, 118
      %v2310 = vpop.permute.xlu0 %2309
      %v2313 = vsel %vm437, %v486, %v2263
      %v2314 = vsel %vm437, %v488, %v2265
      %v2315 = vsel %vm440, %v2313, %v498
      %v2316 = vsel %vm440, %v2314, %v500
      %v2317 = vsel %vm443, %v2315, %v504
      %v2318 = vsel %vm443, %v2316, %v506
      %v2319 = vsel %vm452, %v535, %v2269
      %v2320 = vsel %vm452, %v536, %v2271
      %v2321 = vsel %vm455, %v2269, %v2275
      %v2322 = vsel %vm455, %v2271, %v2277
      %v2323 = vsel %vm458, %v2321, %v2281
      %v2324 = vsel %vm458, %v2322, %v2283
      %v2325 = vsel %vm461, %v2323, %v2287
      %v2326 = vsel %vm461, %v2324, %v2289
      %v2327 = vsel %vm464, %v2287, %v2293
      %v2328 = vsel %vm464, %v2289, %v2295
      %v2329 = vsel %vm467, %v2327, %v2299
      %v2330 = vsel %vm467, %v2328, %v2301
      %v2331 = vsel %vm470, %v2329, %v2308
      %v2332 = vsel %vm470, %v2330, %v2310
      %2333 = vrot.lane.b32.xlu0 %v312, 125
      %v2334 = vpop.permute.xlu0 %2333
      %2335 = vrot.lane.b32.xlu0 %v313, 125
      %v2336 = vpop.permute.xlu0 %2335
      %2339 = vrot.lane.b32.xlu0 %v314, 39
      %v2340 = vpop.permute.xlu0 %2339
      %2341 = vrot.lane.b32.xlu0 %v315, 39
      %v2342 = vpop.permute.xlu0 %2341
      %2345 = vrot.lane.b32.xlu0 %v312, 78
      %v2346 = vpop.permute.xlu0 %2345
      %2347 = vrot.lane.b32.xlu0 %v313, 78
      %v2348 = vpop.permute.xlu0 %2347
      %2351 = vrot.lane.b32.xlu0 %v314, 120
      %v2352 = vpop.permute.xlu0 %2351
      %2353 = vrot.lane.b32.xlu0 %v315, 120
      %v2354 = vpop.permute.xlu0 %2353
      %2357 = vrot.lane.b32.xlu0 %v318, 40
      %v2358 = vpop.permute.xlu0 %2357
      %2359 = vrot.lane.b32.xlu0 %v319, 40
      %v2360 = vpop.permute.xlu0 %2359
      %2363 = vrot.lane.b32.xlu0 %v316, 79
      %v2364 = vpop.permute.xlu0 %2363
      %2365 = vrot.lane.b32.xlu0 %v317, 79
      %v2366 = vpop.permute.xlu0 %2365
      %2369 = vrot.lane.b32.xlu0 %v318, 121
      %v2370 = vpop.permute.xlu0 %2369
      %2371 = vrot.lane.b32.xlu0 %v319, 121
      %v2372 = vpop.permute.xlu0 %2371
      %2375 = vrot.lane.b32.xlu0 %v316, 32
      %v2376 = vpop.permute.xlu0 %2375
      %2377 = vrot.lane.b32.xlu0 %v317, 32
      %v2378 = vpop.permute.xlu0 %2377
      %2381 = vrot.lane.b32.xlu0 %v318, 74
      %v2382 = vpop.permute.xlu0 %2381
      %2383 = vrot.lane.b32.xlu0 %v319, 74
      %v2384 = vpop.permute.xlu0 %2383
      %v2387 = vsel %vm428, %v2334, %v2340
      %v2388 = vsel %vm428, %v2336, %v2342
      %v2389 = vsel %vm431, %v2387, %v2346
      %v2390 = vsel %vm431, %v2388, %v2348
      %v2391 = vsel %vm434, %v2389, %v2352
      %v2392 = vsel %vm434, %v2390, %v2354
      %v2393 = vsel %vm437, %v2352, %v2358
      %v2394 = vsel %vm437, %v2354, %v2360
      %v2395 = vsel %vm440, %v2393, %v2364
      %v2396 = vsel %vm440, %v2394, %v2366
      %v2397 = vsel %vm443, %v2395, %v2370
      %v2398 = vsel %vm443, %v2396, %v2372
      %v2399 = vsel %vm446, %v2370, %v2376
      %v2400 = vsel %vm446, %v2372, %v2378
      %v2401 = vsel %vm449, %v2399, %v2382
      %v2402 = vsel %vm449, %v2400, %v2384
      %v2409 = vrot.slane %v2391, 2
      %v2410 = vrot.slane %v2392, 2
      %v2411 = vsel %vm1790, %v2409, %v2410
      %v2412 = vrot.slane %v2397, 2
      %v2413 = vrot.slane %v2398, 2
      %v2414 = vsel %vm1790, %v2412, %v2413
      %v2415 = vrot.slane %v2401, 2
      %v2416 = vrot.slane %v2402, 2
      %v2417 = vsel %vm1790, %v2415, %v2416
      %2418 = vrot.lane.b32.xlu0 %v2411, 32
      %v2419 = vpop.permute.xlu0 %2418
      %2420 = vrot.lane.b32.xlu0 %v2414, 32
      %v2421 = vpop.permute.xlu0 %2420
      %2422 = vrot.lane.b32.xlu0 %v2417, 32
      %v2423 = vpop.permute.xlu0 %2422
      %2424 = vrot.lane.b32.xlu0 %v2410, 32
      %v2425 = vpop.permute.xlu0 %2424
      %2426 = vrot.lane.b32.xlu0 %v2413, 32
      %v2427 = vpop.permute.xlu0 %2426
      %2428 = vrot.lane.b32.xlu0 %v2416, 32
      %v2429 = vpop.permute.xlu0 %2428
      %v2430 = vsel %vm564, %v2419, %v2421
      %v2431 = vsel %vm564, %v2421, %v2423
      %v2432 = vsel %vm564, %v2425, %v2427
      %v2433 = vsel %vm564, %v2427, %v2429
      %v2440 = vsel %vm564, %v2308, %v2419
      %v2441 = vsel %vm564, %v2310, %v2425
      %v2442 = vsel %vm709, %v2423, 0
      %v2444 = vsel %vm709, %v2429, 0
      %2446 = vmatprep.subr.mxu0 0.0
      %2447 = vmatpush1.msra.mxu0 %v577
      %2448 = vmatprep.subr.mxu0 0.0
      %2449 = vmatpush1.msra.mxu0 %v578
      %2450 = vmatprep.subr.mxu0 0.0
      %2451 = vmatpush1.msra.mxu0 %v579
      %2452 = vmatprep.subr.mxu0 0.0
      %2453 = vmatpush1.msra.mxu0 %v580
      %2454 = vmatprep.subr.mxu0 0.0
      %2455 = vmatpush1.msra.mxu0 %v581
      %2456 = vmatprep.subr.mxu0 0.0
      %2457 = vmatpush1.msra.mxu0 %v582
      %2458 = vmatprep.subr.mxu0 0.0
      %2459 = vmatpush1.msra.mxu0 %v583
      %2460 = vmatprep.subr.mxu0 0.0
      %2461 = vmatpush1.msra.mxu0 %v584
      %2462 = vmatprep.subr.mxu0 0.0
      %2463 = vmatpush1.msra.mxu0 %v585
      %2464 = vmatprep.subr.mxu0 0.0
      %2465 = vmatpush1.msra.mxu0 %v586
      %2466 = vmatprep.subr.mxu0 0.0
      %2467 = vmatpush1.msra.mxu0 %v587
      %2468 = vmatprep.subr.mxu0 0.0
      %2469 = vmatpush1.msra.mxu0 %v588
      %2470 = vmatprep.subr.mxu0 0.0
      %2471 = vmatpush1.msra.mxu0 %v589
      %2472 = vmatprep.subr.mxu0 0.0
      %2473 = vmatpush1.msra.mxu0 %v590
      %2474 = vmatprep.subr.mxu0 0.0
      %2475 = vmatpush1.msra.mxu0 %v591
      %2476 = vmatprep.subr.mxu0 0.0
      %2477 = vmatpush1.msra.mxu0 %v592
      %2478 = vmatprep.subr.mxu0 0.0
      %2479 = vmatpush1.msra.mxu0 %v593
      %2480 = vmatprep.subr.mxu0 0.0
      %2481 = vmatpush1.msra.mxu0 %v594
      %2482 = vmatprep.subr.mxu0 0.0
      %2483 = vmatpush1.msra.mxu0 %v595
      %2484 = vmatprep.subr.mxu0 0.0
      %2485 = vmatpush1.msra.mxu0 %v596
      %2486 = vmatprep.subr.mxu0 0.0
      %2487 = vmatpush1.msra.mxu0 %v597
      %2488 = vmatprep.subr.mxu0 0.0
      %2489 = vmatpush1.msra.mxu0 %v598
      %2490 = vmatprep.subr.mxu0 0.0
      %2491 = vmatpush1.msra.mxu0 %v599
      %2492 = vmatprep.subr.mxu0 0.0
      %2493 = vmatpush1.msra.mxu0 %v600
      %2494 = vmatprep.subr.mxu0 0.0
      %2495 = vmatpush1.msra.mxu0 %v601
      %2496 = vmatprep.subr.mxu0 0.0
      %2497 = vmatpush1.msra.mxu0 %v602
      %2498 = vmatprep.subr.mxu0 0.0
      %2499 = vmatpush1.msra.mxu0 %v603
      %2500 = vmatprep.subr.mxu0 0.0
      %2501 = vmatpush1.msra.mxu0 %v604
      %2502 = vmatprep.subr.mxu0 0.0
      %2503 = vmatpush1.msra.mxu0 %v605
      %2504 = vmatprep.subr.mxu0 0.0
      %2505 = vmatpush1.msra.mxu0 %v606
      %2506 = vmatprep.subr.mxu0 0.0
      %2507 = vmatpush1.msra.mxu0 %v607
      %2508 = vmatprep.subr.mxu0 0.0
      %2509 = vmatpush1.msra.mxu0 %v608
      %2510 = vmatprep.mubr.f32.mxu0 %v2317
      %2511 = vmatmul.mubr.f32.gmra.mrb[0].mxu0 %v525
      %v2512 = vpop.f32.mrb[0].mxu0
      %v2513 = vadd.f32 0.0, %v2512
      %v2514 = vpop.f32.mrb[0].mxu0
      %2515 = vmatprep.mubr.f32.mxu0 %v2318
      %2516 = vmatmul.mubr.f32.gmra.mrb[0].mxu0 %v526
      %v2517 = vpop.f32.mrb[0].mxu0
      %v2518 = vadd.f32 0.0, %v2517
      %v2519 = vpop.f32.mrb[0].mxu0
      %2520 = vdwg.mxu0
      %2521 = vmatprep.subr.mxu0 0.0
      %2522 = vmatpush1.msra.mxu0 %v609
      %2523 = vmatprep.subr.mxu0 0.0
      %2524 = vmatpush1.msra.mxu0 %v610
      %2525 = vmatprep.subr.mxu0 0.0
      %2526 = vmatpush1.msra.mxu0 %v611
      %2527 = vmatprep.subr.mxu0 0.0
      %2528 = vmatpush1.msra.mxu0 %v612
      %2529 = vmatprep.subr.mxu0 0.0
      %2530 = vmatpush1.msra.mxu0 %v613
      %2531 = vmatprep.subr.mxu0 0.0
      %2532 = vmatpush1.msra.mxu0 %v614
      %2533 = vmatprep.subr.mxu0 0.0
      %2534 = vmatpush1.msra.mxu0 %v615
      %2535 = vmatprep.subr.mxu0 0.0
      %2536 = vmatpush1.msra.mxu0 %v616
      %2537 = vmatprep.subr.mxu0 0.0
      %2538 = vmatpush1.msra.mxu0 %v617
      %2539 = vmatprep.subr.mxu0 0.0
      %2540 = vmatpush1.msra.mxu0 %v618
      %2541 = vmatprep.subr.mxu0 0.0
      %2542 = vmatpush1.msra.mxu0 %v619
      %2543 = vmatprep.subr.mxu0 0.0
      %2544 = vmatpush1.msra.mxu0 %v620
      %2545 = vmatprep.subr.mxu0 0.0
      %2546 = vmatpush1.msra.mxu0 %v621
      %2547 = vmatprep.subr.mxu0 0.0
      %2548 = vmatpush1.msra.mxu0 %v622
      %2549 = vmatprep.subr.mxu0 0.0
      %2550 = vmatpush1.msra.mxu0 %v623
      %2551 = vmatprep.subr.mxu0 0.0
      %2552 = vmatpush1.msra.mxu0 %v624
      %2553 = vmatprep.subr.mxu0 0.0
      %2554 = vmatpush1.msra.mxu0 %v625
      %2555 = vmatprep.subr.mxu0 0.0
      %2556 = vmatpush1.msra.mxu0 %v626
      %2557 = vmatprep.subr.mxu0 0.0
      %2558 = vmatpush1.msra.mxu0 %v627
      %2559 = vmatprep.subr.mxu0 0.0
      %2560 = vmatpush1.msra.mxu0 %v628
      %2561 = vmatprep.subr.mxu0 0.0
      %2562 = vmatpush1.msra.mxu0 %v629
      %2563 = vmatprep.subr.mxu0 0.0
      %2564 = vmatpush1.msra.mxu0 %v630
      %2565 = vmatprep.subr.mxu0 0.0
      %2566 = vmatpush1.msra.mxu0 %v631
      %2567 = vmatprep.subr.mxu0 0.0
      %2568 = vmatpush1.msra.mxu0 %v632
      %2569 = vmatprep.subr.mxu0 0.0
      %2570 = vmatpush1.msra.mxu0 %v633
      %2571 = vmatprep.subr.mxu0 0.0
      %2572 = vmatpush1.msra.mxu0 %v634
      %2573 = vmatprep.subr.mxu0 0.0
      %2574 = vmatpush1.msra.mxu0 %v635
      %2575 = vmatprep.subr.mxu0 0.0
      %2576 = vmatpush1.msra.mxu0 %v636
      %2577 = vmatprep.subr.mxu0 0.0
      %2578 = vmatpush1.msra.mxu0 %v637
      %2579 = vmatprep.subr.mxu0 0.0
      %2580 = vmatpush1.msra.mxu0 %v638
      %2581 = vmatprep.subr.mxu0 0.0
      %2582 = vmatpush1.msra.mxu0 %v639
      %2583 = vmatprep.subr.mxu0 0.0
      %2584 = vmatpush1.msra.mxu0 %v640
      %2585 = vmatprep.mubr.f32.mxu0 %v2325
      %2586 = vmatmul.mubr.f32.gmra.mrb[0].mxu0 %v2319
      %v2587 = vpop.f32.mrb[0].mxu0
      %v2588 = vadd.f32 %v2513, %v2587
      %v2589 = vpop.f32.mrb[0].mxu0
      %2590 = vmatprep.mubr.f32.mxu0 %v2326
      %2591 = vmatmul.mubr.f32.gmra.mrb[0].mxu0 %v2320
      %v2592 = vpop.f32.mrb[0].mxu0
      %v2593 = vadd.f32 %v2518, %v2592
      %v2594 = vpop.f32.mrb[0].mxu0
      %2595 = vdwg.mxu0
      %2596 = vmatprep.subr.mxu0 0.0
      %2597 = vmatpush1.msra.mxu0 %v641
      %2598 = vmatprep.subr.mxu0 0.0
      %2599 = vmatpush1.msra.mxu0 %v642
      %2600 = vmatprep.subr.mxu0 0.0
      %2601 = vmatpush1.msra.mxu0 %v643
      %2602 = vmatprep.subr.mxu0 0.0
      %2603 = vmatpush1.msra.mxu0 %v644
      %2604 = vmatprep.subr.mxu0 0.0
      %2605 = vmatpush1.msra.mxu0 %v645
      %2606 = vmatprep.subr.mxu0 0.0
      %2607 = vmatpush1.msra.mxu0 %v646
      %2608 = vmatprep.subr.mxu0 0.0
      %2609 = vmatpush1.msra.mxu0 %v647
      %2610 = vmatprep.subr.mxu0 0.0
      %2611 = vmatpush1.msra.mxu0 %v648
      %2612 = vmatprep.subr.mxu0 0.0
      %2613 = vmatpush1.msra.mxu0 %v649
      %2614 = vmatprep.subr.mxu0 0.0
      %2615 = vmatpush1.msra.mxu0 %v650
      %2616 = vmatprep.subr.mxu0 0.0
      %2617 = vmatpush1.msra.mxu0 %v651
      %2618 = vmatprep.subr.mxu0 0.0
      %2619 = vmatpush1.msra.mxu0 %v652
      %2620 = vmatprep.subr.mxu0 0.0
      %2621 = vmatpush1.msra.mxu0 %v653
      %2622 = vmatprep.subr.mxu0 0.0
      %2623 = vmatpush1.msra.mxu0 %v654
      %2624 = vmatprep.subr.mxu0 0.0
      %2625 = vmatpush1.msra.mxu0 %v655
      %2626 = vmatprep.subr.mxu0 0.0
      %2627 = vmatpush1.msra.mxu0 %v656
      %2628 = vmatprep.subr.mxu0 0.0
      %2629 = vmatpush1.msra.mxu0 %v657
      %2630 = vmatprep.subr.mxu0 0.0
      %2631 = vmatpush1.msra.mxu0 %v658
      %2632 = vmatprep.subr.mxu0 0.0
      %2633 = vmatpush1.msra.mxu0 %v659
      %2634 = vmatprep.subr.mxu0 0.0
      %2635 = vmatpush1.msra.mxu0 %v660
      %2636 = vmatprep.subr.mxu0 0.0
      %2637 = vmatpush1.msra.mxu0 %v661
      %2638 = vmatprep.subr.mxu0 0.0
      %2639 = vmatpush1.msra.mxu0 %v662
      %2640 = vmatprep.subr.mxu0 0.0
      %2641 = vmatpush1.msra.mxu0 %v663
      %2642 = vmatprep.subr.mxu0 0.0
      %2643 = vmatpush1.msra.mxu0 %v664
      %2644 = vmatprep.subr.mxu0 0.0
      %2645 = vmatpush1.msra.mxu0 %v665
      %2646 = vmatprep.subr.mxu0 0.0
      %2647 = vmatpush1.msra.mxu0 %v666
      %2648 = vmatprep.subr.mxu0 0.0
      %2649 = vmatpush1.msra.mxu0 %v667
      %2650 = vmatprep.subr.mxu0 0.0
      %2651 = vmatpush1.msra.mxu0 %v668
      %2652 = vmatprep.subr.mxu0 0.0
      %2653 = vmatpush1.msra.mxu0 %v669
      %2654 = vmatprep.subr.mxu0 0.0
      %2655 = vmatpush1.msra.mxu0 %v670
      %2656 = vmatprep.subr.mxu0 0.0
      %2657 = vmatpush1.msra.mxu0 %v671
      %2658 = vmatprep.subr.mxu0 0.0
      %2659 = vmatpush1.msra.mxu0 %v672
      %2660 = vmatprep.mubr.f32.mxu0 %v2440
      %2661 = vmatmul.mubr.f32.gmra.mrb[0].mxu0 %v2331
      %v2662 = vpop.f32.mrb[0].mxu0
      %v2663 = vadd.f32 %v2588, %v2662
      %v2664 = vpop.f32.mrb[0].mxu0
      %2665 = vmatprep.mubr.f32.mxu0 %v2441
      %2666 = vmatmul.mubr.f32.gmra.mrb[0].mxu0 %v2332
      %v2667 = vpop.f32.mrb[0].mxu0
      %v2668 = vadd.f32 %v2593, %v2667
      %v2669 = vpop.f32.mrb[0].mxu0
      %2670 = vdwg.mxu0
      %2671 = vmatprep.subr.mxu0 0.0
      %2672 = vmatpush1.msra.mxu0 %v673
      %2673 = vmatprep.subr.mxu0 0.0
      %2674 = vmatpush1.msra.mxu0 %v674
      %2675 = vmatprep.subr.mxu0 0.0
      %2676 = vmatpush1.msra.mxu0 %v675
      %2677 = vmatprep.subr.mxu0 0.0
      %2678 = vmatpush1.msra.mxu0 %v676
      %2679 = vmatprep.subr.mxu0 0.0
      %2680 = vmatpush1.msra.mxu0 %v677
      %2681 = vmatprep.subr.mxu0 0.0
      %2682 = vmatpush1.msra.mxu0 %v678
      %2683 = vmatprep.subr.mxu0 0.0
      %2684 = vmatpush1.msra.mxu0 %v679
      %2685 = vmatprep.subr.mxu0 0.0
      %2686 = vmatpush1.msra.mxu0 %v680
      %2687 = vmatprep.subr.mxu0 0.0
      %2688 = vmatpush1.msra.mxu0 %v681
      %2689 = vmatprep.subr.mxu0 0.0
      %2690 = vmatpush1.msra.mxu0 %v682
      %2691 = vmatprep.subr.mxu0 0.0
      %2692 = vmatpush1.msra.mxu0 %v683
      %2693 = vmatprep.subr.mxu0 0.0
      %2694 = vmatpush1.msra.mxu0 %v684
      %2695 = vmatprep.subr.mxu0 0.0
      %2696 = vmatpush1.msra.mxu0 %v685
      %2697 = vmatprep.subr.mxu0 0.0
      %2698 = vmatpush1.msra.mxu0 %v686
      %2699 = vmatprep.subr.mxu0 0.0
      %2700 = vmatpush1.msra.mxu0 %v687
      %2701 = vmatprep.subr.mxu0 0.0
      %2702 = vmatpush1.msra.mxu0 %v688
      %2703 = vmatprep.subr.mxu0 0.0
      %2704 = vmatpush1.msra.mxu0 %v689
      %2705 = vmatprep.subr.mxu0 0.0
      %2706 = vmatpush1.msra.mxu0 %v690
      %2707 = vmatprep.subr.mxu0 0.0
      %2708 = vmatpush1.msra.mxu0 %v691
      %2709 = vmatprep.subr.mxu0 0.0
      %2710 = vmatpush1.msra.mxu0 %v692
      %2711 = vmatprep.subr.mxu0 0.0
      %2712 = vmatpush1.msra.mxu0 %v693
      %2713 = vmatprep.subr.mxu0 0.0
      %2714 = vmatpush1.msra.mxu0 %v694
      %2715 = vmatprep.subr.mxu0 0.0
      %2716 = vmatpush1.msra.mxu0 %v695
      %2717 = vmatprep.subr.mxu0 0.0
      %2718 = vmatpush1.msra.mxu0 %v696
      %2719 = vmatprep.subr.mxu0 0.0
      %2720 = vmatpush1.msra.mxu0 %v697
      %2721 = vmatprep.subr.mxu0 0.0
      %2722 = vmatpush1.msra.mxu0 %v698
      %2723 = vmatprep.subr.mxu0 0.0
      %2724 = vmatpush1.msra.mxu0 %v699
      %2725 = vmatprep.subr.mxu0 0.0
      %2726 = vmatpush1.msra.mxu0 %v700
      %2727 = vmatprep.subr.mxu0 0.0
      %2728 = vmatpush1.msra.mxu0 %v701
      %2729 = vmatprep.subr.mxu0 0.0
      %2730 = vmatpush1.msra.mxu0 %v702
      %2731 = vmatprep.subr.mxu0 0.0
      %2732 = vmatpush1.msra.mxu0 %v703
      %2733 = vmatprep.subr.mxu0 0.0
      %2734 = vmatpush1.msra.mxu0 %v704
      %2735 = vmatprep.mubr.f32.mxu0 %v2431
      %2736 = vmatmul.mubr.f32.gmra.mrb[0].mxu0 %v2430
      %v2737 = vpop.f32.mrb[0].mxu0
      %v2738 = vadd.f32 %v2663, %v2737
      %v2739 = vpop.f32.mrb[0].mxu0
      %2740 = vmatprep.mubr.f32.mxu0 %v2433
      %2741 = vmatmul.mubr.f32.gmra.mrb[0].mxu0 %v2432
      %v2742 = vpop.f32.mrb[0].mxu0
      %v2743 = vadd.f32 %v2668, %v2742
      %v2744 = vpop.f32.mrb[0].mxu0
      %2745 = vdwg.mxu0
      %2746 = vmatprep.subr.mxu0 0.0
      %2747 = vmatpush1.msra.mxu0 %v705
      %2748 = vmatprep.subr.mxu0 0.0
      %2749 = vmatpush1.msra.mxu0 %v706
      %2750 = vmatprep.subr.mxu0 0.0
      %2751 = vmatpush1.msra.mxu0 %v707
      %2752 = vmatprep.subr.mxu0 0.0
      %2753 = vmatpush1.msra.mxu0 %v716
      %2754 = vmatprep.subr.mxu0 0.0
      %2755 = vmatpush1.msra.mxu0 0.0
      %2756 = vmatprep.subr.mxu0 0.0
      %2757 = vmatpush1.msra.mxu0 0.0
      %2758 = vmatprep.subr.mxu0 0.0
      %2759 = vmatpush1.msra.mxu0 0.0
      %2760 = vmatprep.subr.mxu0 0.0
      %2761 = vmatpush1.msra.mxu0 0.0
      %2762 = vmatprep.subr.mxu0 0.0
      %2763 = vmatpush1.msra.mxu0 0.0
      %2764 = vmatprep.subr.mxu0 0.0
      %2765 = vmatpush1.msra.mxu0 0.0
      %2766 = vmatprep.subr.mxu0 0.0
      %2767 = vmatpush1.msra.mxu0 0.0
      %2768 = vmatprep.subr.mxu0 0.0
      %2769 = vmatpush1.msra.mxu0 0.0
      %2770 = vmatprep.subr.mxu0 0.0
      %2771 = vmatpush1.msra.mxu0 0.0
      %2772 = vmatprep.subr.mxu0 0.0
      %2773 = vmatpush1.msra.mxu0 0.0
      %2774 = vmatprep.subr.mxu0 0.0
      %2775 = vmatpush1.msra.mxu0 0.0
      %2776 = vmatprep.subr.mxu0 0.0
      %2777 = vmatpush1.msra.mxu0 0.0
      %2778 = vmatprep.subr.mxu0 0.0
      %2779 = vmatpush1.msra.mxu0 0.0
      %2780 = vmatprep.subr.mxu0 0.0
      %2781 = vmatpush1.msra.mxu0 0.0
      %2782 = vmatprep.subr.mxu0 0.0
      %2783 = vmatpush1.msra.mxu0 0.0
      %2784 = vmatprep.subr.mxu0 0.0
      %2785 = vmatpush1.msra.mxu0 0.0
      %2786 = vmatprep.subr.mxu0 0.0
      %2787 = vmatpush1.msra.mxu0 0.0
      %2788 = vmatprep.subr.mxu0 0.0
      %2789 = vmatpush1.msra.mxu0 0.0
      %2790 = vmatprep.subr.mxu0 0.0
      %2791 = vmatpush1.msra.mxu0 0.0
      %2792 = vmatprep.subr.mxu0 0.0
      %2793 = vmatpush1.msra.mxu0 0.0
      %2794 = vmatprep.subr.mxu0 0.0
      %2795 = vmatpush1.msra.mxu0 0.0
      %2796 = vmatprep.subr.mxu0 0.0
      %2797 = vmatpush1.msra.mxu0 0.0
      %2798 = vmatprep.subr.mxu0 0.0
      %2799 = vmatpush1.msra.mxu0 0.0
      %2800 = vmatprep.subr.mxu0 0.0
      %2801 = vmatpush1.msra.mxu0 0.0
      %2802 = vmatprep.subr.mxu0 0.0
      %2803 = vmatpush1.msra.mxu0 0.0
      %2804 = vmatprep.subr.mxu0 0.0
      %2805 = vmatpush1.msra.mxu0 0.0
      %2806 = vmatprep.subr.mxu0 0.0
      %2807 = vmatpush1.msra.mxu0 0.0
      %2808 = vmatprep.subr.mxu0 0.0
      %2809 = vmatpush1.msra.mxu0 0.0
      %2810 = vmatprep.mubr.f32.mxu0 0.0
      %2811 = vmatmul.mubr.f32.gmra.mrb[0].mxu0 %v2442
      %v2812 = vpop.f32.mrb[0].mxu0
      %v2813 = vadd.f32 %v2738, %v2812
      %v2814 = vpop.f32.mrb[0].mxu0
      %2815 = vmatprep.mubr.f32.mxu0 0.0
      %2816 = vmatmul.mubr.f32.gmra.mrb[0].mxu0 %v2444
      %v2817 = vpop.f32.mrb[0].mxu0
      %v2818 = vadd.f32 %v2743, %v2817
      %v2819 = vpop.f32.mrb[0].mxu0
      %2820 = vdwg.mxu0
      %v2821 = vmax.f32 %v2260, %v2813
      %v2822 = vmax.f32 %v2261, %v2818
      %v2823 = vld [vmem:[%s5] sm:$0x1]
      %v2825 = vlaneseq
      %v2826 = vshrl.u32 %v2825, 7
      %v2827 = vsub.s32 0, %v2826
      %v2828 = vrot.slane %v2823, %v2827
      %v2830 = vadd.f32 %v2821, %v2828
      %v2831 = vadd.f32 %v2822, %v2828
      %v2832 = vmax.f32 %v2830, 0.0
      %v2833 = vmax.f32 %v2831, 0.0
      %2834 = vst.msk [vmem:[%s311] sm:$0xff] %vm431, %v2832
      %vm2835 = vcmask 685056
      %2836 = vst.msk [vmem:[%s311 + $0x8] sm:$0x3f] %vm2835, %v2833
      %p2837 = scmp.lt.s32.totalorder %s17, 1
      %s2838 = scalar_select %p2837, %s17, 1
      %s2839 = smul.addr %s2838, 2
      %s2840 = smul.addr %s2839, 8
      %s2841 = scalar_lea.vmem %s6, %s2840
      // Predicated region
      $region45: #{lenet_forward.3} parent=43 // pred_check
        %p2842 = pneg %p181
      $region46: #{lenet_forward.3} parent=43 // pred_check_branch
        %2844 = sbr.rel (%p2842) target = $region48
      $region47: #{lenet_forward.3} parent=43 // pred_region
        _
      $region48: #{lenet_forward.3} parent=43 // pred_fallthru
        _
    $region44: #{lenet_forward.3} parent=5 // pred_fallthru
      _
    %p2845 = scmp.le.s32.totalorder 2, %s12
    // Predicated region
    $region49: #{lenet_forward.3} parent=5 // pred_check
      %p2846 = pneg %p2845
    $region50: #{lenet_forward.3} parent=5 // pred_check_branch
      %2848 = sbr.rel (%p2846) target = $region52
    $region51: #{lenet_forward.3} parent=5 // pred_region
      %s2849 = ssub.s32 %s12, 2
      // Predicated region
      $region53: #{lenet_forward.3} parent=51 // pred_check
        %p2850 = pneg %p187
      $region54: #{lenet_forward.3} parent=51 // pred_check_branch
        %2852 = sbr.rel (%p2850) target = $region56
      $region55: #{lenet_forward.3} parent=51 // pred_region
        %p2853 = scmp.lt.s32.totalorder %s18, 1
        %s2854 = scalar_select %p2853, %s18, 1
        %s2855 = smul.addr %s2854, 2
        %s2856 = smul.addr %s2855, 8
        %s2857 = scalar_lea.vmem %s6, %s2856
      $region56: #{lenet_forward.3} parent=51 // pred_fallthru
        _
    $region52: #{lenet_forward.3} parent=5 // pred_fallthru
      _
  $region6: #{lenet_forward.3} parent=0 // loop_footer
    %s16 = sadd.s32 1, %s12
  $region7: #{lenet_forward.3} parent=0 // loop_footer_branch
    %11 = sbr.rel target = $region3
  $region8: #{lenet_forward.3} parent=0 // loop_exit
    _

// kernel: tile.18
$region0: #{tile.18}
  #allocation0 [shape = 's32[1]{0}', space=sflag, size = 0x4, scoped, tag = 'scoped memory for tile.18']
  %s0 = inlined_call_operand.vmem [shape: f32[16], index: 0, kind: input, shape index: {}]
  %s1 = inlined_call_operand.vmem [shape: f32[5,16], index: 1, kind: output, shape index: {}]
  // Predicated region
  $region2: #{tile.18} parent=0 // pred_check
    _
  $region3: #{tile.18} parent=0 // pred_check_branch
    %3 = sbr.rel (0) target = $region5
  $region4: #{tile.18} parent=0 // pred_region
    _
  $region5: #{tile.18} parent=0 // pred_fallthru
    _
  %v4 = vld [vmem:[%s0] ss:$0 sm:$0xff]
  %5 = vst [vmem:[%s1] sm:$0xff] %v4

// kernel: tile.19
$region0: #{tile.19}
  %s0 = inlined_call_operand.vmem [shape: f32[5,16], index: 0, kind: input, shape index: {}]
  %s1 = inlined_call_operand.vmem [shape: f32[1,80], index: 1, kind: output, shape index: {}]
  $region1: #{tile.19} parent=0
    #allocation0 [shape = 'u8[4096]{0}', space=vmem, size = 0x1000, scoped, tag = 'scoped mem for output reshape']
    %v2 = vld [vmem:[%s0] sm:$0x1]
    %vm3 = vcmask 130048
    %4 = vst.msk [vmem:[#allocation0] sm:$0x1] %vm3, %v2
    %s5 = scalar_lea.vmem %s0, 4
    %v6 = vld [vmem:[%s5] sm:$0x1]
    %7 = vrot.lane.b32.xlu0 %v6, 64
    %v8 = vpop.permute.xlu0 %7
    %vm9 = vcmask 654848
    %10 = vst.msk [vmem:[#allocation0] sm:$0x1] %vm9, %v8
    %s11 = scalar_lea.vmem %s0, 3
    %v12 = vld [vmem:[%s11] sm:$0x1]
    %13 = vrot.lane.b32.xlu0 %v12, 48
    %v14 = vpop.permute.xlu0 %13
    %vm15 = vcmask 523648
    %16 = vst.msk [vmem:[#allocation0] sm:$0x1] %vm15, %v14
    %s17 = scalar_lea.vmem %s0, 2
    %v18 = vld [vmem:[%s17] sm:$0x1]
    %19 = vrot.lane.b32.xlu0 %v18, 32
    %v20 = vpop.permute.xlu0 %19
    %vm21 = vcmask 392448
    %22 = vst.msk [vmem:[#allocation0] sm:$0x1] %vm21, %v20
    %s23 = scalar_lea.vmem %s0, 1
    %v24 = vld [vmem:[%s23] sm:$0x1]
    %25 = vrot.lane.b32.xlu0 %v24, 16
    %v26 = vpop.permute.xlu0 %25
    %vm27 = vcmask 261248
    %28 = vst.msk [vmem:[#allocation0] sm:$0x1] %vm27, %v26
    %s30 = sshllo.u32 0, 1
    %v32 = vld [vmem:[#allocation0] sm:%s30]
    %s33 = sshllo.u32 0, 1
    %34 = vst [vmem:[%s1] sm:%s33] %v32

// kernel: lenet_forward.4
$region0: #{lenet_forward.4}
  #allocation0 [shape = 'u32[]', space=smem, size = 0x4, offset = 0x4, fixed_abs, tag = 'smem constant byte address 0x4 - core index']
  #allocation1 [shape = 'u32[144,128]{1,0:T(1,128)}', space=vmem, size = 0x12000, scoped, tag = 'internal scratch']
  %s0 = inlined_call_operand.vmem [shape: f32[2,7,42], index: 0, kind: input, shape index: {}]
  %s1 = inlined_call_operand.vmem [shape: f32[2,7,42], index: 1, kind: input, shape index: {}]
  %s2 = inlined_call_operand.vmem [shape: f32[2,7,42], index: 2, kind: input, shape index: {}]
  %s3 = inlined_call_operand.vmem [shape: f32[2,7,42], index: 3, kind: input, shape index: {}]
  %s4 = inlined_call_operand.vmem [shape: f32[750,80], index: 4, kind: input, shape index: {}]
  %s5 = inlined_call_operand.vmem [shape: f32[1,80], index: 5, kind: input, shape index: {}]
  %s6 = inlined_call_operand.vmem [shape: f32[2,5,80], index: 6, kind: output, shape index: {}]
  %s7 = sld [smem:[#allocation0]]
  $region57: #{lenet_forward.4} parent=0
    _
  %s9 = ssub.s32 1, %s7
  %s10 = scalar_select 0, %s9, %s7
  loop: start=0, step=1, limit=4
  $region2: #{lenet_forward.4} parent=0 // loop_pre_header
    _
  $region3: #{lenet_forward.4} parent=0 // loop_header
    %s12 = sphi 0, %s16
    %p13 = scmp.ge.s32.totalorder %s12, 4
    %s22 = sphi 0, %s24
    %s25 = sphi 0, %s22
    %s26 = sphi 0, %s25
    %s42 = sphi 0, %s26
    %s48 = sphi 0, %s50
    %s51 = sphi 0, %s48
    %s52 = sphi 0, %s51
    %s68 = sphi 0, %s52
    %s74 = sphi 0, %s76
    %s77 = sphi 0, %s74
    %s78 = sphi 0, %s77
    %s94 = sphi 0, %s78
    %s100 = sphi 0, %s102
    %s103 = sphi 0, %s100
    %s104 = sphi 0, %s103
    %s120 = sphi 0, %s104
    %s124 = sphi 0, %s124
    %s126 = sphi 0, %s124
    %s127 = sphi 0, %s126
    %s141 = sphi 0, %s127
    %s145 = sphi 0, %s145
    %s147 = sphi 0, %s145
    %s148 = sphi 0, %s147
    %s162 = sphi 0, %s148
    %s168 = sphi 0, %s170
    %s171 = sphi 0, %s168
    %s172 = sphi 0, %s171
    %s188 = sphi 0, %s172
  $region4: #{lenet_forward.4} parent=0 // loop_header_branch
    %15 = sbr.rel (%p13) target = $region8
  $region5: #{lenet_forward.4} parent=0 // loop_body
    %s17 = ssub.s32 %s12, 1
    %s18 = ssub.s32 %s12, 2
    %s19 = sadd.s32 %s12, 1
    %s20 = ssub.s32 %s12, %s19
    %p21 = scmp.eq.s32.totalorder %s20, 0
    %s23 = sadd.s32 %s22, 1
    %s24 = scalar_select %p21, %s22, %s23
    %p27 = pneg %p21
    %p28 = scmp.eq.s32.totalorder %s12, 1
    %p29 = por %p27, %p28
    %p30 = scmp.ne.s32.totalorder %s22, %s25
    %p31 = scmp.eq.s32.totalorder %s12, 0
    %p32 = por %p30, %p31
    %p33 = scmp.ne.s32.totalorder %s22, %s25
    %p34 = scmp.eq.s32.totalorder %s17, 1
    %p35 = por %p33, %p34
    %p36 = scmp.ne.s32.totalorder %s25, %s26
    %p37 = scmp.eq.s32.totalorder %s17, 0
    %p38 = por %p36, %p37
    %p39 = scmp.ne.s32.totalorder %s25, %s26
    %p40 = scmp.eq.s32.totalorder %s18, 1
    %p41 = por %p39, %p40
    %p43 = scmp.ne.s32.totalorder %s26, %s42
    %p44 = scmp.eq.s32.totalorder %s18, 0
    %p45 = por %p43, %p44
    %s46 = ssub.s32 %s12, %s19
    %p47 = scmp.eq.s32.totalorder %s46, 0
    %s49 = sadd.s32 %s48, 1
    %s50 = scalar_select %p47, %s48, %s49
    %p53 = pneg %p47
    %p54 = scmp.eq.s32.totalorder %s12, 1
    %p55 = por %p53, %p54
    %p56 = scmp.ne.s32.totalorder %s48, %s51
    %p57 = scmp.eq.s32.totalorder %s12, 0
    %p58 = por %p56, %p57
    %p59 = scmp.ne.s32.totalorder %s48, %s51
    %p60 = scmp.eq.s32.totalorder %s17, 1
    %p61 = por %p59, %p60
    %p62 = scmp.ne.s32.totalorder %s51, %s52
    %p63 = scmp.eq.s32.totalorder %s17, 0
    %p64 = por %p62, %p63
    %p65 = scmp.ne.s32.totalorder %s51, %s52
    %p66 = scmp.eq.s32.totalorder %s18, 1
    %p67 = por %p65, %p66
    %p69 = scmp.ne.s32.totalorder %s52, %s68
    %p70 = scmp.eq.s32.totalorder %s18, 0
    %p71 = por %p69, %p70
    %s72 = ssub.s32 %s12, %s19
    %p73 = scmp.eq.s32.totalorder %s72, 0
    %s75 = sadd.s32 %s74, 1
    %s76 = scalar_select %p73, %s74, %s75
    %p79 = pneg %p73
    %p80 = scmp.eq.s32.totalorder %s12, 1
    %p81 = por %p79, %p80
    %p82 = scmp.ne.s32.totalorder %s74, %s77
    %p83 = scmp.eq.s32.totalorder %s12, 0
    %p84 = por %p82, %p83
    %p85 = scmp.ne.s32.totalorder %s74, %s77
    %p86 = scmp.eq.s32.totalorder %s17, 1
    %p87 = por %p85, %p86
    %p88 = scmp.ne.s32.totalorder %s77, %s78
    %p89 = scmp.eq.s32.totalorder %s17, 0
    %p90 = por %p88, %p89
    %p91 = scmp.ne.s32.totalorder %s77, %s78
    %p92 = scmp.eq.s32.totalorder %s18, 1
    %p93 = por %p91, %p92
    %p95 = scmp.ne.s32.totalorder %s78, %s94
    %p96 = scmp.eq.s32.totalorder %s18, 0
    %p97 = por %p95, %p96
    %s98 = ssub.s32 %s12, %s19
    %p99 = scmp.eq.s32.totalorder %s98, 0
    %s101 = sadd.s32 %s100, 1
    %s102 = scalar_select %p99, %s100, %s101
    %p105 = pneg %p99
    %p106 = scmp.eq.s32.totalorder %s12, 1
    %p107 = por %p105, %p106
    %p108 = scmp.ne.s32.totalorder %s100, %s103
    %p109 = scmp.eq.s32.totalorder %s12, 0
    %p110 = por %p108, %p109
    %p111 = scmp.ne.s32.totalorder %s100, %s103
    %p112 = scmp.eq.s32.totalorder %s17, 1
    %p113 = por %p111, %p112
    %p114 = scmp.ne.s32.totalorder %s103, %s104
    %p115 = scmp.eq.s32.totalorder %s17, 0
    %p116 = por %p114, %p115
    %p117 = scmp.ne.s32.totalorder %s103, %s104
    %p118 = scmp.eq.s32.totalorder %s18, 1
    %p119 = por %p117, %p118
    %p121 = scmp.ne.s32.totalorder %s104, %s120
    %p122 = scmp.eq.s32.totalorder %s18, 0
    %p123 = por %p121, %p122
    %s125 = sadd.s32 %s124, 1
    %p128 = scmp.eq.s32.totalorder %s12, 1
    %p129 = scmp.ne.s32.totalorder %s124, %s126
    %p130 = scmp.eq.s32.totalorder %s12, 0
    %p131 = por %p129, %p130
    %p132 = scmp.ne.s32.totalorder %s124, %s126
    %p133 = scmp.eq.s32.totalorder %s17, 1
    %p134 = por %p132, %p133
    %p135 = scmp.ne.s32.totalorder %s126, %s127
    %p136 = scmp.eq.s32.totalorder %s17, 0
    %p137 = por %p135, %p136
    %p138 = scmp.ne.s32.totalorder %s126, %s127
    %p139 = scmp.eq.s32.totalorder %s18, 1
    %p140 = por %p138, %p139
    %p142 = scmp.ne.s32.totalorder %s127, %s141
    %p143 = scmp.eq.s32.totalorder %s18, 0
    %p144 = por %p142, %p143
    %s146 = sadd.s32 %s145, 1
    %p149 = scmp.eq.s32.totalorder %s12, 1
    %p150 = scmp.ne.s32.totalorder %s145, %s147
    %p151 = scmp.eq.s32.totalorder %s12, 0
    %p152 = por %p150, %p151
    %p153 = scmp.ne.s32.totalorder %s145, %s147
    %p154 = scmp.eq.s32.totalorder %s17, 1
    %p155 = por %p153, %p154
    %p156 = scmp.ne.s32.totalorder %s147, %s148
    %p157 = scmp.eq.s32.totalorder %s17, 0
    %p158 = por %p156, %p157
    %p159 = scmp.ne.s32.totalorder %s147, %s148
    %p160 = scmp.eq.s32.totalorder %s18, 1
    %p161 = por %p159, %p160
    %p163 = scmp.ne.s32.totalorder %s148, %s162
    %p164 = scmp.eq.s32.totalorder %s18, 0
    %p165 = por %p163, %p164
    %s166 = ssub.s32 %s12, %s19
    %p167 = scmp.eq.s32.totalorder %s166, 0
    %s169 = sadd.s32 %s168, 1
    %s170 = scalar_select %p167, %s168, %s169
    %p173 = pneg %p167
    %p174 = scmp.eq.s32.totalorder %s12, 1
    %p175 = por %p173, %p174
    %p176 = scmp.ne.s32.totalorder %s168, %s171
    %p177 = scmp.eq.s32.totalorder %s12, 0
    %p178 = por %p176, %p177
    %p179 = scmp.ne.s32.totalorder %s168, %s171
    %p180 = scmp.eq.s32.totalorder %s17, 1
    %p181 = por %p179, %p180
    %p182 = scmp.ne.s32.totalorder %s171, %s172
    %p183 = scmp.eq.s32.totalorder %s17, 0
    %p184 = por %p182, %p183
    %p185 = scmp.ne.s32.totalorder %s171, %s172
    %p186 = scmp.eq.s32.totalorder %s18, 1
    %p187 = por %p185, %p186
    %p189 = scmp.ne.s32.totalorder %s172, %s188
    %p190 = scmp.eq.s32.totalorder %s18, 0
    %p191 = por %p189, %p190
    %p192 = scmp.le.s32.totalorder 1, %s12
    %p193 = scmp.lt.s32.totalorder %s12, 3
    %p194 = pnand %p192, %p193
    %p195 = pneg %p194
    // Predicated region
    $region9: #{lenet_forward.4} parent=5 // pred_check
      _
    $region10: #{lenet_forward.4} parent=5 // pred_check_branch
      %197 = sbr.rel (%p194) target = $region12
    $region11: #{lenet_forward.4} parent=5 // pred_region
      %s198 = ssub.s32 %s12, 1
      // Predicated region
      $region13: #{lenet_forward.4} parent=11 // pred_check
        %p199 = pneg %p137
      $region14: #{lenet_forward.4} parent=11 // pred_check_branch
        %201 = sbr.rel (%p199) target = $region16
      $region15: #{lenet_forward.4} parent=11 // pred_region
        _
      $region16: #{lenet_forward.4} parent=11 // pred_fallthru
        _
      // Predicated region
      $region17: #{lenet_forward.4} parent=11 // pred_check
        %p202 = pneg %p158
      $region18: #{lenet_forward.4} parent=11 // pred_check_branch
        %204 = sbr.rel (%p202) target = $region20
      $region19: #{lenet_forward.4} parent=11 // pred_region
        _
      $region20: #{lenet_forward.4} parent=11 // pred_fallthru
        _
    $region12: #{lenet_forward.4} parent=5 // pred_fallthru
      _
    %p205 = scmp.lt.s32.totalorder %s12, 2
    // Predicated region
    $region21: #{lenet_forward.4} parent=5 // pred_check
      %p206 = pneg %p205
    $region22: #{lenet_forward.4} parent=5 // pred_check_branch
      %208 = sbr.rel (%p206) target = $region24
    $region23: #{lenet_forward.4} parent=5 // pred_region
      // Predicated region
      $region25: #{lenet_forward.4} parent=23 // pred_check
        %p209 = pneg %p32
      $region26: #{lenet_forward.4} parent=23 // pred_check_branch
        %211 = sbr.rel (%p209) target = $region28
      $region27: #{lenet_forward.4} parent=23 // pred_region
        %p212 = scmp.lt.s32.totalorder %s12, 1
        %s213 = scalar_select %p212, %s12, 1
        %s214 = smul.addr %s213, 8
        %s215 = scalar_lea.vmem %s0, %s214
      $region28: #{lenet_forward.4} parent=23 // pred_fallthru
        _
      // Predicated region
      $region29: #{lenet_forward.4} parent=23 // pred_check
        %p216 = pneg %p58
      $region30: #{lenet_forward.4} parent=23 // pred_check_branch
        %218 = sbr.rel (%p216) target = $region32
      $region31: #{lenet_forward.4} parent=23 // pred_region
        %p219 = scmp.lt.s32.totalorder %s12, 1
        %s220 = scalar_select %p219, %s12, 1
        %s221 = smul.addr %s220, 8
        %s222 = scalar_lea.vmem %s1, %s221
      $region32: #{lenet_forward.4} parent=23 // pred_fallthru
        _
      // Predicated region
      $region33: #{lenet_forward.4} parent=23 // pred_check
        %p223 = pneg %p84
      $region34: #{lenet_forward.4} parent=23 // pred_check_branch
        %225 = sbr.rel (%p223) target = $region36
      $region35: #{lenet_forward.4} parent=23 // pred_region
        %p226 = scmp.lt.s32.totalorder %s12, 1
        %s227 = scalar_select %p226, %s12, 1
        %s228 = smul.addr %s227, 8
        %s229 = scalar_lea.vmem %s2, %s228
      $region36: #{lenet_forward.4} parent=23 // pred_fallthru
        _
      // Predicated region
      $region37: #{lenet_forward.4} parent=23 // pred_check
        %p230 = pneg %p110
      $region38: #{lenet_forward.4} parent=23 // pred_check_branch
        %232 = sbr.rel (%p230) target = $region40
      $region39: #{lenet_forward.4} parent=23 // pred_region
        %p233 = scmp.lt.s32.totalorder %s12, 1
        %s234 = scalar_select %p233, %s12, 1
        %s235 = smul.addr %s234, 8
        %s236 = scalar_lea.vmem %s3, %s235
      $region40: #{lenet_forward.4} parent=23 // pred_fallthru
        _
    $region24: #{lenet_forward.4} parent=5 // pred_fallthru
      _
    %p237 = scmp.le.s32.totalorder 1, %s12
    %p238 = scmp.lt.s32.totalorder %s12, 3
    %p239 = pnand %p237, %p238
    %p240 = pneg %p239
    // Predicated region
    $region41: #{lenet_forward.4} parent=5 // pred_check
      _
    $region42: #{lenet_forward.4} parent=5 // pred_check_branch
      %242 = sbr.rel (%p239) target = $region44
    $region43: #{lenet_forward.4} parent=5 // pred_region
      %s243 = ssub.s32 %s12, 1
      %p244 = scmp.lt.s32.totalorder %s17, 1
      %s245 = scalar_select %p244, %s17, 1
      %s246 = smul.addr %s245, 8
      %s247 = scalar_lea.vmem %s0, %s246
      %p248 = pneg %p38
      %p249 = pneg %p35
      %p250 = scmp.lt.s32.totalorder %s17, 1
      %s251 = scalar_select %p250, %s17, 1
      %s252 = smul.addr %s251, 8
      %s253 = scalar_lea.vmem %s1, %s252
      %p254 = pneg %p64
      %p255 = pneg %p61
      %p256 = scmp.lt.s32.totalorder %s17, 1
      %s257 = scalar_select %p256, %s17, 1
      %s258 = smul.addr %s257, 8
      %s259 = scalar_lea.vmem %s2, %s258
      %p260 = pneg %p90
      %p261 = pneg %p87
      %p262 = scmp.lt.s32.totalorder %s17, 1
      %s263 = scalar_select %p262, %s17, 1
      %s264 = smul.addr %s263, 8
      %s265 = scalar_lea.vmem %s3, %s264
      %p266 = pneg %p116
      %p267 = pneg %p113
      %p268 = pneg %p137
      %p269 = pneg %p134
      %p270 = pneg %p158
      %p271 = pneg %p155
      %p272 = pneg %p184
      %p273 = pneg %p181
      %p274 = scmp.lt.s32.totalorder %s17, 1
      %s275 = scalar_select %p274, %s17, 1
      %s276 = smul.addr %s275, 8
      %s277 = scalar_lea.vmem %s6, %s276
      %p278 = scmp.lt.s32.totalorder %s17, 1
      %s279 = scalar_select %p278, %s17, 1
      %s280 = smul.addr %s279, 8
      %s281 = scalar_lea.vmem %s0, %s280
      %p282 = scmp.lt.s32.totalorder %s17, 1
      %s283 = scalar_select %p282, %s17, 1
      %s284 = smul.addr %s283, 8
      %s285 = scalar_lea.vmem %s1, %s284
      %p286 = scmp.lt.s32.totalorder %s17, 1
      %s287 = scalar_select %p286, %s17, 1
      %s288 = smul.addr %s287, 8
      %s289 = scalar_lea.vmem %s2, %s288
      %p290 = scmp.lt.s32.totalorder %s17, 1
      %s291 = scalar_select %p290, %s17, 1
      %s292 = smul.addr %s291, 8
      %s293 = scalar_lea.vmem %s3, %s292
      %p294 = scmp.lt.s32.totalorder %s17, 1
      %s295 = scalar_select %p294, %s17, 1
      %s296 = smul.addr %s295, 8
      %s297 = scalar_lea.vmem %s6, %s296
      %v298 = vld [vmem:[%s281] sm:$0x7f]
      %v299 = vld [vmem:[%s285] sm:$0x7f]
      %v300 = vld [vmem:[%s289] sm:$0x7f]
      %v301 = vld [vmem:[%s293] sm:$0x7f]
      %303 = vrot.lane.b32.xlu0 %v299, 30
      %v304 = vpop.permute.xlu0 %303
      %307 = vrot.lane.b32.xlu0 %v298, 54
      %v308 = vpop.permute.xlu0 %307
      %310 = vrot.lane.b32.xlu0 %v299, 84
      %v311 = vpop.permute.xlu0 %310
      %313 = vrot.lane.b32.xlu0 %v298, 108
      %v314 = vpop.permute.xlu0 %313
      %317 = vrot.lane.b32.xlu0 %v300, 22
      %v318 = vpop.permute.xlu0 %317
      %321 = vrot.lane.b32.xlu0 %v301, 52
      %v322 = vpop.permute.xlu0 %321
      %324 = vrot.lane.b32.xlu0 %v300, 76
      %v325 = vpop.permute.xlu0 %324
      %327 = vrot.lane.b32.xlu0 %v301, 106
      %v328 = vpop.permute.xlu0 %327
      %330 = vrot.lane.b32.xlu0 %v300, 2
      %v331 = vpop.permute.xlu0 %330
      %v333 = vrot.slane %v298, 1
      %334 = vrot.lane.b32.xlu0 %v333, 44
      %v335 = vpop.permute.xlu0 %334
      %v337 = vrot.slane %v299, 1
      %338 = vrot.lane.b32.xlu0 %v337, 74
      %v339 = vpop.permute.xlu0 %338
      %341 = vrot.lane.b32.xlu0 %v333, 98
      %v342 = vpop.permute.xlu0 %341
      %345 = vrot.lane.b32.xlu0 %v333, 24
      %v346 = vpop.permute.xlu0 %345
      %v348 = vrot.slane %v300, 1
      %349 = vrot.lane.b32.xlu0 %v348, 66
      %v350 = vpop.permute.xlu0 %349
      %vm352 = vcmask 244736
      %v353 = vsel %vm352, %v298, %v304
      %vm354 = vcmask 490496
      %v355 = vsel %vm354, %v353, %v308
      %vm356 = vcmask 736256
      %v357 = vsel %vm356, %v355, %v311
      %vm358 = vcmask 982016
      %v359 = vsel %vm358, %v357, %v314
      %vm360 = vcmask 179200
      %v361 = vsel %vm360, %v314, %v318
      %vm362 = vcmask 424960
      %v363 = vsel %vm362, %v361, %v322
      %vm364 = vcmask 670720
      %v365 = vsel %vm364, %v363, %v325
      %vm366 = vcmask 916480
      %v367 = vsel %vm366, %v365, %v328
      %vm368 = vcmask 113664
      %v369 = vsel %vm368, %v328, %v331
      %vm370 = vcmask 359424
      %v371 = vsel %vm370, %v369, %v335
      %vm372 = vcmask 605184
      %v373 = vsel %vm372, %v371, %v339
      %vm374 = vcmask 850944
      %v375 = vsel %vm374, %v373, %v342
      %vm376 = vcmask 48128
      %v377 = vsel %vm376, %v342, %v337
      %vm378 = vcmask 293888
      %v379 = vsel %vm378, %v377, %v346
      %vm380 = vcmask 539648
      %v381 = vsel %vm380, %v379, %v350
      %382 = vrot.lane.b32.xlu0 %v300, 24
      %v383 = vpop.permute.xlu0 %382
      %385 = vrot.lane.b32.xlu0 %v301, 54
      %v386 = vpop.permute.xlu0 %385
      %388 = vrot.lane.b32.xlu0 %v300, 78
      %v389 = vpop.permute.xlu0 %388
      %391 = vrot.lane.b32.xlu0 %v333, 120
      %v392 = vpop.permute.xlu0 %391
      %394 = vrot.lane.b32.xlu0 %v337, 22
      %v395 = vpop.permute.xlu0 %394
      %397 = vrot.lane.b32.xlu0 %v333, 46
      %v398 = vpop.permute.xlu0 %397
      %400 = vrot.lane.b32.xlu0 %v337, 76
      %v401 = vpop.permute.xlu0 %400
      %403 = vrot.lane.b32.xlu0 %v333, 100
      %v404 = vpop.permute.xlu0 %403
      %v406 = vsel %vm352, %v301, %v383
      %v407 = vsel %vm354, %v406, %v386
      %v408 = vsel %vm356, %v407, %v389
      %v409 = vsel %vm358, %v408, %v392
      %v410 = vsel %vm360, %v392, %v395
      %v411 = vsel %vm362, %v410, %v398
      %v412 = vsel %vm364, %v411, %v401
      %v413 = vsel %vm366, %v412, %v404
      %v416 = vrot.slane %v409, 1
      %v417 = vrot.slane %v413, 1
      %v418 = vrot.slane %v404, 1
      %419 = vrot.lane.b32.xlu0 %v416, 96
      %v420 = vpop.permute.xlu0 %419
      %421 = vrot.lane.b32.xlu0 %v417, 96
      %v422 = vpop.permute.xlu0 %421
      %423 = vrot.lane.b32.xlu0 %v418, 96
      %v424 = vpop.permute.xlu0 %423
      %vm425 = vcmask 785408
      %v426 = vsel %vm425, %v420, %v422
      %v427 = vsel %vm425, %v422, %v424
      %v430 = vsel %vm425, %v381, %v420
      %v431 = vld [vmem:[%s4] sm:$0xff]
      %v432 = vld [vmem:[%s4 + $0x8] sm:$0xff]
      %v433 = vld [vmem:[%s4 + $0x10] sm:$0xff]
      %v434 = vld [vmem:[%s4 + $0x18] sm:$0xff]
      %v435 = vld [vmem:[%s4 + $0x20] sm:$0xff]
      %v436 = vld [vmem:[%s4 + $0x28] sm:$0xff]
      %v437 = vld [vmem:[%s4 + $0x30] sm:$0xff]
      %v438 = vld [vmem:[%s4 + $0x38] sm:$0xff]
      %v439 = vld [vmem:[%s4 + $0x40] sm:$0xff]
      %v440 = vld [vmem:[%s4 + $0x48] sm:$0xff]
      %v441 = vld [vmem:[%s4 + $0x50] sm:$0xff]
      %v442 = vld [vmem:[%s4 + $0x58] sm:$0xff]
      %v443 = vld [vmem:[%s4 + $0x60] sm:$0xff]
      %v444 = vld [vmem:[%s4 + $0x68] sm:$0xff]
      %v445 = vld [vmem:[%s4 + $0x70] sm:$0xff]
      %v446 = vld [vmem:[%s4 + $0x78] sm:$0xff]
      %v447 = vld [vmem:[%s4 + $0x80] sm:$0xff]
      %v448 = vld [vmem:[%s4 + $0x88] sm:$0xff]
      %v449 = vld [vmem:[%s4 + $0x90] sm:$0xff]
      %v450 = vld [vmem:[%s4 + $0x98] sm:$0xff]
      %v451 = vld [vmem:[%s4 + $0xa0] sm:$0xff]
      %v452 = vld [vmem:[%s4 + $0xa8] sm:$0xff]
      %v453 = vld [vmem:[%s4 + $0xb0] sm:$0xff]
      %v454 = vld [vmem:[%s4 + $0xb8] sm:$0xff]
      %v455 = vld [vmem:[%s4 + $0xc0] sm:$0xff]
      %v456 = vld [vmem:[%s4 + $0xc8] sm:$0xff]
      %v457 = vld [vmem:[%s4 + $0xd0] sm:$0xff]
      %v458 = vld [vmem:[%s4 + $0xd8] sm:$0xff]
      %v459 = vld [vmem:[%s4 + $0xe0] sm:$0xff]
      %v460 = vld [vmem:[%s4 + $0xe8] sm:$0xff]
      %v461 = vld [vmem:[%s4 + $0xf0] sm:$0xff]
      %v462 = vld [vmem:[%s4 + $0xf8] sm:$0xff]
      %v463 = vld [vmem:[%s4 + $0x100] sm:$0xff]
      %v464 = vld [vmem:[%s4 + $0x108] sm:$0xff]
      %v465 = vld [vmem:[%s4 + $0x110] sm:$0xff]
      %v466 = vld [vmem:[%s4 + $0x118] sm:$0xff]
      %v467 = vld [vmem:[%s4 + $0x120] sm:$0xff]
      %v468 = vld [vmem:[%s4 + $0x128] sm:$0xff]
      %v469 = vld [vmem:[%s4 + $0x130] sm:$0xff]
      %v470 = vld [vmem:[%s4 + $0x138] sm:$0xff]
      %v471 = vld [vmem:[%s4 + $0x140] sm:$0xff]
      %v472 = vld [vmem:[%s4 + $0x148] sm:$0xff]
      %v473 = vld [vmem:[%s4 + $0x150] sm:$0xff]
      %v474 = vld [vmem:[%s4 + $0x158] sm:$0xff]
      %v475 = vld [vmem:[%s4 + $0x160] sm:$0xff]
      %v476 = vld [vmem:[%s4 + $0x168] sm:$0xff]
      %v477 = vld [vmem:[%s4 + $0x170] sm:$0xff]
      %v478 = vld [vmem:[%s4 + $0x178] sm:$0xff]
      %v479 = vld [vmem:[%s4 + $0x180] sm:$0xff]
      %v480 = vld [vmem:[%s4 + $0x188] sm:$0xff]
      %v481 = vld [vmem:[%s4 + $0x190] sm:$0xff]
      %v482 = vld [vmem:[%s4 + $0x198] sm:$0xff]
      %v483 = vld [vmem:[%s4 + $0x1a0] sm:$0xff]
      %v484 = vld [vmem:[%s4 + $0x1a8] sm:$0xff]
      %v485 = vld [vmem:[%s4 + $0x1b0] sm:$0xff]
      %v486 = vld [vmem:[%s4 + $0x1b8] sm:$0xff]
      %v487 = vld [vmem:[%s4 + $0x1c0] sm:$0xff]
      %v488 = vld [vmem:[%s4 + $0x1c8] sm:$0xff]
      %v489 = vld [vmem:[%s4 + $0x1d0] sm:$0xff]
      %v490 = vld [vmem:[%s4 + $0x1d8] sm:$0xff]
      %v491 = vld [vmem:[%s4 + $0x1e0] sm:$0xff]
      %v492 = vld [vmem:[%s4 + $0x1e8] sm:$0xff]
      %v493 = vld [vmem:[%s4 + $0x1f0] sm:$0xff]
      %v494 = vld [vmem:[%s4 + $0x1f8] sm:$0xff]
      %v495 = vld [vmem:[%s4 + $0x200] sm:$0xff]
      %v496 = vld [vmem:[%s4 + $0x208] sm:$0xff]
      %v497 = vld [vmem:[%s4 + $0x210] sm:$0xff]
      %v498 = vld [vmem:[%s4 + $0x218] sm:$0xff]
      %v499 = vld [vmem:[%s4 + $0x220] sm:$0xff]
      %v500 = vld [vmem:[%s4 + $0x228] sm:$0xff]
      %v501 = vld [vmem:[%s4 + $0x230] sm:$0xff]
      %v502 = vld [vmem:[%s4 + $0x238] sm:$0xff]
      %v503 = vld [vmem:[%s4 + $0x240] sm:$0xff]
      %v504 = vld [vmem:[%s4 + $0x248] sm:$0xff]
      %v505 = vld [vmem:[%s4 + $0x250] sm:$0xff]
      %v506 = vld [vmem:[%s4 + $0x258] sm:$0xff]
      %v507 = vld [vmem:[%s4 + $0x260] sm:$0xff]
      %v508 = vld [vmem:[%s4 + $0x268] sm:$0xff]
      %v509 = vld [vmem:[%s4 + $0x270] sm:$0xff]
      %v510 = vld [vmem:[%s4 + $0x278] sm:$0xff]
      %v511 = vld [vmem:[%s4 + $0x280] sm:$0xff]
      %v512 = vld [vmem:[%s4 + $0x288] sm:$0xff]
      %v513 = vld [vmem:[%s4 + $0x290] sm:$0xff]
      %v514 = vld [vmem:[%s4 + $0x298] sm:$0xff]
      %v515 = vld [vmem:[%s4 + $0x2a0] sm:$0xff]
      %v516 = vld [vmem:[%s4 + $0x2a8] sm:$0xff]
      %v517 = vld [vmem:[%s4 + $0x2b0] sm:$0xff]
      %v518 = vld [vmem:[%s4 + $0x2b8] sm:$0xff]
      %v519 = vld [vmem:[%s4 + $0x2c0] sm:$0xff]
      %v520 = vld [vmem:[%s4 + $0x2c8] sm:$0xff]
      %v521 = vld [vmem:[%s4 + $0x2d0] sm:$0xff]
      %v522 = vld [vmem:[%s4 + $0x2d8] sm:$0xff]
      %v523 = vld [vmem:[%s4 + $0x2e0] sm:$0xff]
      %v524 = vld [vmem:[%s4 + $0x2e8] sm:$0x3f]
      %vm525 = vcmask 900096
      %v526 = vsel %vm525, %v427, 0
      %vm528 = vcmask 1045504
      %v530 = vsel %vm528, %v524, 0
      %532 = vmatprep.subr.mxu0 0.0
      %533 = vmatpush1.msra.mxu0 %v431
      %534 = vmatprep.subr.mxu0 0.0
      %535 = vmatpush1.msra.mxu0 %v432
      %536 = vmatprep.subr.mxu0 0.0
      %537 = vmatpush1.msra.mxu0 %v433
      %538 = vmatprep.subr.mxu0 0.0
      %539 = vmatpush1.msra.mxu0 %v434
      %540 = vmatprep.subr.mxu0 0.0
      %541 = vmatpush1.msra.mxu0 %v435
      %542 = vmatprep.subr.mxu0 0.0
      %543 = vmatpush1.msra.mxu0 %v436
      %544 = vmatprep.subr.mxu0 0.0
      %545 = vmatpush1.msra.mxu0 %v437
      %546 = vmatprep.subr.mxu0 0.0
      %547 = vmatpush1.msra.mxu0 %v438
      %548 = vmatprep.subr.mxu0 0.0
      %549 = vmatpush1.msra.mxu0 %v439
      %550 = vmatprep.subr.mxu0 0.0
      %551 = vmatpush1.msra.mxu0 %v440
      %552 = vmatprep.subr.mxu0 0.0
      %553 = vmatpush1.msra.mxu0 %v441
      %554 = vmatprep.subr.mxu0 0.0
      %555 = vmatpush1.msra.mxu0 %v442
      %556 = vmatprep.subr.mxu0 0.0
      %557 = vmatpush1.msra.mxu0 %v443
      %558 = vmatprep.subr.mxu0 0.0
      %559 = vmatpush1.msra.mxu0 %v444
      %560 = vmatprep.subr.mxu0 0.0
      %561 = vmatpush1.msra.mxu0 %v445
      %562 = vmatprep.subr.mxu0 0.0
      %563 = vmatpush1.msra.mxu0 %v446
      %564 = vmatprep.subr.mxu0 0.0
      %565 = vmatpush1.msra.mxu0 %v447
      %566 = vmatprep.subr.mxu0 0.0
      %567 = vmatpush1.msra.mxu0 %v448
      %568 = vmatprep.subr.mxu0 0.0
      %569 = vmatpush1.msra.mxu0 %v449
      %570 = vmatprep.subr.mxu0 0.0
      %571 = vmatpush1.msra.mxu0 %v450
      %572 = vmatprep.subr.mxu0 0.0
      %573 = vmatpush1.msra.mxu0 %v451
      %574 = vmatprep.subr.mxu0 0.0
      %575 = vmatpush1.msra.mxu0 %v452
      %576 = vmatprep.subr.mxu0 0.0
      %577 = vmatpush1.msra.mxu0 %v453
      %578 = vmatprep.subr.mxu0 0.0
      %579 = vmatpush1.msra.mxu0 %v454
      %580 = vmatprep.subr.mxu0 0.0
      %581 = vmatpush1.msra.mxu0 %v455
      %582 = vmatprep.subr.mxu0 0.0
      %583 = vmatpush1.msra.mxu0 %v456
      %584 = vmatprep.subr.mxu0 0.0
      %585 = vmatpush1.msra.mxu0 %v457
      %586 = vmatprep.subr.mxu0 0.0
      %587 = vmatpush1.msra.mxu0 %v458
      %588 = vmatprep.subr.mxu0 0.0
      %589 = vmatpush1.msra.mxu0 %v459
      %590 = vmatprep.subr.mxu0 0.0
      %591 = vmatpush1.msra.mxu0 %v460
      %592 = vmatprep.subr.mxu0 0.0
      %593 = vmatpush1.msra.mxu0 %v461
      %594 = vmatprep.subr.mxu0 0.0
      %595 = vmatpush1.msra.mxu0 %v462
      %596 = vmatprep.mubr.f32.mxu0 %v367
      %597 = vmatmul.mubr.f32.gmra.mrb[0].mxu0 %v359
      %v598 = vpop.f32.mrb[0].mxu0
      %v599 = vadd.f32 0.0, %v598
      %v600 = vpop.f32.mrb[0].mxu0
      %601 = vdwg.mxu0
      %602 = vmatprep.subr.mxu0 0.0
      %603 = vmatpush1.msra.mxu0 %v463
      %604 = vmatprep.subr.mxu0 0.0
      %605 = vmatpush1.msra.mxu0 %v464
      %606 = vmatprep.subr.mxu0 0.0
      %607 = vmatpush1.msra.mxu0 %v465
      %608 = vmatprep.subr.mxu0 0.0
      %609 = vmatpush1.msra.mxu0 %v466
      %610 = vmatprep.subr.mxu0 0.0
      %611 = vmatpush1.msra.mxu0 %v467
      %612 = vmatprep.subr.mxu0 0.0
      %613 = vmatpush1.msra.mxu0 %v468
      %614 = vmatprep.subr.mxu0 0.0
      %615 = vmatpush1.msra.mxu0 %v469
      %616 = vmatprep.subr.mxu0 0.0
      %617 = vmatpush1.msra.mxu0 %v470
      %618 = vmatprep.subr.mxu0 0.0
      %619 = vmatpush1.msra.mxu0 %v471
      %620 = vmatprep.subr.mxu0 0.0
      %621 = vmatpush1.msra.mxu0 %v472
      %622 = vmatprep.subr.mxu0 0.0
      %623 = vmatpush1.msra.mxu0 %v473
      %624 = vmatprep.subr.mxu0 0.0
      %625 = vmatpush1.msra.mxu0 %v474
      %626 = vmatprep.subr.mxu0 0.0
      %627 = vmatpush1.msra.mxu0 %v475
      %628 = vmatprep.subr.mxu0 0.0
      %629 = vmatpush1.msra.mxu0 %v476
      %630 = vmatprep.subr.mxu0 0.0
      %631 = vmatpush1.msra.mxu0 %v477
      %632 = vmatprep.subr.mxu0 0.0
      %633 = vmatpush1.msra.mxu0 %v478
      %634 = vmatprep.subr.mxu0 0.0
      %635 = vmatpush1.msra.mxu0 %v479
      %636 = vmatprep.subr.mxu0 0.0
      %637 = vmatpush1.msra.mxu0 %v480
      %638 = vmatprep.subr.mxu0 0.0
      %639 = vmatpush1.msra.mxu0 %v481
      %640 = vmatprep.subr.mxu0 0.0
      %641 = vmatpush1.msra.mxu0 %v482
      %642 = vmatprep.subr.mxu0 0.0
      %643 = vmatpush1.msra.mxu0 %v483
      %644 = vmatprep.subr.mxu0 0.0
      %645 = vmatpush1.msra.mxu0 %v484
      %646 = vmatprep.subr.mxu0 0.0
      %647 = vmatpush1.msra.mxu0 %v485
      %648 = vmatprep.subr.mxu0 0.0
      %649 = vmatpush1.msra.mxu0 %v486
      %650 = vmatprep.subr.mxu0 0.0
      %651 = vmatpush1.msra.mxu0 %v487
      %652 = vmatprep.subr.mxu0 0.0
      %653 = vmatpush1.msra.mxu0 %v488
      %654 = vmatprep.subr.mxu0 0.0
      %655 = vmatpush1.msra.mxu0 %v489
      %656 = vmatprep.subr.mxu0 0.0
      %657 = vmatpush1.msra.mxu0 %v490
      %658 = vmatprep.subr.mxu0 0.0
      %659 = vmatpush1.msra.mxu0 %v491
      %660 = vmatprep.subr.mxu0 0.0
      %661 = vmatpush1.msra.mxu0 %v492
      %662 = vmatprep.subr.mxu0 0.0
      %663 = vmatpush1.msra.mxu0 %v493
      %664 = vmatprep.subr.mxu0 0.0
      %665 = vmatpush1.msra.mxu0 %v494
      %666 = vmatprep.mubr.f32.mxu0 %v430
      %667 = vmatmul.mubr.f32.gmra.mrb[0].mxu0 %v375
      %v668 = vpop.f32.mrb[0].mxu0
      %v669 = vadd.f32 %v599, %v668
      %v670 = vpop.f32.mrb[0].mxu0
      %671 = vdwg.mxu0
      %672 = vmatprep.subr.mxu0 0.0
      %673 = vmatpush1.msra.mxu0 %v495
      %674 = vmatprep.subr.mxu0 0.0
      %675 = vmatpush1.msra.mxu0 %v496
      %676 = vmatprep.subr.mxu0 0.0
      %677 = vmatpush1.msra.mxu0 %v497
      %678 = vmatprep.subr.mxu0 0.0
      %679 = vmatpush1.msra.mxu0 %v498
      %680 = vmatprep.subr.mxu0 0.0
      %681 = vmatpush1.msra.mxu0 %v499
      %682 = vmatprep.subr.mxu0 0.0
      %683 = vmatpush1.msra.mxu0 %v500
      %684 = vmatprep.subr.mxu0 0.0
      %685 = vmatpush1.msra.mxu0 %v501
      %686 = vmatprep.subr.mxu0 0.0
      %687 = vmatpush1.msra.mxu0 %v502
      %688 = vmatprep.subr.mxu0 0.0
      %689 = vmatpush1.msra.mxu0 %v503
      %690 = vmatprep.subr.mxu0 0.0
      %691 = vmatpush1.msra.mxu0 %v504
      %692 = vmatprep.subr.mxu0 0.0
      %693 = vmatpush1.msra.mxu0 %v505
      %694 = vmatprep.subr.mxu0 0.0
      %695 = vmatpush1.msra.mxu0 %v506
      %696 = vmatprep.subr.mxu0 0.0
      %697 = vmatpush1.msra.mxu0 %v507
      %698 = vmatprep.subr.mxu0 0.0
      %699 = vmatpush1.msra.mxu0 %v508
      %700 = vmatprep.subr.mxu0 0.0
      %701 = vmatpush1.msra.mxu0 %v509
      %702 = vmatprep.subr.mxu0 0.0
      %703 = vmatpush1.msra.mxu0 %v510
      %704 = vmatprep.subr.mxu0 0.0
      %705 = vmatpush1.msra.mxu0 %v511
      %706 = vmatprep.subr.mxu0 0.0
      %707 = vmatpush1.msra.mxu0 %v512
      %708 = vmatprep.subr.mxu0 0.0
      %709 = vmatpush1.msra.mxu0 %v513
      %710 = vmatprep.subr.mxu0 0.0
      %711 = vmatpush1.msra.mxu0 %v514
      %712 = vmatprep.subr.mxu0 0.0
      %713 = vmatpush1.msra.mxu0 %v515
      %714 = vmatprep.subr.mxu0 0.0
      %715 = vmatpush1.msra.mxu0 %v516
      %716 = vmatprep.subr.mxu0 0.0
      %717 = vmatpush1.msra.mxu0 %v517
      %718 = vmatprep.subr.mxu0 0.0
      %719 = vmatpush1.msra.mxu0 %v518
      %720 = vmatprep.subr.mxu0 0.0
      %721 = vmatpush1.msra.mxu0 %v519
      %722 = vmatprep.subr.mxu0 0.0
      %723 = vmatpush1.msra.mxu0 %v520
      %724 = vmatprep.subr.mxu0 0.0
      %725 = vmatpush1.msra.mxu0 %v521
      %726 = vmatprep.subr.mxu0 0.0
      %727 = vmatpush1.msra.mxu0 %v522
      %728 = vmatprep.subr.mxu0 0.0
      %729 = vmatpush1.msra.mxu0 %v523
      %730 = vmatprep.subr.mxu0 0.0
      %731 = vmatpush1.msra.mxu0 %v530
      %732 = vmatprep.subr.mxu0 0.0
      %733 = vmatpush1.msra.mxu0 0.0
      %734 = vmatprep.subr.mxu0 0.0
      %735 = vmatpush1.msra.mxu0 0.0
      %736 = vmatprep.mubr.f32.mxu0 %v526
      %737 = vmatmul.mubr.f32.gmra.mrb[0].mxu0 %v426
      %v738 = vpop.f32.mrb[0].mxu0
      %v739 = vadd.f32 %v669, %v738
      %v740 = vpop.f32.mrb[0].mxu0
      %741 = vdwg.mxu0
      %742 = vrot.lane.b32.xlu0 %v298, 24
      %v743 = vpop.permute.xlu0 %742
      %745 = vrot.lane.b32.xlu0 %v299, 54
      %v746 = vpop.permute.xlu0 %745
      %748 = vrot.lane.b32.xlu0 %v298, 78
      %v749 = vpop.permute.xlu0 %748
      %751 = vrot.lane.b32.xlu0 %v299, 108
      %v752 = vpop.permute.xlu0 %751
      %754 = vrot.lane.b32.xlu0 %v301, 22
      %v755 = vpop.permute.xlu0 %754
      %757 = vrot.lane.b32.xlu0 %v300, 46
      %v758 = vpop.permute.xlu0 %757
      %760 = vrot.lane.b32.xlu0 %v301, 76
      %v761 = vpop.permute.xlu0 %760
      %763 = vrot.lane.b32.xlu0 %v300, 100
      %v764 = vpop.permute.xlu0 %763
      %766 = vrot.lane.b32.xlu0 %v301, 2
      %v767 = vpop.permute.xlu0 %766
      %769 = vrot.lane.b32.xlu0 %v337, 44
      %v770 = vpop.permute.xlu0 %769
      %772 = vrot.lane.b32.xlu0 %v333, 68
      %v773 = vpop.permute.xlu0 %772
      %775 = vrot.lane.b32.xlu0 %v337, 98
      %v776 = vpop.permute.xlu0 %775
      %778 = vrot.lane.b32.xlu0 %v333, 122
      %v779 = vpop.permute.xlu0 %778
      %781 = vrot.lane.b32.xlu0 %v337, 24
      %v782 = vpop.permute.xlu0 %781
      %v784 = vrot.slane %v301, 1
      %785 = vrot.lane.b32.xlu0 %v784, 66
      %v786 = vpop.permute.xlu0 %785
      %v788 = vsel %vm352, %v299, %v743
      %v789 = vsel %vm354, %v788, %v746
      %v790 = vsel %vm356, %v789, %v749
      %v791 = vsel %vm358, %v790, %v752
      %v792 = vsel %vm360, %v752, %v755
      %v793 = vsel %vm362, %v792, %v758
      %v794 = vsel %vm364, %v793, %v761
      %v795 = vsel %vm366, %v794, %v764
      %v796 = vsel %vm368, %v764, %v767
      %v797 = vsel %vm370, %v796, %v770
      %v798 = vsel %vm372, %v797, %v773
      %v799 = vsel %vm374, %v798, %v776
      %v800 = vsel %vm376, %v776, %v779
      %v801 = vsel %vm378, %v800, %v782
      %v802 = vsel %vm380, %v801, %v786
      %803 = vrot.lane.b32.xlu0 %v300, 122
      %v804 = vpop.permute.xlu0 %803
      %806 = vrot.lane.b32.xlu0 %v301, 24
      %v807 = vpop.permute.xlu0 %806
      %809 = vrot.lane.b32.xlu0 %v300, 48
      %v810 = vpop.permute.xlu0 %809
      %812 = vrot.lane.b32.xlu0 %v301, 78
      %v813 = vpop.permute.xlu0 %812
      %815 = vrot.lane.b32.xlu0 %v337, 120
      %v816 = vpop.permute.xlu0 %815
      %818 = vrot.lane.b32.xlu0 %v333, 16
      %v819 = vpop.permute.xlu0 %818
      %821 = vrot.lane.b32.xlu0 %v337, 46
      %v822 = vpop.permute.xlu0 %821
      %824 = vrot.lane.b32.xlu0 %v333, 70
      %v825 = vpop.permute.xlu0 %824
      %827 = vrot.lane.b32.xlu0 %v337, 100
      %v828 = vpop.permute.xlu0 %827
      %v830 = vsel %vm352, %v804, %v807
      %v831 = vsel %vm354, %v830, %v810
      %v832 = vsel %vm356, %v831, %v813
      %v833 = vsel %vm358, %v832, %v816
      %v834 = vsel %vm360, %v816, %v819
      %v835 = vsel %vm362, %v834, %v822
      %v836 = vsel %vm364, %v835, %v825
      %v837 = vsel %vm366, %v836, %v828
      %v840 = vrot.slane %v833, 1
      %v841 = vrot.slane %v837, 1
      %v842 = vrot.slane %v828, 1
      %843 = vrot.lane.b32.xlu0 %v840, 96
      %v844 = vpop.permute.xlu0 %843
      %845 = vrot.lane.b32.xlu0 %v841, 96
      %v846 = vpop.permute.xlu0 %845
      %847 = vrot.lane.b32.xlu0 %v842, 96
      %v848 = vpop.permute.xlu0 %847
      %v849 = vsel %vm425, %v844, %v846
      %v850 = vsel %vm425, %v846, %v848
      %v853 = vsel %vm425, %v802, %v844
      %v854 = vsel %vm525, %v850, 0
      %856 = vmatprep.subr.mxu0 0.0
      %857 = vmatpush1.msra.mxu0 %v431
      %858 = vmatprep.subr.mxu0 0.0
      %859 = vmatpush1.msra.mxu0 %v432
      %860 = vmatprep.subr.mxu0 0.0
      %861 = vmatpush1.msra.mxu0 %v433
      %862 = vmatprep.subr.mxu0 0.0
      %863 = vmatpush1.msra.mxu0 %v434
      %864 = vmatprep.subr.mxu0 0.0
      %865 = vmatpush1.msra.mxu0 %v435
      %866 = vmatprep.subr.mxu0 0.0
      %867 = vmatpush1.msra.mxu0 %v436
      %868 = vmatprep.subr.mxu0 0.0
      %869 = vmatpush1.msra.mxu0 %v437
      %870 = vmatprep.subr.mxu0 0.0
      %871 = vmatpush1.msra.mxu0 %v438
      %872 = vmatprep.subr.mxu0 0.0
      %873 = vmatpush1.msra.mxu0 %v439
      %874 = vmatprep.subr.mxu0 0.0
      %875 = vmatpush1.msra.mxu0 %v440
      %876 = vmatprep.subr.mxu0 0.0
      %877 = vmatpush1.msra.mxu0 %v441
      %878 = vmatprep.subr.mxu0 0.0
      %879 = vmatpush1.msra.mxu0 %v442
      %880 = vmatprep.subr.mxu0 0.0
      %881 = vmatpush1.msra.mxu0 %v443
      %882 = vmatprep.subr.mxu0 0.0
      %883 = vmatpush1.msra.mxu0 %v444
      %884 = vmatprep.subr.mxu0 0.0
      %885 = vmatpush1.msra.mxu0 %v445
      %886 = vmatprep.subr.mxu0 0.0
      %887 = vmatpush1.msra.mxu0 %v446
      %888 = vmatprep.subr.mxu0 0.0
      %889 = vmatpush1.msra.mxu0 %v447
      %890 = vmatprep.subr.mxu0 0.0
      %891 = vmatpush1.msra.mxu0 %v448
      %892 = vmatprep.subr.mxu0 0.0
      %893 = vmatpush1.msra.mxu0 %v449
      %894 = vmatprep.subr.mxu0 0.0
      %895 = vmatpush1.msra.mxu0 %v450
      %896 = vmatprep.subr.mxu0 0.0
      %897 = vmatpush1.msra.mxu0 %v451
      %898 = vmatprep.subr.mxu0 0.0
      %899 = vmatpush1.msra.mxu0 %v452
      %900 = vmatprep.subr.mxu0 0.0
      %901 = vmatpush1.msra.mxu0 %v453
      %902 = vmatprep.subr.mxu0 0.0
      %903 = vmatpush1.msra.mxu0 %v454
      %904 = vmatprep.subr.mxu0 0.0
      %905 = vmatpush1.msra.mxu0 %v455
      %906 = vmatprep.subr.mxu0 0.0
      %907 = vmatpush1.msra.mxu0 %v456
      %908 = vmatprep.subr.mxu0 0.0
      %909 = vmatpush1.msra.mxu0 %v457
      %910 = vmatprep.subr.mxu0 0.0
      %911 = vmatpush1.msra.mxu0 %v458
      %912 = vmatprep.subr.mxu0 0.0
      %913 = vmatpush1.msra.mxu0 %v459
      %914 = vmatprep.subr.mxu0 0.0
      %915 = vmatpush1.msra.mxu0 %v460
      %916 = vmatprep.subr.mxu0 0.0
      %917 = vmatpush1.msra.mxu0 %v461
      %918 = vmatprep.subr.mxu0 0.0
      %919 = vmatpush1.msra.mxu0 %v462
      %920 = vmatprep.mubr.f32.mxu0 %v795
      %921 = vmatmul.mubr.f32.gmra.mrb[0].mxu0 %v791
      %v922 = vpop.f32.mrb[0].mxu0
      %v923 = vadd.f32 0.0, %v922
      %v924 = vpop.f32.mrb[0].mxu0
      %925 = vdwg.mxu0
      %926 = vmatprep.subr.mxu0 0.0
      %927 = vmatpush1.msra.mxu0 %v463
      %928 = vmatprep.subr.mxu0 0.0
      %929 = vmatpush1.msra.mxu0 %v464
      %930 = vmatprep.subr.mxu0 0.0
      %931 = vmatpush1.msra.mxu0 %v465
      %932 = vmatprep.subr.mxu0 0.0
      %933 = vmatpush1.msra.mxu0 %v466
      %934 = vmatprep.subr.mxu0 0.0
      %935 = vmatpush1.msra.mxu0 %v467
      %936 = vmatprep.subr.mxu0 0.0
      %937 = vmatpush1.msra.mxu0 %v468
      %938 = vmatprep.subr.mxu0 0.0
      %939 = vmatpush1.msra.mxu0 %v469
      %940 = vmatprep.subr.mxu0 0.0
      %941 = vmatpush1.msra.mxu0 %v470
      %942 = vmatprep.subr.mxu0 0.0
      %943 = vmatpush1.msra.mxu0 %v471
      %944 = vmatprep.subr.mxu0 0.0
      %945 = vmatpush1.msra.mxu0 %v472
      %946 = vmatprep.subr.mxu0 0.0
      %947 = vmatpush1.msra.mxu0 %v473
      %948 = vmatprep.subr.mxu0 0.0
      %949 = vmatpush1.msra.mxu0 %v474
      %950 = vmatprep.subr.mxu0 0.0
      %951 = vmatpush1.msra.mxu0 %v475
      %952 = vmatprep.subr.mxu0 0.0
      %953 = vmatpush1.msra.mxu0 %v476
      %954 = vmatprep.subr.mxu0 0.0
      %955 = vmatpush1.msra.mxu0 %v477
      %956 = vmatprep.subr.mxu0 0.0
      %957 = vmatpush1.msra.mxu0 %v478
      %958 = vmatprep.subr.mxu0 0.0
      %959 = vmatpush1.msra.mxu0 %v479
      %960 = vmatprep.subr.mxu0 0.0
      %961 = vmatpush1.msra.mxu0 %v480
      %962 = vmatprep.subr.mxu0 0.0
      %963 = vmatpush1.msra.mxu0 %v481
      %964 = vmatprep.subr.mxu0 0.0
      %965 = vmatpush1.msra.mxu0 %v482
      %966 = vmatprep.subr.mxu0 0.0
      %967 = vmatpush1.msra.mxu0 %v483
      %968 = vmatprep.subr.mxu0 0.0
      %969 = vmatpush1.msra.mxu0 %v484
      %970 = vmatprep.subr.mxu0 0.0
      %971 = vmatpush1.msra.mxu0 %v485
      %972 = vmatprep.subr.mxu0 0.0
      %973 = vmatpush1.msra.mxu0 %v486
      %974 = vmatprep.subr.mxu0 0.0
      %975 = vmatpush1.msra.mxu0 %v487
      %976 = vmatprep.subr.mxu0 0.0
      %977 = vmatpush1.msra.mxu0 %v488
      %978 = vmatprep.subr.mxu0 0.0
      %979 = vmatpush1.msra.mxu0 %v489
      %980 = vmatprep.subr.mxu0 0.0
      %981 = vmatpush1.msra.mxu0 %v490
      %982 = vmatprep.subr.mxu0 0.0
      %983 = vmatpush1.msra.mxu0 %v491
      %984 = vmatprep.subr.mxu0 0.0
      %985 = vmatpush1.msra.mxu0 %v492
      %986 = vmatprep.subr.mxu0 0.0
      %987 = vmatpush1.msra.mxu0 %v493
      %988 = vmatprep.subr.mxu0 0.0
      %989 = vmatpush1.msra.mxu0 %v494
      %990 = vmatprep.mubr.f32.mxu0 %v853
      %991 = vmatmul.mubr.f32.gmra.mrb[0].mxu0 %v799
      %v992 = vpop.f32.mrb[0].mxu0
      %v993 = vadd.f32 %v923, %v992
      %v994 = vpop.f32.mrb[0].mxu0
      %995 = vdwg.mxu0
      %996 = vmatprep.subr.mxu0 0.0
      %997 = vmatpush1.msra.mxu0 %v495
      %998 = vmatprep.subr.mxu0 0.0
      %999 = vmatpush1.msra.mxu0 %v496
      %1000 = vmatprep.subr.mxu0 0.0
      %1001 = vmatpush1.msra.mxu0 %v497
      %1002 = vmatprep.subr.mxu0 0.0
      %1003 = vmatpush1.msra.mxu0 %v498
      %1004 = vmatprep.subr.mxu0 0.0
      %1005 = vmatpush1.msra.mxu0 %v499
      %1006 = vmatprep.subr.mxu0 0.0
      %1007 = vmatpush1.msra.mxu0 %v500
      %1008 = vmatprep.subr.mxu0 0.0
      %1009 = vmatpush1.msra.mxu0 %v501
      %1010 = vmatprep.subr.mxu0 0.0
      %1011 = vmatpush1.msra.mxu0 %v502
      %1012 = vmatprep.subr.mxu0 0.0
      %1013 = vmatpush1.msra.mxu0 %v503
      %1014 = vmatprep.subr.mxu0 0.0
      %1015 = vmatpush1.msra.mxu0 %v504
      %1016 = vmatprep.subr.mxu0 0.0
      %1017 = vmatpush1.msra.mxu0 %v505
      %1018 = vmatprep.subr.mxu0 0.0
      %1019 = vmatpush1.msra.mxu0 %v506
      %1020 = vmatprep.subr.mxu0 0.0
      %1021 = vmatpush1.msra.mxu0 %v507
      %1022 = vmatprep.subr.mxu0 0.0
      %1023 = vmatpush1.msra.mxu0 %v508
      %1024 = vmatprep.subr.mxu0 0.0
      %1025 = vmatpush1.msra.mxu0 %v509
      %1026 = vmatprep.subr.mxu0 0.0
      %1027 = vmatpush1.msra.mxu0 %v510
      %1028 = vmatprep.subr.mxu0 0.0
      %1029 = vmatpush1.msra.mxu0 %v511
      %1030 = vmatprep.subr.mxu0 0.0
      %1031 = vmatpush1.msra.mxu0 %v512
      %1032 = vmatprep.subr.mxu0 0.0
      %1033 = vmatpush1.msra.mxu0 %v513
      %1034 = vmatprep.subr.mxu0 0.0
      %1035 = vmatpush1.msra.mxu0 %v514
      %1036 = vmatprep.subr.mxu0 0.0
      %1037 = vmatpush1.msra.mxu0 %v515
      %1038 = vmatprep.subr.mxu0 0.0
      %1039 = vmatpush1.msra.mxu0 %v516
      %1040 = vmatprep.subr.mxu0 0.0
      %1041 = vmatpush1.msra.mxu0 %v517
      %1042 = vmatprep.subr.mxu0 0.0
      %1043 = vmatpush1.msra.mxu0 %v518
      %1044 = vmatprep.subr.mxu0 0.0
      %1045 = vmatpush1.msra.mxu0 %v519
      %1046 = vmatprep.subr.mxu0 0.0
      %1047 = vmatpush1.msra.mxu0 %v520
      %1048 = vmatprep.subr.mxu0 0.0
      %1049 = vmatpush1.msra.mxu0 %v521
      %1050 = vmatprep.subr.mxu0 0.0
      %1051 = vmatpush1.msra.mxu0 %v522
      %1052 = vmatprep.subr.mxu0 0.0
      %1053 = vmatpush1.msra.mxu0 %v523
      %1054 = vmatprep.subr.mxu0 0.0
      %1055 = vmatpush1.msra.mxu0 %v530
      %1056 = vmatprep.subr.mxu0 0.0
      %1057 = vmatpush1.msra.mxu0 0.0
      %1058 = vmatprep.subr.mxu0 0.0
      %1059 = vmatpush1.msra.mxu0 0.0
      %1060 = vmatprep.mubr.f32.mxu0 %v854
      %1061 = vmatmul.mubr.f32.gmra.mrb[0].mxu0 %v849
      %v1062 = vpop.f32.mrb[0].mxu0
      %v1063 = vadd.f32 %v993, %v1062
      %v1064 = vpop.f32.mrb[0].mxu0
      %1065 = vdwg.mxu0
      %v1066 = vmax.f32 %v739, %v1063
      %1067 = vrot.lane.b32.xlu0 %v301, 30
      %v1068 = vpop.permute.xlu0 %1067
      %1070 = vrot.lane.b32.xlu0 %v300, 54
      %v1071 = vpop.permute.xlu0 %1070
      %1073 = vrot.lane.b32.xlu0 %v301, 84
      %v1074 = vpop.permute.xlu0 %1073
      %1076 = vrot.lane.b32.xlu0 %v300, 108
      %v1077 = vpop.permute.xlu0 %1076
      %1079 = vrot.lane.b32.xlu0 %v333, 22
      %v1080 = vpop.permute.xlu0 %1079
      %1082 = vrot.lane.b32.xlu0 %v337, 52
      %v1083 = vpop.permute.xlu0 %1082
      %1085 = vrot.lane.b32.xlu0 %v333, 76
      %v1086 = vpop.permute.xlu0 %1085
      %1088 = vrot.lane.b32.xlu0 %v337, 106
      %v1089 = vpop.permute.xlu0 %1088
      %1091 = vrot.lane.b32.xlu0 %v333, 2
      %v1092 = vpop.permute.xlu0 %1091
      %1094 = vrot.lane.b32.xlu0 %v348, 44
      %v1095 = vpop.permute.xlu0 %1094
      %1097 = vrot.lane.b32.xlu0 %v784, 74
      %v1098 = vpop.permute.xlu0 %1097
      %1100 = vrot.lane.b32.xlu0 %v348, 98
      %v1101 = vpop.permute.xlu0 %1100
      %1104 = vrot.lane.b32.xlu0 %v348, 24
      %v1105 = vpop.permute.xlu0 %1104
      %v1107 = vrot.slane %v298, 2
      %1108 = vrot.lane.b32.xlu0 %v1107, 66
      %v1109 = vpop.permute.xlu0 %1108
      %v1111 = vsel %vm352, %v300, %v1068
      %v1112 = vsel %vm354, %v1111, %v1071
      %v1113 = vsel %vm356, %v1112, %v1074
      %v1114 = vsel %vm358, %v1113, %v1077
      %v1115 = vsel %vm360, %v1077, %v1080
      %v1116 = vsel %vm362, %v1115, %v1083
      %v1117 = vsel %vm364, %v1116, %v1086
      %v1118 = vsel %vm366, %v1117, %v1089
      %v1119 = vsel %vm368, %v1089, %v1092
      %v1120 = vsel %vm370, %v1119, %v1095
      %v1121 = vsel %vm372, %v1120, %v1098
      %v1122 = vsel %vm374, %v1121, %v1101
      %v1123 = vsel %vm376, %v1101, %v784
      %v1124 = vsel %vm378, %v1123, %v1105
      %v1125 = vsel %vm380, %v1124, %v1109
      %1126 = vrot.lane.b32.xlu0 %v300, 120
      %v1127 = vpop.permute.xlu0 %1126
      %v1129 = vsel %vm358, %v790, %v1127
      %v1130 = vsel %vm360, %v1127, %v755
      %v1131 = vsel %vm362, %v1130, %v758
      %v1132 = vsel %vm364, %v1131, %v761
      %v1133 = vsel %vm366, %v1132, %v764
      %v1136 = vrot.slane %v1129, 2
      %v1137 = vrot.slane %v1133, 2
      %v1138 = vrot.slane %v764, 2
      %1139 = vrot.lane.b32.xlu0 %v1136, 96
      %v1140 = vpop.permute.xlu0 %1139
      %1141 = vrot.lane.b32.xlu0 %v1137, 96
      %v1142 = vpop.permute.xlu0 %1141
      %1143 = vrot.lane.b32.xlu0 %v1138, 96
      %v1144 = vpop.permute.xlu0 %1143
      %v1145 = vsel %vm425, %v1140, %v1142
      %v1146 = vsel %vm425, %v1142, %v1144
      %v1149 = vsel %vm425, %v1125, %v1140
      %v1150 = vsel %vm525, %v1146, 0
      %1152 = vmatprep.subr.mxu0 0.0
      %1153 = vmatpush1.msra.mxu0 %v431
      %1154 = vmatprep.subr.mxu0 0.0
      %1155 = vmatpush1.msra.mxu0 %v432
      %1156 = vmatprep.subr.mxu0 0.0
      %1157 = vmatpush1.msra.mxu0 %v433
      %1158 = vmatprep.subr.mxu0 0.0
      %1159 = vmatpush1.msra.mxu0 %v434
      %1160 = vmatprep.subr.mxu0 0.0
      %1161 = vmatpush1.msra.mxu0 %v435
      %1162 = vmatprep.subr.mxu0 0.0
      %1163 = vmatpush1.msra.mxu0 %v436
      %1164 = vmatprep.subr.mxu0 0.0
      %1165 = vmatpush1.msra.mxu0 %v437
      %1166 = vmatprep.subr.mxu0 0.0
      %1167 = vmatpush1.msra.mxu0 %v438
      %1168 = vmatprep.subr.mxu0 0.0
      %1169 = vmatpush1.msra.mxu0 %v439
      %1170 = vmatprep.subr.mxu0 0.0
      %1171 = vmatpush1.msra.mxu0 %v440
      %1172 = vmatprep.subr.mxu0 0.0
      %1173 = vmatpush1.msra.mxu0 %v441
      %1174 = vmatprep.subr.mxu0 0.0
      %1175 = vmatpush1.msra.mxu0 %v442
      %1176 = vmatprep.subr.mxu0 0.0
      %1177 = vmatpush1.msra.mxu0 %v443
      %1178 = vmatprep.subr.mxu0 0.0
      %1179 = vmatpush1.msra.mxu0 %v444
      %1180 = vmatprep.subr.mxu0 0.0
      %1181 = vmatpush1.msra.mxu0 %v445
      %1182 = vmatprep.subr.mxu0 0.0
      %1183 = vmatpush1.msra.mxu0 %v446
      %1184 = vmatprep.subr.mxu0 0.0
      %1185 = vmatpush1.msra.mxu0 %v447
      %1186 = vmatprep.subr.mxu0 0.0
      %1187 = vmatpush1.msra.mxu0 %v448
      %1188 = vmatprep.subr.mxu0 0.0
      %1189 = vmatpush1.msra.mxu0 %v449
      %1190 = vmatprep.subr.mxu0 0.0
      %1191 = vmatpush1.msra.mxu0 %v450
      %1192 = vmatprep.subr.mxu0 0.0
      %1193 = vmatpush1.msra.mxu0 %v451
      %1194 = vmatprep.subr.mxu0 0.0
      %1195 = vmatpush1.msra.mxu0 %v452
      %1196 = vmatprep.subr.mxu0 0.0
      %1197 = vmatpush1.msra.mxu0 %v453
      %1198 = vmatprep.subr.mxu0 0.0
      %1199 = vmatpush1.msra.mxu0 %v454
      %1200 = vmatprep.subr.mxu0 0.0
      %1201 = vmatpush1.msra.mxu0 %v455
      %1202 = vmatprep.subr.mxu0 0.0
      %1203 = vmatpush1.msra.mxu0 %v456
      %1204 = vmatprep.subr.mxu0 0.0
      %1205 = vmatpush1.msra.mxu0 %v457
      %1206 = vmatprep.subr.mxu0 0.0
      %1207 = vmatpush1.msra.mxu0 %v458
      %1208 = vmatprep.subr.mxu0 0.0
      %1209 = vmatpush1.msra.mxu0 %v459
      %1210 = vmatprep.subr.mxu0 0.0
      %1211 = vmatpush1.msra.mxu0 %v460
      %1212 = vmatprep.subr.mxu0 0.0
      %1213 = vmatpush1.msra.mxu0 %v461
      %1214 = vmatprep.subr.mxu0 0.0
      %1215 = vmatpush1.msra.mxu0 %v462
      %1216 = vmatprep.mubr.f32.mxu0 %v1118
      %1217 = vmatmul.mubr.f32.gmra.mrb[0].mxu0 %v1114
      %v1218 = vpop.f32.mrb[0].mxu0
      %v1219 = vadd.f32 0.0, %v1218
      %v1220 = vpop.f32.mrb[0].mxu0
      %1221 = vdwg.mxu0
      %1222 = vmatprep.subr.mxu0 0.0
      %1223 = vmatpush1.msra.mxu0 %v463
      %1224 = vmatprep.subr.mxu0 0.0
      %1225 = vmatpush1.msra.mxu0 %v464
      %1226 = vmatprep.subr.mxu0 0.0
      %1227 = vmatpush1.msra.mxu0 %v465
      %1228 = vmatprep.subr.mxu0 0.0
      %1229 = vmatpush1.msra.mxu0 %v466
      %1230 = vmatprep.subr.mxu0 0.0
      %1231 = vmatpush1.msra.mxu0 %v467
      %1232 = vmatprep.subr.mxu0 0.0
      %1233 = vmatpush1.msra.mxu0 %v468
      %1234 = vmatprep.subr.mxu0 0.0
      %1235 = vmatpush1.msra.mxu0 %v469
      %1236 = vmatprep.subr.mxu0 0.0
      %1237 = vmatpush1.msra.mxu0 %v470
      %1238 = vmatprep.subr.mxu0 0.0
      %1239 = vmatpush1.msra.mxu0 %v471
      %1240 = vmatprep.subr.mxu0 0.0
      %1241 = vmatpush1.msra.mxu0 %v472
      %1242 = vmatprep.subr.mxu0 0.0
      %1243 = vmatpush1.msra.mxu0 %v473
      %1244 = vmatprep.subr.mxu0 0.0
      %1245 = vmatpush1.msra.mxu0 %v474
      %1246 = vmatprep.subr.mxu0 0.0
      %1247 = vmatpush1.msra.mxu0 %v475
      %1248 = vmatprep.subr.mxu0 0.0
      %1249 = vmatpush1.msra.mxu0 %v476
      %1250 = vmatprep.subr.mxu0 0.0
      %1251 = vmatpush1.msra.mxu0 %v477
      %1252 = vmatprep.subr.mxu0 0.0
      %1253 = vmatpush1.msra.mxu0 %v478
      %1254 = vmatprep.subr.mxu0 0.0
      %1255 = vmatpush1.msra.mxu0 %v479
      %1256 = vmatprep.subr.mxu0 0.0
      %1257 = vmatpush1.msra.mxu0 %v480
      %1258 = vmatprep.subr.mxu0 0.0
      %1259 = vmatpush1.msra.mxu0 %v481
      %1260 = vmatprep.subr.mxu0 0.0
      %1261 = vmatpush1.msra.mxu0 %v482
      %1262 = vmatprep.subr.mxu0 0.0
      %1263 = vmatpush1.msra.mxu0 %v483
      %1264 = vmatprep.subr.mxu0 0.0
      %1265 = vmatpush1.msra.mxu0 %v484
      %1266 = vmatprep.subr.mxu0 0.0
      %1267 = vmatpush1.msra.mxu0 %v485
      %1268 = vmatprep.subr.mxu0 0.0
      %1269 = vmatpush1.msra.mxu0 %v486
      %1270 = vmatprep.subr.mxu0 0.0
      %1271 = vmatpush1.msra.mxu0 %v487
      %1272 = vmatprep.subr.mxu0 0.0
      %1273 = vmatpush1.msra.mxu0 %v488
      %1274 = vmatprep.subr.mxu0 0.0
      %1275 = vmatpush1.msra.mxu0 %v489
      %1276 = vmatprep.subr.mxu0 0.0
      %1277 = vmatpush1.msra.mxu0 %v490
      %1278 = vmatprep.subr.mxu0 0.0
      %1279 = vmatpush1.msra.mxu0 %v491
      %1280 = vmatprep.subr.mxu0 0.0
      %1281 = vmatpush1.msra.mxu0 %v492
      %1282 = vmatprep.subr.mxu0 0.0
      %1283 = vmatpush1.msra.mxu0 %v493
      %1284 = vmatprep.subr.mxu0 0.0
      %1285 = vmatpush1.msra.mxu0 %v494
      %1286 = vmatprep.mubr.f32.mxu0 %v1149
      %1287 = vmatmul.mubr.f32.gmra.mrb[0].mxu0 %v1122
      %v1288 = vpop.f32.mrb[0].mxu0
      %v1289 = vadd.f32 %v1219, %v1288
      %v1290 = vpop.f32.mrb[0].mxu0
      %1291 = vdwg.mxu0
      %1292 = vmatprep.subr.mxu0 0.0
      %1293 = vmatpush1.msra.mxu0 %v495
      %1294 = vmatprep.subr.mxu0 0.0
      %1295 = vmatpush1.msra.mxu0 %v496
      %1296 = vmatprep.subr.mxu0 0.0
      %1297 = vmatpush1.msra.mxu0 %v497
      %1298 = vmatprep.subr.mxu0 0.0
      %1299 = vmatpush1.msra.mxu0 %v498
      %1300 = vmatprep.subr.mxu0 0.0
      %1301 = vmatpush1.msra.mxu0 %v499
      %1302 = vmatprep.subr.mxu0 0.0
      %1303 = vmatpush1.msra.mxu0 %v500
      %1304 = vmatprep.subr.mxu0 0.0
      %1305 = vmatpush1.msra.mxu0 %v501
      %1306 = vmatprep.subr.mxu0 0.0
      %1307 = vmatpush1.msra.mxu0 %v502
      %1308 = vmatprep.subr.mxu0 0.0
      %1309 = vmatpush1.msra.mxu0 %v503
      %1310 = vmatprep.subr.mxu0 0.0
      %1311 = vmatpush1.msra.mxu0 %v504
      %1312 = vmatprep.subr.mxu0 0.0
      %1313 = vmatpush1.msra.mxu0 %v505
      %1314 = vmatprep.subr.mxu0 0.0
      %1315 = vmatpush1.msra.mxu0 %v506
      %1316 = vmatprep.subr.mxu0 0.0
      %1317 = vmatpush1.msra.mxu0 %v507
      %1318 = vmatprep.subr.mxu0 0.0
      %1319 = vmatpush1.msra.mxu0 %v508
      %1320 = vmatprep.subr.mxu0 0.0
      %1321 = vmatpush1.msra.mxu0 %v509
      %1322 = vmatprep.subr.mxu0 0.0
      %1323 = vmatpush1.msra.mxu0 %v510
      %1324 = vmatprep.subr.mxu0 0.0
      %1325 = vmatpush1.msra.mxu0 %v511
      %1326 = vmatprep.subr.mxu0 0.0
      %1327 = vmatpush1.msra.mxu0 %v512
      %1328 = vmatprep.subr.mxu0 0.0
      %1329 = vmatpush1.msra.mxu0 %v513
      %1330 = vmatprep.subr.mxu0 0.0
      %1331 = vmatpush1.msra.mxu0 %v514
      %1332 = vmatprep.subr.mxu0 0.0
      %1333 = vmatpush1.msra.mxu0 %v515
      %1334 = vmatprep.subr.mxu0 0.0
      %1335 = vmatpush1.msra.mxu0 %v516
      %1336 = vmatprep.subr.mxu0 0.0
      %1337 = vmatpush1.msra.mxu0 %v517
      %1338 = vmatprep.subr.mxu0 0.0
      %1339 = vmatpush1.msra.mxu0 %v518
      %1340 = vmatprep.subr.mxu0 0.0
      %1341 = vmatpush1.msra.mxu0 %v519
      %1342 = vmatprep.subr.mxu0 0.0
      %1343 = vmatpush1.msra.mxu0 %v520
      %1344 = vmatprep.subr.mxu0 0.0
      %1345 = vmatpush1.msra.mxu0 %v521
      %1346 = vmatprep.subr.mxu0 0.0
      %1347 = vmatpush1.msra.mxu0 %v522
      %1348 = vmatprep.subr.mxu0 0.0
      %1349 = vmatpush1.msra.mxu0 %v523
      %1350 = vmatprep.subr.mxu0 0.0
      %1351 = vmatpush1.msra.mxu0 %v530
      %1352 = vmatprep.subr.mxu0 0.0
      %1353 = vmatpush1.msra.mxu0 0.0
      %1354 = vmatprep.subr.mxu0 0.0
      %1355 = vmatpush1.msra.mxu0 0.0
      %1356 = vmatprep.mubr.f32.mxu0 %v1150
      %1357 = vmatmul.mubr.f32.gmra.mrb[0].mxu0 %v1145
      %v1358 = vpop.f32.mrb[0].mxu0
      %v1359 = vadd.f32 %v1289, %v1358
      %v1360 = vpop.f32.mrb[0].mxu0
      %1361 = vdwg.mxu0
      %v1362 = vmax.f32 %v1066, %v1359
      %1363 = vrot.lane.b32.xlu0 %v301, 108
      %v1364 = vpop.permute.xlu0 %1363
      %1366 = vrot.lane.b32.xlu0 %v337, 2
      %v1367 = vpop.permute.xlu0 %1366
      %1369 = vrot.lane.b32.xlu0 %v784, 44
      %v1370 = vpop.permute.xlu0 %1369
      %1372 = vrot.lane.b32.xlu0 %v348, 68
      %v1373 = vpop.permute.xlu0 %1372
      %1375 = vrot.lane.b32.xlu0 %v784, 98
      %v1376 = vpop.permute.xlu0 %1375
      %1378 = vrot.lane.b32.xlu0 %v348, 122
      %v1379 = vpop.permute.xlu0 %1378
      %1381 = vrot.lane.b32.xlu0 %v784, 24
      %v1382 = vpop.permute.xlu0 %1381
      %v1384 = vrot.slane %v299, 2
      %1385 = vrot.lane.b32.xlu0 %v1384, 66
      %v1386 = vpop.permute.xlu0 %1385
      %v1388 = vsel %vm358, %v408, %v1364
      %v1389 = vsel %vm360, %v1364, %v395
      %v1390 = vsel %vm362, %v1389, %v398
      %v1391 = vsel %vm364, %v1390, %v401
      %v1392 = vsel %vm366, %v1391, %v404
      %v1393 = vsel %vm368, %v404, %v1367
      %v1394 = vsel %vm370, %v1393, %v1370
      %v1395 = vsel %vm372, %v1394, %v1373
      %v1396 = vsel %vm374, %v1395, %v1376
      %v1397 = vsel %vm376, %v1376, %v1379
      %v1398 = vsel %vm378, %v1397, %v1382
      %v1399 = vsel %vm380, %v1398, %v1386
      %1400 = vrot.lane.b32.xlu0 %v298, 122
      %v1401 = vpop.permute.xlu0 %1400
      %1403 = vrot.lane.b32.xlu0 %v299, 24
      %v1404 = vpop.permute.xlu0 %1403
      %1406 = vrot.lane.b32.xlu0 %v298, 48
      %v1407 = vpop.permute.xlu0 %1406
      %1409 = vrot.lane.b32.xlu0 %v299, 78
      %v1410 = vpop.permute.xlu0 %1409
      %1412 = vrot.lane.b32.xlu0 %v301, 120
      %v1413 = vpop.permute.xlu0 %1412
      %1415 = vrot.lane.b32.xlu0 %v300, 16
      %v1416 = vpop.permute.xlu0 %1415
      %1418 = vrot.lane.b32.xlu0 %v301, 46
      %v1419 = vpop.permute.xlu0 %1418
      %1421 = vrot.lane.b32.xlu0 %v300, 70
      %v1422 = vpop.permute.xlu0 %1421
      %1424 = vrot.lane.b32.xlu0 %v301, 100
      %v1425 = vpop.permute.xlu0 %1424
      %v1427 = vsel %vm352, %v1401, %v1404
      %v1428 = vsel %vm354, %v1427, %v1407
      %v1429 = vsel %vm356, %v1428, %v1410
      %v1430 = vsel %vm358, %v1429, %v1413
      %v1431 = vsel %vm360, %v1413, %v1416
      %v1432 = vsel %vm362, %v1431, %v1419
      %v1433 = vsel %vm364, %v1432, %v1422
      %v1434 = vsel %vm366, %v1433, %v1425
      %v1437 = vrot.slane %v1430, 2
      %v1438 = vrot.slane %v1434, 2
      %v1439 = vrot.slane %v1425, 2
      %1440 = vrot.lane.b32.xlu0 %v1437, 96
      %v1441 = vpop.permute.xlu0 %1440
      %1442 = vrot.lane.b32.xlu0 %v1438, 96
      %v1443 = vpop.permute.xlu0 %1442
      %1444 = vrot.lane.b32.xlu0 %v1439, 96
      %v1445 = vpop.permute.xlu0 %1444
      %v1446 = vsel %vm425, %v1441, %v1443
      %v1447 = vsel %vm425, %v1443, %v1445
      %v1450 = vsel %vm425, %v1399, %v1441
      %v1451 = vsel %vm525, %v1447, 0
      %1453 = vmatprep.subr.mxu0 0.0
      %1454 = vmatpush1.msra.mxu0 %v431
      %1455 = vmatprep.subr.mxu0 0.0
      %1456 = vmatpush1.msra.mxu0 %v432
      %1457 = vmatprep.subr.mxu0 0.0
      %1458 = vmatpush1.msra.mxu0 %v433
      %1459 = vmatprep.subr.mxu0 0.0
      %1460 = vmatpush1.msra.mxu0 %v434
      %1461 = vmatprep.subr.mxu0 0.0
      %1462 = vmatpush1.msra.mxu0 %v435
      %1463 = vmatprep.subr.mxu0 0.0
      %1464 = vmatpush1.msra.mxu0 %v436
      %1465 = vmatprep.subr.mxu0 0.0
      %1466 = vmatpush1.msra.mxu0 %v437
      %1467 = vmatprep.subr.mxu0 0.0
      %1468 = vmatpush1.msra.mxu0 %v438
      %1469 = vmatprep.subr.mxu0 0.0
      %1470 = vmatpush1.msra.mxu0 %v439
      %1471 = vmatprep.subr.mxu0 0.0
      %1472 = vmatpush1.msra.mxu0 %v440
      %1473 = vmatprep.subr.mxu0 0.0
      %1474 = vmatpush1.msra.mxu0 %v441
      %1475 = vmatprep.subr.mxu0 0.0
      %1476 = vmatpush1.msra.mxu0 %v442
      %1477 = vmatprep.subr.mxu0 0.0
      %1478 = vmatpush1.msra.mxu0 %v443
      %1479 = vmatprep.subr.mxu0 0.0
      %1480 = vmatpush1.msra.mxu0 %v444
      %1481 = vmatprep.subr.mxu0 0.0
      %1482 = vmatpush1.msra.mxu0 %v445
      %1483 = vmatprep.subr.mxu0 0.0
      %1484 = vmatpush1.msra.mxu0 %v446
      %1485 = vmatprep.subr.mxu0 0.0
      %1486 = vmatpush1.msra.mxu0 %v447
      %1487 = vmatprep.subr.mxu0 0.0
      %1488 = vmatpush1.msra.mxu0 %v448
      %1489 = vmatprep.subr.mxu0 0.0
      %1490 = vmatpush1.msra.mxu0 %v449
      %1491 = vmatprep.subr.mxu0 0.0
      %1492 = vmatpush1.msra.mxu0 %v450
      %1493 = vmatprep.subr.mxu0 0.0
      %1494 = vmatpush1.msra.mxu0 %v451
      %1495 = vmatprep.subr.mxu0 0.0
      %1496 = vmatpush1.msra.mxu0 %v452
      %1497 = vmatprep.subr.mxu0 0.0
      %1498 = vmatpush1.msra.mxu0 %v453
      %1499 = vmatprep.subr.mxu0 0.0
      %1500 = vmatpush1.msra.mxu0 %v454
      %1501 = vmatprep.subr.mxu0 0.0
      %1502 = vmatpush1.msra.mxu0 %v455
      %1503 = vmatprep.subr.mxu0 0.0
      %1504 = vmatpush1.msra.mxu0 %v456
      %1505 = vmatprep.subr.mxu0 0.0
      %1506 = vmatpush1.msra.mxu0 %v457
      %1507 = vmatprep.subr.mxu0 0.0
      %1508 = vmatpush1.msra.mxu0 %v458
      %1509 = vmatprep.subr.mxu0 0.0
      %1510 = vmatpush1.msra.mxu0 %v459
      %1511 = vmatprep.subr.mxu0 0.0
      %1512 = vmatpush1.msra.mxu0 %v460
      %1513 = vmatprep.subr.mxu0 0.0
      %1514 = vmatpush1.msra.mxu0 %v461
      %1515 = vmatprep.subr.mxu0 0.0
      %1516 = vmatpush1.msra.mxu0 %v462
      %1517 = vmatprep.mubr.f32.mxu0 %v1392
      %1518 = vmatmul.mubr.f32.gmra.mrb[0].mxu0 %v1388
      %v1519 = vpop.f32.mrb[0].mxu0
      %v1520 = vadd.f32 0.0, %v1519
      %v1521 = vpop.f32.mrb[0].mxu0
      %1522 = vdwg.mxu0
      %1523 = vmatprep.subr.mxu0 0.0
      %1524 = vmatpush1.msra.mxu0 %v463
      %1525 = vmatprep.subr.mxu0 0.0
      %1526 = vmatpush1.msra.mxu0 %v464
      %1527 = vmatprep.subr.mxu0 0.0
      %1528 = vmatpush1.msra.mxu0 %v465
      %1529 = vmatprep.subr.mxu0 0.0
      %1530 = vmatpush1.msra.mxu0 %v466
      %1531 = vmatprep.subr.mxu0 0.0
      %1532 = vmatpush1.msra.mxu0 %v467
      %1533 = vmatprep.subr.mxu0 0.0
      %1534 = vmatpush1.msra.mxu0 %v468
      %1535 = vmatprep.subr.mxu0 0.0
      %1536 = vmatpush1.msra.mxu0 %v469
      %1537 = vmatprep.subr.mxu0 0.0
      %1538 = vmatpush1.msra.mxu0 %v470
      %1539 = vmatprep.subr.mxu0 0.0
      %1540 = vmatpush1.msra.mxu0 %v471
      %1541 = vmatprep.subr.mxu0 0.0
      %1542 = vmatpush1.msra.mxu0 %v472
      %1543 = vmatprep.subr.mxu0 0.0
      %1544 = vmatpush1.msra.mxu0 %v473
      %1545 = vmatprep.subr.mxu0 0.0
      %1546 = vmatpush1.msra.mxu0 %v474
      %1547 = vmatprep.subr.mxu0 0.0
      %1548 = vmatpush1.msra.mxu0 %v475
      %1549 = vmatprep.subr.mxu0 0.0
      %1550 = vmatpush1.msra.mxu0 %v476
      %1551 = vmatprep.subr.mxu0 0.0
      %1552 = vmatpush1.msra.mxu0 %v477
      %1553 = vmatprep.subr.mxu0 0.0
      %1554 = vmatpush1.msra.mxu0 %v478
      %1555 = vmatprep.subr.mxu0 0.0
      %1556 = vmatpush1.msra.mxu0 %v479
      %1557 = vmatprep.subr.mxu0 0.0
      %1558 = vmatpush1.msra.mxu0 %v480
      %1559 = vmatprep.subr.mxu0 0.0
      %1560 = vmatpush1.msra.mxu0 %v481
      %1561 = vmatprep.subr.mxu0 0.0
      %1562 = vmatpush1.msra.mxu0 %v482
      %1563 = vmatprep.subr.mxu0 0.0
      %1564 = vmatpush1.msra.mxu0 %v483
      %1565 = vmatprep.subr.mxu0 0.0
      %1566 = vmatpush1.msra.mxu0 %v484
      %1567 = vmatprep.subr.mxu0 0.0
      %1568 = vmatpush1.msra.mxu0 %v485
      %1569 = vmatprep.subr.mxu0 0.0
      %1570 = vmatpush1.msra.mxu0 %v486
      %1571 = vmatprep.subr.mxu0 0.0
      %1572 = vmatpush1.msra.mxu0 %v487
      %1573 = vmatprep.subr.mxu0 0.0
      %1574 = vmatpush1.msra.mxu0 %v488
      %1575 = vmatprep.subr.mxu0 0.0
      %1576 = vmatpush1.msra.mxu0 %v489
      %1577 = vmatprep.subr.mxu0 0.0
      %1578 = vmatpush1.msra.mxu0 %v490
      %1579 = vmatprep.subr.mxu0 0.0
      %1580 = vmatpush1.msra.mxu0 %v491
      %1581 = vmatprep.subr.mxu0 0.0
      %1582 = vmatpush1.msra.mxu0 %v492
      %1583 = vmatprep.subr.mxu0 0.0
      %1584 = vmatpush1.msra.mxu0 %v493
      %1585 = vmatprep.subr.mxu0 0.0
      %1586 = vmatpush1.msra.mxu0 %v494
      %1587 = vmatprep.mubr.f32.mxu0 %v1450
      %1588 = vmatmul.mubr.f32.gmra.mrb[0].mxu0 %v1396
      %v1589 = vpop.f32.mrb[0].mxu0
      %v1590 = vadd.f32 %v1520, %v1589
      %v1591 = vpop.f32.mrb[0].mxu0
      %1592 = vdwg.mxu0
      %1593 = vmatprep.subr.mxu0 0.0
      %1594 = vmatpush1.msra.mxu0 %v495
      %1595 = vmatprep.subr.mxu0 0.0
      %1596 = vmatpush1.msra.mxu0 %v496
      %1597 = vmatprep.subr.mxu0 0.0
      %1598 = vmatpush1.msra.mxu0 %v497
      %1599 = vmatprep.subr.mxu0 0.0
      %1600 = vmatpush1.msra.mxu0 %v498
      %1601 = vmatprep.subr.mxu0 0.0
      %1602 = vmatpush1.msra.mxu0 %v499
      %1603 = vmatprep.subr.mxu0 0.0
      %1604 = vmatpush1.msra.mxu0 %v500
      %1605 = vmatprep.subr.mxu0 0.0
      %1606 = vmatpush1.msra.mxu0 %v501
      %1607 = vmatprep.subr.mxu0 0.0
      %1608 = vmatpush1.msra.mxu0 %v502
      %1609 = vmatprep.subr.mxu0 0.0
      %1610 = vmatpush1.msra.mxu0 %v503
      %1611 = vmatprep.subr.mxu0 0.0
      %1612 = vmatpush1.msra.mxu0 %v504
      %1613 = vmatprep.subr.mxu0 0.0
      %1614 = vmatpush1.msra.mxu0 %v505
      %1615 = vmatprep.subr.mxu0 0.0
      %1616 = vmatpush1.msra.mxu0 %v506
      %1617 = vmatprep.subr.mxu0 0.0
      %1618 = vmatpush1.msra.mxu0 %v507
      %1619 = vmatprep.subr.mxu0 0.0
      %1620 = vmatpush1.msra.mxu0 %v508
      %1621 = vmatprep.subr.mxu0 0.0
      %1622 = vmatpush1.msra.mxu0 %v509
      %1623 = vmatprep.subr.mxu0 0.0
      %1624 = vmatpush1.msra.mxu0 %v510
      %1625 = vmatprep.subr.mxu0 0.0
      %1626 = vmatpush1.msra.mxu0 %v511
      %1627 = vmatprep.subr.mxu0 0.0
      %1628 = vmatpush1.msra.mxu0 %v512
      %1629 = vmatprep.subr.mxu0 0.0
      %1630 = vmatpush1.msra.mxu0 %v513
      %1631 = vmatprep.subr.mxu0 0.0
      %1632 = vmatpush1.msra.mxu0 %v514
      %1633 = vmatprep.subr.mxu0 0.0
      %1634 = vmatpush1.msra.mxu0 %v515
      %1635 = vmatprep.subr.mxu0 0.0
      %1636 = vmatpush1.msra.mxu0 %v516
      %1637 = vmatprep.subr.mxu0 0.0
      %1638 = vmatpush1.msra.mxu0 %v517
      %1639 = vmatprep.subr.mxu0 0.0
      %1640 = vmatpush1.msra.mxu0 %v518
      %1641 = vmatprep.subr.mxu0 0.0
      %1642 = vmatpush1.msra.mxu0 %v519
      %1643 = vmatprep.subr.mxu0 0.0
      %1644 = vmatpush1.msra.mxu0 %v520
      %1645 = vmatprep.subr.mxu0 0.0
      %1646 = vmatpush1.msra.mxu0 %v521
      %1647 = vmatprep.subr.mxu0 0.0
      %1648 = vmatpush1.msra.mxu0 %v522
      %1649 = vmatprep.subr.mxu0 0.0
      %1650 = vmatpush1.msra.mxu0 %v523
      %1651 = vmatprep.subr.mxu0 0.0
      %1652 = vmatpush1.msra.mxu0 %v530
      %1653 = vmatprep.subr.mxu0 0.0
      %1654 = vmatpush1.msra.mxu0 0.0
      %1655 = vmatprep.subr.mxu0 0.0
      %1656 = vmatpush1.msra.mxu0 0.0
      %1657 = vmatprep.mubr.f32.mxu0 %v1451
      %1658 = vmatmul.mubr.f32.gmra.mrb[0].mxu0 %v1446
      %v1659 = vpop.f32.mrb[0].mxu0
      %v1660 = vadd.f32 %v1590, %v1659
      %v1661 = vpop.f32.mrb[0].mxu0
      %1662 = vdwg.mxu0
      %v1663 = vmax.f32 %v1362, %v1660
      %v1664 = vld [vmem:[%s5] sm:$0x1]
      %v1666 = vlaneseq
      %v1667 = vshrl.u32 %v1666, 7
      %v1668 = vsub.s32 0, %v1667
      %v1669 = vrot.slane %v1664, %v1668
      %v1671 = vadd.f32 %v1663, %v1669
      %v1672 = vmax.f32 %v1671, 0.0
      %vm1673 = vcmask 651264
      %1674 = vst.msk [vmem:[%s297] sm:$0x1f] %vm1673, %v1672
      %p1675 = scmp.lt.s32.totalorder %s17, 1
      %s1676 = scalar_select %p1675, %s17, 1
      %s1677 = smul.addr %s1676, 8
      %s1678 = scalar_lea.vmem %s6, %s1677
      // Predicated region
      $region45: #{lenet_forward.4} parent=43 // pred_check
        %p1679 = pneg %p181
      $region46: #{lenet_forward.4} parent=43 // pred_check_branch
        %1681 = sbr.rel (%p1679) target = $region48
      $region47: #{lenet_forward.4} parent=43 // pred_region
        _
      $region48: #{lenet_forward.4} parent=43 // pred_fallthru
        _
    $region44: #{lenet_forward.4} parent=5 // pred_fallthru
      _
    %p1682 = scmp.le.s32.totalorder 2, %s12
    // Predicated region
    $region49: #{lenet_forward.4} parent=5 // pred_check
      %p1683 = pneg %p1682
    $region50: #{lenet_forward.4} parent=5 // pred_check_branch
      %1685 = sbr.rel (%p1683) target = $region52
    $region51: #{lenet_forward.4} parent=5 // pred_region
      %s1686 = ssub.s32 %s12, 2
      // Predicated region
      $region53: #{lenet_forward.4} parent=51 // pred_check
        %p1687 = pneg %p187
      $region54: #{lenet_forward.4} parent=51 // pred_check_branch
        %1689 = sbr.rel (%p1687) target = $region56
      $region55: #{lenet_forward.4} parent=51 // pred_region
        %p1690 = scmp.lt.s32.totalorder %s18, 1
        %s1691 = scalar_select %p1690, %s18, 1
        %s1692 = smul.addr %s1691, 8
        %s1693 = scalar_lea.vmem %s6, %s1692
      $region56: #{lenet_forward.4} parent=51 // pred_fallthru
        _
    $region52: #{lenet_forward.4} parent=5 // pred_fallthru
      _
  $region6: #{lenet_forward.4} parent=0 // loop_footer
    %s16 = sadd.s32 1, %s12
  $region7: #{lenet_forward.4} parent=0 // loop_footer_branch
    %11 = sbr.rel target = $region3
  $region8: #{lenet_forward.4} parent=0 // loop_exit
    _

// kernel: lenet_forward.5
$region0: #{lenet_forward.5}
  #allocation0 [shape = 'u32[]', space=smem, size = 0x4, offset = 0x4, fixed_abs, tag = 'smem constant byte address 0x4 - core index']
  #allocation1 [shape = 'u32[144,128]{1,0:T(1,128)}', space=vmem, size = 0x12000, scoped, tag = 'internal scratch']
  %s0 = inlined_call_operand.vmem [shape: f32[2,400], index: 0, kind: input, shape index: {}]
  %s1 = inlined_call_operand.vmem [shape: f32[400,120], index: 1, kind: input, shape index: {}]
  %s2 = inlined_call_operand.vmem [shape: f32[1,120], index: 2, kind: input, shape index: {}]
  %s3 = inlined_call_operand.vmem [shape: f32[120,84], index: 3, kind: input, shape index: {}]
  %s4 = inlined_call_operand.vmem [shape: f32[1,84], index: 4, kind: input, shape index: {}]
  %s5 = inlined_call_operand.vmem [shape: f32[84,10], index: 5, kind: input, shape index: {}]
  %s6 = inlined_call_operand.vmem [shape: f32[1,10], index: 6, kind: input, shape index: {}]
  %s7 = inlined_call_operand.hbm [shape: f32[2,10], index: 7, kind: output, shape index: {}]
  %s8 = sld [smem:[#allocation0]]
  $region38: #{lenet_forward.5} parent=0
    _
  %s10 = ssub.s32 1, %s8
  %s11 = scalar_select 0, %s10, %s8
  $region1: #{lenet_forward.5} parent=0
    #allocation2 [shape = 'u8[1024]{0}', space=vmem, size = 0x400, scoped, tag = 'output window, operand 0, single buffered']
    #allocation3 [shape = 's32[1]{0}', space=sflag, size = 0x4, scoped, tag = 'scoped memory for lenet_forward.5']
    %12 = vsyncpa [#allocation3], 0
    // Predicated region
    $region2: #{lenet_forward.5} parent=1 // pred_check
      _
    $region3: #{lenet_forward.5} parent=1 // pred_check_branch
      %14 = sbr.rel (0) target = $region5
    $region4: #{lenet_forward.5} parent=1 // pred_region
      _
    $region5: #{lenet_forward.5} parent=1 // pred_fallthru
      _
    // Predicated region
    $region6: #{lenet_forward.5} parent=1 // pred_check
      _
    $region7: #{lenet_forward.5} parent=1 // pred_check_branch
      %16 = sbr.rel (0) target = $region9
    $region8: #{lenet_forward.5} parent=1 // pred_region
      _
    $region9: #{lenet_forward.5} parent=1 // pred_fallthru
      _
    // Predicated region
    $region10: #{lenet_forward.5} parent=1 // pred_check
      _
    $region11: #{lenet_forward.5} parent=1 // pred_check_branch
      %18 = sbr.rel (0) target = $region13
    $region12: #{lenet_forward.5} parent=1 // pred_region
      _
    $region13: #{lenet_forward.5} parent=1 // pred_fallthru
      _
    // Predicated region
    $region14: #{lenet_forward.5} parent=1 // pred_check
      _
    $region15: #{lenet_forward.5} parent=1 // pred_check_branch
      %20 = sbr.rel (0) target = $region17
    $region16: #{lenet_forward.5} parent=1 // pred_region
      _
    $region17: #{lenet_forward.5} parent=1 // pred_fallthru
      _
    // Predicated region
    $region18: #{lenet_forward.5} parent=1 // pred_check
      _
    $region19: #{lenet_forward.5} parent=1 // pred_check_branch
      %22 = sbr.rel (0) target = $region21
    $region20: #{lenet_forward.5} parent=1 // pred_region
      _
    $region21: #{lenet_forward.5} parent=1 // pred_fallthru
      _
    // Predicated region
    $region22: #{lenet_forward.5} parent=1 // pred_check
      _
    $region23: #{lenet_forward.5} parent=1 // pred_check_branch
      %24 = sbr.rel (0) target = $region25
    $region24: #{lenet_forward.5} parent=1 // pred_region
      _
    $region25: #{lenet_forward.5} parent=1 // pred_fallthru
      _
    // Predicated region
    $region26: #{lenet_forward.5} parent=1 // pred_check
      _
    $region27: #{lenet_forward.5} parent=1 // pred_check_branch
      %26 = sbr.rel (0) target = $region29
    $region28: #{lenet_forward.5} parent=1 // pred_region
      _
    $region29: #{lenet_forward.5} parent=1 // pred_fallthru
      _
    %v27 = vld [vmem:[%s0] sm:$0xff]
    %v28 = vld [vmem:[%s1] sm:$0xff]
    %v29 = vld [vmem:[%s1 + $0x8] sm:$0xff]
    %v30 = vld [vmem:[%s1 + $0x10] sm:$0xff]
    %v31 = vld [vmem:[%s1 + $0x18] sm:$0xff]
    %v32 = vld [vmem:[%s1 + $0x20] sm:$0xff]
    %v33 = vld [vmem:[%s1 + $0x28] sm:$0xff]
    %v34 = vld [vmem:[%s1 + $0x30] sm:$0xff]
    %v35 = vld [vmem:[%s1 + $0x38] sm:$0xff]
    %v36 = vld [vmem:[%s1 + $0x40] sm:$0xff]
    %v37 = vld [vmem:[%s1 + $0x48] sm:$0xff]
    %v38 = vld [vmem:[%s1 + $0x50] sm:$0xff]
    %v39 = vld [vmem:[%s1 + $0x58] sm:$0xff]
    %v40 = vld [vmem:[%s1 + $0x60] sm:$0xff]
    %v41 = vld [vmem:[%s1 + $0x68] sm:$0xff]
    %v42 = vld [vmem:[%s1 + $0x70] sm:$0xff]
    %v43 = vld [vmem:[%s1 + $0x78] sm:$0xff]
    %v44 = vld [vmem:[%s1 + $0x80] sm:$0xff]
    %v45 = vld [vmem:[%s1 + $0x88] sm:$0xff]
    %v46 = vld [vmem:[%s1 + $0x90] sm:$0xff]
    %v47 = vld [vmem:[%s1 + $0x98] sm:$0xff]
    %v48 = vld [vmem:[%s1 + $0xa0] sm:$0xff]
    %v49 = vld [vmem:[%s1 + $0xa8] sm:$0xff]
    %v50 = vld [vmem:[%s1 + $0xb0] sm:$0xff]
    %v51 = vld [vmem:[%s1 + $0xb8] sm:$0xff]
    %v52 = vld [vmem:[%s1 + $0xc0] sm:$0xff]
    %v53 = vld [vmem:[%s1 + $0xc8] sm:$0xff]
    %v54 = vld [vmem:[%s1 + $0xd0] sm:$0xff]
    %v55 = vld [vmem:[%s1 + $0xd8] sm:$0xff]
    %v56 = vld [vmem:[%s1 + $0xe0] sm:$0xff]
    %v57 = vld [vmem:[%s1 + $0xe8] sm:$0xff]
    %v58 = vld [vmem:[%s1 + $0xf0] sm:$0xff]
    %v59 = vld [vmem:[%s1 + $0xf8] sm:$0xff]
    %v60 = vld [vmem:[%s1 + $0x100] sm:$0xff]
    %v61 = vld [vmem:[%s1 + $0x108] sm:$0xff]
    %v62 = vld [vmem:[%s1 + $0x110] sm:$0xff]
    %v63 = vld [vmem:[%s1 + $0x118] sm:$0xff]
    %v64 = vld [vmem:[%s1 + $0x120] sm:$0xff]
    %v65 = vld [vmem:[%s1 + $0x128] sm:$0xff]
    %v66 = vld [vmem:[%s1 + $0x130] sm:$0xff]
    %v67 = vld [vmem:[%s1 + $0x138] sm:$0xff]
    %v68 = vld [vmem:[%s1 + $0x140] sm:$0xff]
    %v69 = vld [vmem:[%s1 + $0x148] sm:$0xff]
    %v70 = vld [vmem:[%s1 + $0x150] sm:$0xff]
    %v71 = vld [vmem:[%s1 + $0x158] sm:$0xff]
    %v72 = vld [vmem:[%s1 + $0x160] sm:$0xff]
    %v73 = vld [vmem:[%s1 + $0x168] sm:$0xff]
    %v74 = vld [vmem:[%s1 + $0x170] sm:$0xff]
    %v75 = vld [vmem:[%s1 + $0x178] sm:$0xff]
    %v76 = vld [vmem:[%s1 + $0x180] sm:$0xff]
    %v77 = vld [vmem:[%s1 + $0x188] sm:$0xff]
    %v78 = vld [vmem:[%s2] sm:$0x1]
    %v80 = vlaneseq
    %v81 = vshrl.u32 %v80, 7
    %v82 = vsub.s32 0, %v81
    %v83 = vrot.slane %v78, %v82
    %v86 = vcombine.high %v27, %v27
    %v88 = vunpack.c.l.s4 1983009808
    %v89 = vunpack.c.0.s8 %v88
    %v90 = vlaneseq
    %v91 = vshrl.u32 %v90, 7
    %v92 = vsub.s32 %v89, %v91
    %v93 = vrot.slane %v27, %v92
    %v95 = vunpack.c.l.s4 1983009808
    %v96 = vunpack.c.0.s8 %v95
    %v97 = vlaneseq
    %v98 = vshrl.u32 %v97, 7
    %v99 = vsub.s32 %v96, %v98
    %v100 = vrot.slane %v86, %v99
    %v101 = vcombine.high %v93, %v93
    %v102 = vcombine.high %v100, %v100
    %vm106 = vcmask 130048
    %v107 = vsel %vm106, %v102, 0
    %109 = vmatprep.subr.mxu0 0.0
    %110 = vmatpush1.msra.mxu0 %v28
    %111 = vmatprep.subr.mxu0 0.0
    %112 = vmatpush1.msra.mxu0 %v29
    %113 = vmatprep.subr.mxu0 0.0
    %114 = vmatpush1.msra.mxu0 %v30
    %115 = vmatprep.subr.mxu0 0.0
    %116 = vmatpush1.msra.mxu0 %v31
    %117 = vmatprep.subr.mxu0 0.0
    %118 = vmatpush1.msra.mxu0 %v32
    %119 = vmatprep.subr.mxu0 0.0
    %120 = vmatpush1.msra.mxu0 %v33
    %121 = vmatprep.subr.mxu0 0.0
    %122 = vmatpush1.msra.mxu0 %v34
    %123 = vmatprep.subr.mxu0 0.0
    %124 = vmatpush1.msra.mxu0 %v35
    %125 = vmatprep.subr.mxu0 0.0
    %126 = vmatpush1.msra.mxu0 %v36
    %127 = vmatprep.subr.mxu0 0.0
    %128 = vmatpush1.msra.mxu0 %v37
    %129 = vmatprep.subr.mxu0 0.0
    %130 = vmatpush1.msra.mxu0 %v38
    %131 = vmatprep.subr.mxu0 0.0
    %132 = vmatpush1.msra.mxu0 %v39
    %133 = vmatprep.subr.mxu0 0.0
    %134 = vmatpush1.msra.mxu0 %v40
    %135 = vmatprep.subr.mxu0 0.0
    %136 = vmatpush1.msra.mxu0 %v41
    %137 = vmatprep.subr.mxu0 0.0
    %138 = vmatpush1.msra.mxu0 %v42
    %139 = vmatprep.subr.mxu0 0.0
    %140 = vmatpush1.msra.mxu0 %v43
    %141 = vmatprep.subr.mxu0 0.0
    %142 = vmatpush1.msra.mxu0 %v44
    %143 = vmatprep.subr.mxu0 0.0
    %144 = vmatpush1.msra.mxu0 %v45
    %145 = vmatprep.subr.mxu0 0.0
    %146 = vmatpush1.msra.mxu0 %v46
    %147 = vmatprep.subr.mxu0 0.0
    %148 = vmatpush1.msra.mxu0 %v47
    %149 = vmatprep.subr.mxu0 0.0
    %150 = vmatpush1.msra.mxu0 %v48
    %151 = vmatprep.subr.mxu0 0.0
    %152 = vmatpush1.msra.mxu0 %v49
    %153 = vmatprep.subr.mxu0 0.0
    %154 = vmatpush1.msra.mxu0 %v50
    %155 = vmatprep.subr.mxu0 0.0
    %156 = vmatpush1.msra.mxu0 %v51
    %157 = vmatprep.subr.mxu0 0.0
    %158 = vmatpush1.msra.mxu0 %v52
    %159 = vmatprep.subr.mxu0 0.0
    %160 = vmatpush1.msra.mxu0 %v53
    %161 = vmatprep.subr.mxu0 0.0
    %162 = vmatpush1.msra.mxu0 %v54
    %163 = vmatprep.subr.mxu0 0.0
    %164 = vmatpush1.msra.mxu0 %v55
    %165 = vmatprep.subr.mxu0 0.0
    %166 = vmatpush1.msra.mxu0 %v56
    %167 = vmatprep.subr.mxu0 0.0
    %168 = vmatpush1.msra.mxu0 %v57
    %169 = vmatprep.subr.mxu0 0.0
    %170 = vmatpush1.msra.mxu0 %v58
    %171 = vmatprep.subr.mxu0 0.0
    %172 = vmatpush1.msra.mxu0 %v59
    %173 = vmatprep.mubr.f32.mxu0 %v101
    %174 = vmatmul.mubr.f32.gmra.mrb[0].mxu0 %v93
    %v175 = vpop.f32.mrb[0].mxu0
    %v176 = vadd.f32 %v83, %v175
    %v177 = vpop.f32.mrb[0].mxu0
    %178 = vdwg.mxu0
    %179 = vmatprep.subr.mxu0 0.0
    %180 = vmatpush1.msra.mxu0 %v60
    %181 = vmatprep.subr.mxu0 0.0
    %182 = vmatpush1.msra.mxu0 %v61
    %183 = vmatprep.subr.mxu0 0.0
    %184 = vmatpush1.msra.mxu0 %v62
    %185 = vmatprep.subr.mxu0 0.0
    %186 = vmatpush1.msra.mxu0 %v63
    %187 = vmatprep.subr.mxu0 0.0
    %188 = vmatpush1.msra.mxu0 %v64
    %189 = vmatprep.subr.mxu0 0.0
    %190 = vmatpush1.msra.mxu0 %v65
    %191 = vmatprep.subr.mxu0 0.0
    %192 = vmatpush1.msra.mxu0 %v66
    %193 = vmatprep.subr.mxu0 0.0
    %194 = vmatpush1.msra.mxu0 %v67
    %195 = vmatprep.subr.mxu0 0.0
    %196 = vmatpush1.msra.mxu0 %v68
    %197 = vmatprep.subr.mxu0 0.0
    %198 = vmatpush1.msra.mxu0 %v69
    %199 = vmatprep.subr.mxu0 0.0
    %200 = vmatpush1.msra.mxu0 %v70
    %201 = vmatprep.subr.mxu0 0.0
    %202 = vmatpush1.msra.mxu0 %v71
    %203 = vmatprep.subr.mxu0 0.0
    %204 = vmatpush1.msra.mxu0 %v72
    %205 = vmatprep.subr.mxu0 0.0
    %206 = vmatpush1.msra.mxu0 %v73
    %207 = vmatprep.subr.mxu0 0.0
    %208 = vmatpush1.msra.mxu0 %v74
    %209 = vmatprep.subr.mxu0 0.0
    %210 = vmatpush1.msra.mxu0 %v75
    %211 = vmatprep.subr.mxu0 0.0
    %212 = vmatpush1.msra.mxu0 %v76
    %213 = vmatprep.subr.mxu0 0.0
    %214 = vmatpush1.msra.mxu0 %v77
    %215 = vmatprep.subr.mxu0 0.0
    %216 = vmatpush1.msra.mxu0 0.0
    %217 = vmatprep.subr.mxu0 0.0
    %218 = vmatpush1.msra.mxu0 0.0
    %219 = vmatprep.subr.mxu0 0.0
    %220 = vmatpush1.msra.mxu0 0.0
    %221 = vmatprep.subr.mxu0 0.0
    %222 = vmatpush1.msra.mxu0 0.0
    %223 = vmatprep.subr.mxu0 0.0
    %224 = vmatpush1.msra.mxu0 0.0
    %225 = vmatprep.subr.mxu0 0.0
    %226 = vmatpush1.msra.mxu0 0.0
    %227 = vmatprep.subr.mxu0 0.0
    %228 = vmatpush1.msra.mxu0 0.0
    %229 = vmatprep.subr.mxu0 0.0
    %230 = vmatpush1.msra.mxu0 0.0
    %231 = vmatprep.subr.mxu0 0.0
    %232 = vmatpush1.msra.mxu0 0.0
    %233 = vmatprep.subr.mxu0 0.0
    %234 = vmatpush1.msra.mxu0 0.0
    %235 = vmatprep.subr.mxu0 0.0
    %236 = vmatpush1.msra.mxu0 0.0
    %237 = vmatprep.subr.mxu0 0.0
    %238 = vmatpush1.msra.mxu0 0.0
    %239 = vmatprep.subr.mxu0 0.0
    %240 = vmatpush1.msra.mxu0 0.0
    %241 = vmatprep.subr.mxu0 0.0
    %242 = vmatpush1.msra.mxu0 0.0
    %243 = vmatprep.mubr.f32.mxu0 %v107
    %244 = vmatmul.mubr.f32.gmra.mrb[0].mxu0 %v100
    %v245 = vpop.f32.mrb[0].mxu0
    %v246 = vadd.f32 %v176, %v245
    %v247 = vpop.f32.mrb[0].mxu0
    %248 = vdwg.mxu0
    %v249 = vmax.f32 %v246, 0.0
    %v250 = vld [vmem:[%s3] sm:$0xff]
    %v251 = vld [vmem:[%s3 + $0x8] sm:$0xff]
    %v252 = vld [vmem:[%s3 + $0x10] sm:$0xff]
    %v253 = vld [vmem:[%s3 + $0x18] sm:$0xff]
    %v254 = vld [vmem:[%s3 + $0x20] sm:$0xff]
    %v255 = vld [vmem:[%s3 + $0x28] sm:$0xff]
    %v256 = vld [vmem:[%s3 + $0x30] sm:$0xff]
    %v257 = vld [vmem:[%s3 + $0x38] sm:$0xff]
    %v258 = vld [vmem:[%s3 + $0x40] sm:$0xff]
    %v259 = vld [vmem:[%s3 + $0x48] sm:$0xff]
    %v260 = vld [vmem:[%s3 + $0x50] sm:$0xff]
    %v261 = vld [vmem:[%s3 + $0x58] sm:$0xff]
    %v262 = vld [vmem:[%s3 + $0x60] sm:$0xff]
    %v263 = vld [vmem:[%s3 + $0x68] sm:$0xff]
    %v264 = vld [vmem:[%s3 + $0x70] sm:$0xff]
    %v265 = vld [vmem:[%s4] sm:$0x1]
    %v267 = vlaneseq
    %v268 = vshrl.u32 %v267, 7
    %v269 = vsub.s32 0, %v268
    %v270 = vrot.slane %v265, %v269
    %vm272 = vcmask 982016
    %v274 = vsel %vm272, %v249, 0
    %276 = vmatprep.subr.mxu0 0.0
    %277 = vmatpush1.msra.mxu0 %v250
    %278 = vmatprep.subr.mxu0 0.0
    %279 = vmatpush1.msra.mxu0 %v251
    %280 = vmatprep.subr.mxu0 0.0
    %281 = vmatpush1.msra.mxu0 %v252
    %282 = vmatprep.subr.mxu0 0.0
    %283 = vmatpush1.msra.mxu0 %v253
    %284 = vmatprep.subr.mxu0 0.0
    %285 = vmatpush1.msra.mxu0 %v254
    %286 = vmatprep.subr.mxu0 0.0
    %287 = vmatpush1.msra.mxu0 %v255
    %288 = vmatprep.subr.mxu0 0.0
    %289 = vmatpush1.msra.mxu0 %v256
    %290 = vmatprep.subr.mxu0 0.0
    %291 = vmatpush1.msra.mxu0 %v257
    %292 = vmatprep.subr.mxu0 0.0
    %293 = vmatpush1.msra.mxu0 %v258
    %294 = vmatprep.subr.mxu0 0.0
    %295 = vmatpush1.msra.mxu0 %v259
    %296 = vmatprep.subr.mxu0 0.0
    %297 = vmatpush1.msra.mxu0 %v260
    %298 = vmatprep.subr.mxu0 0.0
    %299 = vmatpush1.msra.mxu0 %v261
    %300 = vmatprep.subr.mxu0 0.0
    %301 = vmatpush1.msra.mxu0 %v262
    %302 = vmatprep.subr.mxu0 0.0
    %303 = vmatpush1.msra.mxu0 %v263
    %304 = vmatprep.subr.mxu0 0.0
    %305 = vmatpush1.msra.mxu0 %v264
    %306 = vmatprep.subr.mxu0 0.0
    %307 = vmatpush1.msra.mxu0 0.0
    %308 = vmatprep.subr.mxu0 0.0
    %309 = vmatpush1.msra.mxu0 0.0
    %310 = vmatprep.subr.mxu0 0.0
    %311 = vmatpush1.msra.mxu0 0.0
    %312 = vmatprep.subr.mxu0 0.0
    %313 = vmatpush1.msra.mxu0 0.0
    %314 = vmatprep.subr.mxu0 0.0
    %315 = vmatpush1.msra.mxu0 0.0
    %316 = vmatprep.subr.mxu0 0.0
    %317 = vmatpush1.msra.mxu0 0.0
    %318 = vmatprep.subr.mxu0 0.0
    %319 = vmatpush1.msra.mxu0 0.0
    %320 = vmatprep.subr.mxu0 0.0
    %321 = vmatpush1.msra.mxu0 0.0
    %322 = vmatprep.subr.mxu0 0.0
    %323 = vmatpush1.msra.mxu0 0.0
    %324 = vmatprep.subr.mxu0 0.0
    %325 = vmatpush1.msra.mxu0 0.0
    %326 = vmatprep.subr.mxu0 0.0
    %327 = vmatpush1.msra.mxu0 0.0
    %328 = vmatprep.subr.mxu0 0.0
    %329 = vmatpush1.msra.mxu0 0.0
    %330 = vmatprep.subr.mxu0 0.0
    %331 = vmatpush1.msra.mxu0 0.0
    %332 = vmatprep.subr.mxu0 0.0
    %333 = vmatpush1.msra.mxu0 0.0
    %334 = vmatprep.subr.mxu0 0.0
    %335 = vmatpush1.msra.mxu0 0.0
    %336 = vmatprep.subr.mxu0 0.0
    %337 = vmatpush1.msra.mxu0 0.0
    %338 = vmatprep.subr.mxu0 0.0
    %339 = vmatpush1.msra.mxu0 0.0
    %340 = vmatprep.mubr.f32.mxu0 0.0
    %341 = vmatmul.mubr.f32.gmra.mrb[0].mxu0 %v274
    %v342 = vpop.f32.mrb[0].mxu0
    %v343 = vadd.f32 %v270, %v342
    %v344 = vpop.f32.mrb[0].mxu0
    %345 = vdwg.mxu0
    %v346 = vmax.f32 %v343, 0.0
    %v347 = vld [vmem:[%s5] sm:$0xff]
    %v348 = vld [vmem:[%s5 + $0x8] sm:$0xff]
    %v349 = vld [vmem:[%s5 + $0x10] sm:$0xff]
    %v350 = vld [vmem:[%s5 + $0x18] sm:$0xff]
    %v351 = vld [vmem:[%s5 + $0x20] sm:$0xff]
    %v352 = vld [vmem:[%s5 + $0x28] sm:$0xff]
    %v353 = vld [vmem:[%s5 + $0x30] sm:$0xff]
    %v354 = vld [vmem:[%s5 + $0x38] sm:$0xff]
    %v355 = vld [vmem:[%s5 + $0x40] sm:$0xff]
    %v356 = vld [vmem:[%s5 + $0x48] sm:$0xff]
    %v357 = vld [vmem:[%s5 + $0x50] sm:$0xf]
    %v358 = vld [vmem:[%s6] sm:$0x1]
    %v360 = vlaneseq
    %v361 = vshrl.u32 %v360, 7
    %v362 = vsub.s32 0, %v361
    %v363 = vrot.slane %v358, %v362
    %vm365 = vcmask 687104
    %v367 = vsel %vm365, %v346, 0
    %vm369 = vcmask 1043456
    %v371 = vsel %vm369, %v357, 0
    %373 = vmatprep.subr.mxu0 0.0
    %374 = vmatpush1.msra.mxu0 %v347
    %375 = vmatprep.subr.mxu0 0.0
    %376 = vmatpush1.msra.mxu0 %v348
    %377 = vmatprep.subr.mxu0 0.0
    %378 = vmatpush1.msra.mxu0 %v349
    %379 = vmatprep.subr.mxu0 0.0
    %380 = vmatpush1.msra.mxu0 %v350
    %381 = vmatprep.subr.mxu0 0.0
    %382 = vmatpush1.msra.mxu0 %v351
    %383 = vmatprep.subr.mxu0 0.0
    %384 = vmatpush1.msra.mxu0 %v352
    %385 = vmatprep.subr.mxu0 0.0
    %386 = vmatpush1.msra.mxu0 %v353
    %387 = vmatprep.subr.mxu0 0.0
    %388 = vmatpush1.msra.mxu0 %v354
    %389 = vmatprep.subr.mxu0 0.0
    %390 = vmatpush1.msra.mxu0 %v355
    %391 = vmatprep.subr.mxu0 0.0
    %392 = vmatpush1.msra.mxu0 %v356
    %393 = vmatprep.subr.mxu0 0.0
    %394 = vmatpush1.msra.mxu0 %v371
    %395 = vmatprep.subr.mxu0 0.0
    %396 = vmatpush1.msra.mxu0 0.0
    %397 = vmatprep.subr.mxu0 0.0
    %398 = vmatpush1.msra.mxu0 0.0
    %399 = vmatprep.subr.mxu0 0.0
    %400 = vmatpush1.msra.mxu0 0.0
    %401 = vmatprep.subr.mxu0 0.0
    %402 = vmatpush1.msra.mxu0 0.0
    %403 = vmatprep.subr.mxu0 0.0
    %404 = vmatpush1.msra.mxu0 0.0
    %405 = vmatprep.subr.mxu0 0.0
    %406 = vmatpush1.msra.mxu0 0.0
    %407 = vmatprep.subr.mxu0 0.0
    %408 = vmatpush1.msra.mxu0 0.0
    %409 = vmatprep.subr.mxu0 0.0
    %410 = vmatpush1.msra.mxu0 0.0
    %411 = vmatprep.subr.mxu0 0.0
    %412 = vmatpush1.msra.mxu0 0.0
    %413 = vmatprep.subr.mxu0 0.0
    %414 = vmatpush1.msra.mxu0 0.0
    %415 = vmatprep.subr.mxu0 0.0
    %416 = vmatpush1.msra.mxu0 0.0
    %417 = vmatprep.subr.mxu0 0.0
    %418 = vmatpush1.msra.mxu0 0.0
    %419 = vmatprep.subr.mxu0 0.0
    %420 = vmatpush1.msra.mxu0 0.0
    %421 = vmatprep.subr.mxu0 0.0
    %422 = vmatpush1.msra.mxu0 0.0
    %423 = vmatprep.subr.mxu0 0.0
    %424 = vmatpush1.msra.mxu0 0.0
    %425 = vmatprep.subr.mxu0 0.0
    %426 = vmatpush1.msra.mxu0 0.0
    %427 = vmatprep.subr.mxu0 0.0
    %428 = vmatpush1.msra.mxu0 0.0
    %429 = vmatprep.subr.mxu0 0.0
    %430 = vmatpush1.msra.mxu0 0.0
    %431 = vmatprep.subr.mxu0 0.0
    %432 = vmatpush1.msra.mxu0 0.0
    %433 = vmatprep.subr.mxu0 0.0
    %434 = vmatpush1.msra.mxu0 0.0
    %435 = vmatprep.subr.mxu0 0.0
    %436 = vmatpush1.msra.mxu0 0.0
    %437 = vmatprep.mubr.f32.mxu0 0.0
    %438 = vmatmul.mubr.f32.gmra.mrb[0].mxu0 %v367
    %v439 = vpop.f32.mrb[0].mxu0
    %v440 = vadd.f32 %v363, %v439
    %v441 = vpop.f32.mrb[0].mxu0
    %442 = vdwg.mxu0
    %vm443 = vcmask 74752
    %444 = vst.msk [vmem:[#allocation2] sm:$0x3] %vm443, %v440
    // Predicated region
    $region30: #{lenet_forward.5} parent=1 // pred_check
      _
    $region31: #{lenet_forward.5} parent=1 // pred_check_branch
      %446 = sbr.rel (0) target = $region33
    $region32: #{lenet_forward.5} parent=1 // pred_region
      %s448 = ssub.s32 32, 32
      %449 = vsyncadd [#allocation3], %s448
      %s451 = sshll.u32 [#allocation2], 4
      %s452 = int_to_ptr.vmem [resolvable:$true] %s451
      %454 = dma.vmem_to_hbm [thread:$0]  %s452, 32, %s7, [#allocation3]
    $region33: #{lenet_forward.5} parent=1 // pred_fallthru
      _
    // Predicated region
    $region34: #{lenet_forward.5} parent=1 // pred_check
      _
    $region35: #{lenet_forward.5} parent=1 // pred_check_branch
      %456 = sbr.rel (0) target = $region37
    $region36: #{lenet_forward.5} parent=1 // pred_region
      %457 = dma.done [#allocation3], 32
    $region37: #{lenet_forward.5} parent=1 // pred_fallthru
      _
    %458 = vsyncpa [#allocation3], 1

</llo_original>
